<compile_context>
chip_gen: v7x
topology: tpu7x:2x2x1
jax: 0.10.0
libtpu: 0.0.40
codegen_flags: <defaults>
</compile_context>

<pallas_src>
import jax
import jax.numpy as jnp
from jax import lax
from jax.experimental import pallas as pl
from jax.experimental.pallas import tpu as pltpu


def _fold_bn(gamma, beta, mean, var, eps):
    scale = gamma * lax.rsqrt(var + eps)
    shift = beta - mean * scale
    return scale, shift


def _make_kernel(K, Wp, N, relu):
    """Kernel for one (batch, output-depth) grid point.

    x{0,1,2}_ref : (1, 1, Cin, L)  padded input slabs at depth od+0/1/2,
                   spatial plane flattened (lane axis).
    wf_ref       : (K*K*K, Cout, Cin)  flipped kernel, taps-major.
    scale/shift  : (Cout, 1) folded eval-mode BatchNorm.
    out_ref      : (1, 1, Cout, N)  with N = Ho * Wpad (lane-dense).
    """

    def kernel(x0_ref, x1_ref, x2_ref, wf_ref, scale_ref, shift_ref, out_ref):
        slabs = (x0_ref, x1_ref, x2_ref)
        cout = out_ref.shape[2]
        acc = jnp.zeros((cout, N), jnp.float32)
        for kd in range(K):
            xs = slabs[kd]
            for kh in range(K):
                for kw in range(K):
                    # Contiguous shifted window on the flattened plane: the
                    # (kh, kw) tap is a flat shift of kh*Wp + kw; columns that
                    # would wrap across rows land in padded-width columns that
                    # the wrapper trims off.
                    s = kh * Wp + kw
                    patch = xs[0, 0, :, s:s + N]              # (Cin, N)
                    wk = wf_ref[kd * K * K + kh * K + kw]     # (Cout, Cin)
                    acc = acc + jnp.dot(wk, patch,
                                        preferred_element_type=jnp.float32)
        # Folded BN (lane-broadcast column vectors) + ReLU.
        y = acc * scale_ref[...] + shift_ref[...]
        if relu:
            y = jnp.maximum(y, 0.0)
        out_ref[0, 0] = y.astype(out_ref.dtype)

    return kernel


def deconv3d_bn_relu(x, w, bn_gamma, bn_beta, bn_mean, bn_var, *,
                     stride=1, relu=True, eps=1e-5):
    """x: (B, Cin, D, H, W) NCDHW.  w: (Cin, Cout, 3, 3, 3) (PyTorch
    ConvTranspose3d layout).  Returns (B, Cout, Do, Ho, Wo) NCDHW, float32."""
    assert stride in (1, 2)
    B, Cin, D, H, W = x.shape
    K = w.shape[2]
    assert K == 3 and w.shape[0] == Cin and w.shape[2:] == (K, K, K)
    Cout = w.shape[1]

    # ConvTranspose output sizes: out = (in - 1) * stride + K (padding=0).
    Do = (D - 1) * stride + K
    Ho = (H - 1) * stride + K
    Wo = (W - 1) * stride + K
    Dp = Do + (K - 1)                  # padded depth slabs
    Wp = Wo + (K - 1)                  # padded width (kept through the kernel)
    Hrows = Ho + (K - 1) + 1           # +1 zero row so shifted flat slices stay in-bounds
    L = Hrows * Wp                     # flattened padded plane per slab
    N = Ho * Wp                        # lane-dense output tile width

    # --- wrapper-side layout plumbing (XLA, not the hot path) ---
    # Dilate by (stride-1) interior zeros and zero-pad by K-1 per side.
    zero = jnp.array(0.0, dtype=x.dtype)
    pad_cfg = [(0, 0, 0), (0, 0, 0),
               (K - 1, K - 1, stride - 1),
               (K - 1, K, stride - 1),         # extra bottom zero row
               (K - 1, K - 1, stride - 1)]
    xp = lax.pad(x, zero, pad_cfg)             # (B, Cin, Dp, Hrows, Wp)
    xp = jnp.transpose(xp, (0, 2, 1, 3, 4))    # (B, Dp, Cin, Hrows, Wp)
    x_flat = xp.reshape(B, Dp, Cin, L)         # spatial plane -> lane axis

    # Spatially flipped kernel, taps-major, (Cout, Cin) per tap.
    wf = jnp.flip(w, axis=(2, 3, 4))
    wf = jnp.transpose(wf, (2, 3, 4, 1, 0)).reshape(K * K * K, Cout, Cin)
    wf = wf.astype(jnp.float32)

    # Eval-mode BatchNorm folded into per-channel scale/shift column vectors.
    scale, shift = _fold_bn(bn_gamma, bn_beta, bn_mean, bn_var, eps)
    scale = scale.reshape(Cout, 1).astype(jnp.float32)
    shift = shift.reshape(Cout, 1).astype(jnp.float32)

    def slab_spec(kd):
        # Depth-slab kd of the 3-tap depth window for output depth `od`.
        return pl.BlockSpec((1, 1, Cin, L),
                            lambda b, od, kd=kd: (b, od + kd, 0, 0))

    kernel = _make_kernel(K, Wp, N, relu)

    out_flat = pl.pallas_call(
        kernel,
        out_shape=jax.ShapeDtypeStruct((B, Do, Cout, N), x.dtype),
        grid_spec=pltpu.PrefetchScalarGridSpec(
            num_scalar_prefetch=0,
            grid=(B, Do),
            in_specs=[
                slab_spec(0), slab_spec(1), slab_spec(2),
                pl.BlockSpec((K * K * K, Cout, Cin), lambda b, od: (0, 0, 0)),
                pl.BlockSpec((Cout, 1), lambda b, od: (0, 0)),
                pl.BlockSpec((Cout, 1), lambda b, od: (0, 0)),
            ],
            out_specs=pl.BlockSpec((1, 1, Cout, N),
                                   lambda b, od: (b, od, 0, 0)),
        ),
        compiler_params=pltpu.CompilerParams(
            dimension_semantics=("parallel", "parallel"),
            vmem_limit_bytes=64 * 1024 * 1024),
    )(x_flat, x_flat, x_flat, wf, scale, shift)

    # (B, Do, Cout, Ho*Wp) -> trim padded-width columns -> NCDHW.
    out = out_flat.reshape(B, Do, Cout, Ho, Wp)[..., :Wo]
    return jnp.transpose(out, (0, 2, 1, 3, 4))


def _reference(x, w, bn_gamma, bn_beta, bn_mean, bn_var, *, stride=1,
               relu=True, eps=1e-5):
    """Direct transcription of the ConvTranspose3d definition + BN(eval) + ReLU."""
    B, Cin, D, H, W = x.shape
    Cout, K = w.shape[1], w.shape[2]
    Do = (D - 1) * stride + K
    Ho = (H - 1) * stride + K
    Wo = (W - 1) * stride + K
    out = jnp.zeros((B, Cout, Do, Ho, Wo), jnp.float32)
    for kd in range(K):
        for kh in range(K):
            for kw in range(K):
                tap = jnp.einsum('bidhw,io->bodhw', x, w[:, :, kd, kh, kw])
                out = out.at[:, :,
                             kd:kd + stride * D:stride,
                             kh:kh + stride * H:stride,
                             kw:kw + stride * W:stride].add(tap)
    scale, shift = _fold_bn(bn_gamma, bn_beta, bn_mean, bn_var, eps)
    out = out * scale[None, :, None, None, None] + shift[None, :, None, None, None]
    if relu:
        out = jnp.maximum(out, 0.0)
    return out


if __name__ == "__main__":
    key = jax.random.PRNGKey(0)
    B, Cin, Cout, K = 2, 4, 8, 3
    D, H, W = 6, 16, 16

    ks = jax.random.split(key, 6)

    def _bf16_exact(a):
        # Round to bf16-representable values so the MXU's input rounding is
        # exact and kernel vs reference comparison is precision-mode independent.
        return a.astype(jnp.bfloat16).astype(jnp.float32)

    x = _bf16_exact(jax.random.normal(ks[0], (B, Cin, D, H, W), jnp.float32))
    w = _bf16_exact(0.1 * jax.random.normal(ks[1], (Cin, Cout, K, K, K),
                                            jnp.float32))
    bn_gamma = 1.0 + 0.1 * jax.random.normal(ks[2], (Cout,), jnp.float32)
    bn_beta = 0.1 * jax.random.normal(ks[3], (Cout,), jnp.float32)
    bn_mean = 0.05 * jax.random.normal(ks[4], (Cout,), jnp.float32)
    bn_var = 1.0 + 0.1 * jnp.abs(jax.random.normal(ks[5], (Cout,), jnp.float32))

    for stride in (1, 2):
        out = deconv3d_bn_relu(x, w, bn_gamma, bn_beta, bn_mean, bn_var,
                               stride=stride, relu=True)
        out = jax.block_until_ready(out)
        ref = _reference(x, w, bn_gamma, bn_beta, bn_mean, bn_var,
                         stride=stride, relu=True)
        if not jnp.allclose(out, ref, atol=1e-4, rtol=1e-4):
            raise AssertionError(
                f"Pallas kernel result mismatch vs JAX reference (stride={stride})")

    print("KERNEL_OK")
</pallas_src>

<mosaic_0001>
module attributes {stable_mosaic.version = 11 : i64} {
  func.func @kernel(%arg0: i32, %arg1: i32, %arg2: memref<1x1x4x420xf32, #tpu.memory_space<vmem>>, %arg3: memref<1x1x4x420xf32, #tpu.memory_space<vmem>>, %arg4: memref<1x1x4x420xf32, #tpu.memory_space<vmem>>, %arg5: memref<27x8x4xf32, #tpu.memory_space<vmem>>, %arg6: memref<8x1xf32, #tpu.memory_space<vmem>>, %arg7: memref<8x1xf32, #tpu.memory_space<vmem>>, %arg8: memref<1x1x8x360xf32, #tpu.memory_space<vmem>>) attributes {dimension_semantics = [#tpu.dimension_semantics<parallel>, #tpu.dimension_semantics<parallel>], iteration_bounds = array<i64: 2, 8>, scalar_prefetch = 0 : i64, scratch_operands = 0 : i64, tpu.core_type = #tpu.core_type<tc>, window_params = [{transform_indices = @transform_0, window_bounds = array<i64: 1, 1, 4, 420>}, {transform_indices = @transform_1, window_bounds = array<i64: 1, 1, 4, 420>}, {transform_indices = @transform_2, window_bounds = array<i64: 1, 1, 4, 420>}, {pipeline_mode = #tpu.pipeline_mode<synchronous>, transform_indices = @transform_3, window_bounds = array<i64: 27, 8, 4>}, {pipeline_mode = #tpu.pipeline_mode<synchronous>, transform_indices = @transform_4, window_bounds = array<i64: 8, 1>}, {pipeline_mode = #tpu.pipeline_mode<synchronous>, transform_indices = @transform_5, window_bounds = array<i64: 8, 1>}, {transform_indices = @transform_6, window_bounds = array<i64: 1, 1, 8, 360>}]} {
    %cst = arith.constant 0.000000e+00 : f32
    %0 = vector.broadcast %cst : f32 to vector<8x360xf32>
    %c0 = arith.constant 0 : index
    %c0_0 = arith.constant 0 : index
    %c0_1 = arith.constant 0 : index
    %c0_2 = arith.constant 0 : index
    %1 = vector.load %arg2[%c0, %c0_0, %c0_1, %c0_2] : memref<1x1x4x420xf32, #tpu.memory_space<vmem>>, vector<1x1x4x360xf32>
    %2 = vector.shape_cast %1 : vector<1x1x4x360xf32> to vector<4x360xf32>
    %c0_3 = arith.constant 0 : index
    %c0_4 = arith.constant 0 : index
    %c0_5 = arith.constant 0 : index
    %3 = vector.load %arg5[%c0_3, %c0_4, %c0_5] : memref<27x8x4xf32, #tpu.memory_space<vmem>>, vector<1x8x4xf32>
    %4 = vector.shape_cast %3 : vector<1x8x4xf32> to vector<8x4xf32>
    %cst_6 = arith.constant dense<0.000000e+00> : vector<8x360xf32>
    %5 = tpu.matmul %4, %2, %cst_6 {dimension_numbers = #tpu.dot_dimension_numbers<[1], [0], [0], [1], [0, 0, 1, 1], [], []>} : vector<8x4xf32>, vector<4x360xf32>, vector<8x360xf32> -> vector<8x360xf32>
    %6 = arith.addf %0, %5 : vector<8x360xf32>
    %c0_7 = arith.constant 0 : index
    %c0_8 = arith.constant 0 : index
    %c0_9 = arith.constant 0 : index
    %c1 = arith.constant 1 : index
    %7 = vector.load %arg2[%c0_7, %c0_8, %c0_9, %c1] : memref<1x1x4x420xf32, #tpu.memory_space<vmem>>, vector<1x1x4x360xf32>
    %8 = vector.shape_cast %7 : vector<1x1x4x360xf32> to vector<4x360xf32>
    %c1_10 = arith.constant 1 : index
    %c0_11 = arith.constant 0 : index
    %c0_12 = arith.constant 0 : index
    %9 = vector.load %arg5[%c1_10, %c0_11, %c0_12] : memref<27x8x4xf32, #tpu.memory_space<vmem>>, vector<1x8x4xf32>
    %10 = vector.shape_cast %9 : vector<1x8x4xf32> to vector<8x4xf32>
    %cst_13 = arith.constant dense<0.000000e+00> : vector<8x360xf32>
    %11 = tpu.matmul %10, %8, %cst_13 {dimension_numbers = #tpu.dot_dimension_numbers<[1], [0], [0], [1], [0, 0, 1, 1], [], []>} : vector<8x4xf32>, vector<4x360xf32>, vector<8x360xf32> -> vector<8x360xf32>
    %12 = arith.addf %6, %11 : vector<8x360xf32>
    %c0_14 = arith.constant 0 : index
    %c0_15 = arith.constant 0 : index
    %c0_16 = arith.constant 0 : index
    %c2 = arith.constant 2 : index
    %13 = vector.load %arg2[%c0_14, %c0_15, %c0_16, %c2] : memref<1x1x4x420xf32, #tpu.memory_space<vmem>>, vector<1x1x4x360xf32>
    %14 = vector.shape_cast %13 : vector<1x1x4x360xf32> to vector<4x360xf32>
    %c2_17 = arith.constant 2 : index
    %c0_18 = arith.constant 0 : index
    %c0_19 = arith.constant 0 : index
    %15 = vector.load %arg5[%c2_17, %c0_18, %c0_19] : memref<27x8x4xf32, #tpu.memory_space<vmem>>, vector<1x8x4xf32>
    %16 = vector.shape_cast %15 : vector<1x8x4xf32> to vector<8x4xf32>
    %cst_20 = arith.constant dense<0.000000e+00> : vector<8x360xf32>
    %17 = tpu.matmul %16, %14, %cst_20 {dimension_numbers = #tpu.dot_dimension_numbers<[1], [0], [0], [1], [0, 0, 1, 1], [], []>} : vector<8x4xf32>, vector<4x360xf32>, vector<8x360xf32> -> vector<8x360xf32>
    %18 = arith.addf %12, %17 : vector<8x360xf32>
    %c0_21 = arith.constant 0 : index
    %c0_22 = arith.constant 0 : index
    %c0_23 = arith.constant 0 : index
    %c20 = arith.constant 20 : index
    %19 = vector.load %arg2[%c0_21, %c0_22, %c0_23, %c20] : memref<1x1x4x420xf32, #tpu.memory_space<vmem>>, vector<1x1x4x360xf32>
    %20 = vector.shape_cast %19 : vector<1x1x4x360xf32> to vector<4x360xf32>
    %c3 = arith.constant 3 : index
    %c0_24 = arith.constant 0 : index
    %c0_25 = arith.constant 0 : index
    %21 = vector.load %arg5[%c3, %c0_24, %c0_25] : memref<27x8x4xf32, #tpu.memory_space<vmem>>, vector<1x8x4xf32>
    %22 = vector.shape_cast %21 : vector<1x8x4xf32> to vector<8x4xf32>
    %cst_26 = arith.constant dense<0.000000e+00> : vector<8x360xf32>
    %23 = tpu.matmul %22, %20, %cst_26 {dimension_numbers = #tpu.dot_dimension_numbers<[1], [0], [0], [1], [0, 0, 1, 1], [], []>} : vector<8x4xf32>, vector<4x360xf32>, vector<8x360xf32> -> vector<8x360xf32>
    %24 = arith.addf %18, %23 : vector<8x360xf32>
    %c0_27 = arith.constant 0 : index
    %c0_28 = arith.constant 0 : index
    %c0_29 = arith.constant 0 : index
    %c21 = arith.constant 21 : index
    %25 = vector.load %arg2[%c0_27, %c0_28, %c0_29, %c21] : memref<1x1x4x420xf32, #tpu.memory_space<vmem>>, vector<1x1x4x360xf32>
    %26 = vector.shape_cast %25 : vector<1x1x4x360xf32> to vector<4x360xf32>
    %c4 = arith.constant 4 : index
    %c0_30 = arith.constant 0 : index
    %c0_31 = arith.constant 0 : index
    %27 = vector.load %arg5[%c4, %c0_30, %c0_31] : memref<27x8x4xf32, #tpu.memory_space<vmem>>, vector<1x8x4xf32>
    %28 = vector.shape_cast %27 : vector<1x8x4xf32> to vector<8x4xf32>
    %cst_32 = arith.constant dense<0.000000e+00> : vector<8x360xf32>
    %29 = tpu.matmul %28, %26, %cst_32 {dimension_numbers = #tpu.dot_dimension_numbers<[1], [0], [0], [1], [0, 0, 1, 1], [], []>} : vector<8x4xf32>, vector<4x360xf32>, vector<8x360xf32> -> vector<8x360xf32>
    %30 = arith.addf %24, %29 : vector<8x360xf32>
    %c0_33 = arith.constant 0 : index
    %c0_34 = arith.constant 0 : index
    %c0_35 = arith.constant 0 : index
    %c22 = arith.constant 22 : index
    %31 = vector.load %arg2[%c0_33, %c0_34, %c0_35, %c22] : memref<1x1x4x420xf32, #tpu.memory_space<vmem>>, vector<1x1x4x360xf32>
    %32 = vector.shape_cast %31 : vector<1x1x4x360xf32> to vector<4x360xf32>
    %c5 = arith.constant 5 : index
    %c0_36 = arith.constant 0 : index
    %c0_37 = arith.constant 0 : index
    %33 = vector.load %arg5[%c5, %c0_36, %c0_37] : memref<27x8x4xf32, #tpu.memory_space<vmem>>, vector<1x8x4xf32>
    %34 = vector.shape_cast %33 : vector<1x8x4xf32> to vector<8x4xf32>
    %cst_38 = arith.constant dense<0.000000e+00> : vector<8x360xf32>
    %35 = tpu.matmul %34, %32, %cst_38 {dimension_numbers = #tpu.dot_dimension_numbers<[1], [0], [0], [1], [0, 0, 1, 1], [], []>} : vector<8x4xf32>, vector<4x360xf32>, vector<8x360xf32> -> vector<8x360xf32>
    %36 = arith.addf %30, %35 : vector<8x360xf32>
    %c0_39 = arith.constant 0 : index
    %c0_40 = arith.constant 0 : index
    %c0_41 = arith.constant 0 : index
    %c40 = arith.constant 40 : index
    %37 = vector.load %arg2[%c0_39, %c0_40, %c0_41, %c40] : memref<1x1x4x420xf32, #tpu.memory_space<vmem>>, vector<1x1x4x360xf32>
    %38 = vector.shape_cast %37 : vector<1x1x4x360xf32> to vector<4x360xf32>
    %c6 = arith.constant 6 : index
    %c0_42 = arith.constant 0 : index
    %c0_43 = arith.constant 0 : index
    %39 = vector.load %arg5[%c6, %c0_42, %c0_43] : memref<27x8x4xf32, #tpu.memory_space<vmem>>, vector<1x8x4xf32>
    %40 = vector.shape_cast %39 : vector<1x8x4xf32> to vector<8x4xf32>
    %cst_44 = arith.constant dense<0.000000e+00> : vector<8x360xf32>
    %41 = tpu.matmul %40, %38, %cst_44 {dimension_numbers = #tpu.dot_dimension_numbers<[1], [0], [0], [1], [0, 0, 1, 1], [], []>} : vector<8x4xf32>, vector<4x360xf32>, vector<8x360xf32> -> vector<8x360xf32>
    %42 = arith.addf %36, %41 : vector<8x360xf32>
    %c0_45 = arith.constant 0 : index
    %c0_46 = arith.constant 0 : index
    %c0_47 = arith.constant 0 : index
    %c41 = arith.constant 41 : index
    %43 = vector.load %arg2[%c0_45, %c0_46, %c0_47, %c41] : memref<1x1x4x420xf32, #tpu.memory_space<vmem>>, vector<1x1x4x360xf32>
    %44 = vector.shape_cast %43 : vector<1x1x4x360xf32> to vector<4x360xf32>
    %c7 = arith.constant 7 : index
    %c0_48 = arith.constant 0 : index
    %c0_49 = arith.constant 0 : index
    %45 = vector.load %arg5[%c7, %c0_48, %c0_49] : memref<27x8x4xf32, #tpu.memory_space<vmem>>, vector<1x8x4xf32>
    %46 = vector.shape_cast %45 : vector<1x8x4xf32> to vector<8x4xf32>
    %cst_50 = arith.constant dense<0.000000e+00> : vector<8x360xf32>
    %47 = tpu.matmul %46, %44, %cst_50 {dimension_numbers = #tpu.dot_dimension_numbers<[1], [0], [0], [1], [0, 0, 1, 1], [], []>} : vector<8x4xf32>, vector<4x360xf32>, vector<8x360xf32> -> vector<8x360xf32>
    %48 = arith.addf %42, %47 : vector<8x360xf32>
    %c0_51 = arith.constant 0 : index
    %c0_52 = arith.constant 0 : index
    %c0_53 = arith.constant 0 : index
    %c42 = arith.constant 42 : index
    %49 = vector.load %arg2[%c0_51, %c0_52, %c0_53, %c42] : memref<1x1x4x420xf32, #tpu.memory_space<vmem>>, vector<1x1x4x360xf32>
    %50 = vector.shape_cast %49 : vector<1x1x4x360xf32> to vector<4x360xf32>
    %c8 = arith.constant 8 : index
    %c0_54 = arith.constant 0 : index
    %c0_55 = arith.constant 0 : index
    %51 = vector.load %arg5[%c8, %c0_54, %c0_55] : memref<27x8x4xf32, #tpu.memory_space<vmem>>, vector<1x8x4xf32>
    %52 = vector.shape_cast %51 : vector<1x8x4xf32> to vector<8x4xf32>
    %cst_56 = arith.constant dense<0.000000e+00> : vector<8x360xf32>
    %53 = tpu.matmul %52, %50, %cst_56 {dimension_numbers = #tpu.dot_dimension_numbers<[1], [0], [0], [1], [0, 0, 1, 1], [], []>} : vector<8x4xf32>, vector<4x360xf32>, vector<8x360xf32> -> vector<8x360xf32>
    %54 = arith.addf %48, %53 : vector<8x360xf32>
    %c0_57 = arith.constant 0 : index
    %c0_58 = arith.constant 0 : index
    %c0_59 = arith.constant 0 : index
    %c0_60 = arith.constant 0 : index
    %55 = vector.load %arg3[%c0_57, %c0_58, %c0_59, %c0_60] : memref<1x1x4x420xf32, #tpu.memory_space<vmem>>, vector<1x1x4x360xf32>
    %56 = vector.shape_cast %55 : vector<1x1x4x360xf32> to vector<4x360xf32>
    %c9 = arith.constant 9 : index
    %c0_61 = arith.constant 0 : index
    %c0_62 = arith.constant 0 : index
    %57 = vector.load %arg5[%c9, %c0_61, %c0_62] : memref<27x8x4xf32, #tpu.memory_space<vmem>>, vector<1x8x4xf32>
    %58 = vector.shape_cast %57 : vector<1x8x4xf32> to vector<8x4xf32>
    %cst_63 = arith.constant dense<0.000000e+00> : vector<8x360xf32>
    %59 = tpu.matmul %58, %56, %cst_63 {dimension_numbers = #tpu.dot_dimension_numbers<[1], [0], [0], [1], [0, 0, 1, 1], [], []>} : vector<8x4xf32>, vector<4x360xf32>, vector<8x360xf32> -> vector<8x360xf32>
    %60 = arith.addf %54, %59 : vector<8x360xf32>
    %c0_64 = arith.constant 0 : index
    %c0_65 = arith.constant 0 : index
    %c0_66 = arith.constant 0 : index
    %c1_67 = arith.constant 1 : index
    %61 = vector.load %arg3[%c0_64, %c0_65, %c0_66, %c1_67] : memref<1x1x4x420xf32, #tpu.memory_space<vmem>>, vector<1x1x4x360xf32>
    %62 = vector.shape_cast %61 : vector<1x1x4x360xf32> to vector<4x360xf32>
    %c10 = arith.constant 10 : index
    %c0_68 = arith.constant 0 : index
    %c0_69 = arith.constant 0 : index
    %63 = vector.load %arg5[%c10, %c0_68, %c0_69] : memref<27x8x4xf32, #tpu.memory_space<vmem>>, vector<1x8x4xf32>
    %64 = vector.shape_cast %63 : vector<1x8x4xf32> to vector<8x4xf32>
    %cst_70 = arith.constant dense<0.000000e+00> : vector<8x360xf32>
    %65 = tpu.matmul %64, %62, %cst_70 {dimension_numbers = #tpu.dot_dimension_numbers<[1], [0], [0], [1], [0, 0, 1, 1], [], []>} : vector<8x4xf32>, vector<4x360xf32>, vector<8x360xf32> -> vector<8x360xf32>
    %66 = arith.addf %60, %65 : vector<8x360xf32>
    %c0_71 = arith.constant 0 : index
    %c0_72 = arith.constant 0 : index
    %c0_73 = arith.constant 0 : index
    %c2_74 = arith.constant 2 : index
    %67 = vector.load %arg3[%c0_71, %c0_72, %c0_73, %c2_74] : memref<1x1x4x420xf32, #tpu.memory_space<vmem>>, vector<1x1x4x360xf32>
    %68 = vector.shape_cast %67 : vector<1x1x4x360xf32> to vector<4x360xf32>
    %c11 = arith.constant 11 : index
    %c0_75 = arith.constant 0 : index
    %c0_76 = arith.constant 0 : index
    %69 = vector.load %arg5[%c11, %c0_75, %c0_76] : memref<27x8x4xf32, #tpu.memory_space<vmem>>, vector<1x8x4xf32>
    %70 = vector.shape_cast %69 : vector<1x8x4xf32> to vector<8x4xf32>
    %cst_77 = arith.constant dense<0.000000e+00> : vector<8x360xf32>
    %71 = tpu.matmul %70, %68, %cst_77 {dimension_numbers = #tpu.dot_dimension_numbers<[1], [0], [0], [1], [0, 0, 1, 1], [], []>} : vector<8x4xf32>, vector<4x360xf32>, vector<8x360xf32> -> vector<8x360xf32>
    %72 = arith.addf %66, %71 : vector<8x360xf32>
    %c0_78 = arith.constant 0 : index
    %c0_79 = arith.constant 0 : index
    %c0_80 = arith.constant 0 : index
    %c20_81 = arith.constant 20 : index
    %73 = vector.load %arg3[%c0_78, %c0_79, %c0_80, %c20_81] : memref<1x1x4x420xf32, #tpu.memory_space<vmem>>, vector<1x1x4x360xf32>
    %74 = vector.shape_cast %73 : vector<1x1x4x360xf32> to vector<4x360xf32>
    %c12 = arith.constant 12 : index
    %c0_82 = arith.constant 0 : index
    %c0_83 = arith.constant 0 : index
    %75 = vector.load %arg5[%c12, %c0_82, %c0_83] : memref<27x8x4xf32, #tpu.memory_space<vmem>>, vector<1x8x4xf32>
    %76 = vector.shape_cast %75 : vector<1x8x4xf32> to vector<8x4xf32>
    %cst_84 = arith.constant dense<0.000000e+00> : vector<8x360xf32>
    %77 = tpu.matmul %76, %74, %cst_84 {dimension_numbers = #tpu.dot_dimension_numbers<[1], [0], [0], [1], [0, 0, 1, 1], [], []>} : vector<8x4xf32>, vector<4x360xf32>, vector<8x360xf32> -> vector<8x360xf32>
    %78 = arith.addf %72, %77 : vector<8x360xf32>
    %c0_85 = arith.constant 0 : index
    %c0_86 = arith.constant 0 : index
    %c0_87 = arith.constant 0 : index
    %c21_88 = arith.constant 21 : index
    %79 = vector.load %arg3[%c0_85, %c0_86, %c0_87, %c21_88] : memref<1x1x4x420xf32, #tpu.memory_space<vmem>>, vector<1x1x4x360xf32>
    %80 = vector.shape_cast %79 : vector<1x1x4x360xf32> to vector<4x360xf32>
    %c13 = arith.constant 13 : index
    %c0_89 = arith.constant 0 : index
    %c0_90 = arith.constant 0 : index
    %81 = vector.load %arg5[%c13, %c0_89, %c0_90] : memref<27x8x4xf32, #tpu.memory_space<vmem>>, vector<1x8x4xf32>
    %82 = vector.shape_cast %81 : vector<1x8x4xf32> to vector<8x4xf32>
    %cst_91 = arith.constant dense<0.000000e+00> : vector<8x360xf32>
    %83 = tpu.matmul %82, %80, %cst_91 {dimension_numbers = #tpu.dot_dimension_numbers<[1], [0], [0], [1], [0, 0, 1, 1], [], []>} : vector<8x4xf32>, vector<4x360xf32>, vector<8x360xf32> -> vector<8x360xf32>
    %84 = arith.addf %78, %83 : vector<8x360xf32>
    %c0_92 = arith.constant 0 : index
    %c0_93 = arith.constant 0 : index
    %c0_94 = arith.constant 0 : index
    %c22_95 = arith.constant 22 : index
    %85 = vector.load %arg3[%c0_92, %c0_93, %c0_94, %c22_95] : memref<1x1x4x420xf32, #tpu.memory_space<vmem>>, vector<1x1x4x360xf32>
    %86 = vector.shape_cast %85 : vector<1x1x4x360xf32> to vector<4x360xf32>
    %c14 = arith.constant 14 : index
    %c0_96 = arith.constant 0 : index
    %c0_97 = arith.constant 0 : index
    %87 = vector.load %arg5[%c14, %c0_96, %c0_97] : memref<27x8x4xf32, #tpu.memory_space<vmem>>, vector<1x8x4xf32>
    %88 = vector.shape_cast %87 : vector<1x8x4xf32> to vector<8x4xf32>
    %cst_98 = arith.constant dense<0.000000e+00> : vector<8x360xf32>
    %89 = tpu.matmul %88, %86, %cst_98 {dimension_numbers = #tpu.dot_dimension_numbers<[1], [0], [0], [1], [0, 0, 1, 1], [], []>} : vector<8x4xf32>, vector<4x360xf32>, vector<8x360xf32> -> vector<8x360xf32>
    %90 = arith.addf %84, %89 : vector<8x360xf32>
    %c0_99 = arith.constant 0 : index
    %c0_100 = arith.constant 0 : index
    %c0_101 = arith.constant 0 : index
    %c40_102 = arith.constant 40 : index
    %91 = vector.load %arg3[%c0_99, %c0_100, %c0_101, %c40_102] : memref<1x1x4x420xf32, #tpu.memory_space<vmem>>, vector<1x1x4x360xf32>
    %92 = vector.shape_cast %91 : vector<1x1x4x360xf32> to vector<4x360xf32>
    %c15 = arith.constant 15 : index
    %c0_103 = arith.constant 0 : index
    %c0_104 = arith.constant 0 : index
    %93 = vector.load %arg5[%c15, %c0_103, %c0_104] : memref<27x8x4xf32, #tpu.memory_space<vmem>>, vector<1x8x4xf32>
    %94 = vector.shape_cast %93 : vector<1x8x4xf32> to vector<8x4xf32>
    %cst_105 = arith.constant dense<0.000000e+00> : vector<8x360xf32>
    %95 = tpu.matmul %94, %92, %cst_105 {dimension_numbers = #tpu.dot_dimension_numbers<[1], [0], [0], [1], [0, 0, 1, 1], [], []>} : vector<8x4xf32>, vector<4x360xf32>, vector<8x360xf32> -> vector<8x360xf32>
    %96 = arith.addf %90, %95 : vector<8x360xf32>
    %c0_106 = arith.constant 0 : index
    %c0_107 = arith.constant 0 : index
    %c0_108 = arith.constant 0 : index
    %c41_109 = arith.constant 41 : index
    %97 = vector.load %arg3[%c0_106, %c0_107, %c0_108, %c41_109] : memref<1x1x4x420xf32, #tpu.memory_space<vmem>>, vector<1x1x4x360xf32>
    %98 = vector.shape_cast %97 : vector<1x1x4x360xf32> to vector<4x360xf32>
    %c16 = arith.constant 16 : index
    %c0_110 = arith.constant 0 : index
    %c0_111 = arith.constant 0 : index
    %99 = vector.load %arg5[%c16, %c0_110, %c0_111] : memref<27x8x4xf32, #tpu.memory_space<vmem>>, vector<1x8x4xf32>
    %100 = vector.shape_cast %99 : vector<1x8x4xf32> to vector<8x4xf32>
    %cst_112 = arith.constant dense<0.000000e+00> : vector<8x360xf32>
    %101 = tpu.matmul %100, %98, %cst_112 {dimension_numbers = #tpu.dot_dimension_numbers<[1], [0], [0], [1], [0, 0, 1, 1], [], []>} : vector<8x4xf32>, vector<4x360xf32>, vector<8x360xf32> -> vector<8x360xf32>
    %102 = arith.addf %96, %101 : vector<8x360xf32>
    %c0_113 = arith.constant 0 : index
    %c0_114 = arith.constant 0 : index
    %c0_115 = arith.constant 0 : index
    %c42_116 = arith.constant 42 : index
    %103 = vector.load %arg3[%c0_113, %c0_114, %c0_115, %c42_116] : memref<1x1x4x420xf32, #tpu.memory_space<vmem>>, vector<1x1x4x360xf32>
    %104 = vector.shape_cast %103 : vector<1x1x4x360xf32> to vector<4x360xf32>
    %c17 = arith.constant 17 : index
    %c0_117 = arith.constant 0 : index
    %c0_118 = arith.constant 0 : index
    %105 = vector.load %arg5[%c17, %c0_117, %c0_118] : memref<27x8x4xf32, #tpu.memory_space<vmem>>, vector<1x8x4xf32>
    %106 = vector.shape_cast %105 : vector<1x8x4xf32> to vector<8x4xf32>
    %cst_119 = arith.constant dense<0.000000e+00> : vector<8x360xf32>
    %107 = tpu.matmul %106, %104, %cst_119 {dimension_numbers = #tpu.dot_dimension_numbers<[1], [0], [0], [1], [0, 0, 1, 1], [], []>} : vector<8x4xf32>, vector<4x360xf32>, vector<8x360xf32> -> vector<8x360xf32>
    %108 = arith.addf %102, %107 : vector<8x360xf32>
    %c0_120 = arith.constant 0 : index
    %c0_121 = arith.constant 0 : index
    %c0_122 = arith.constant 0 : index
    %c0_123 = arith.constant 0 : index
    %109 = vector.load %arg4[%c0_120, %c0_121, %c0_122, %c0_123] : memref<1x1x4x420xf32, #tpu.memory_space<vmem>>, vector<1x1x4x360xf32>
    %110 = vector.shape_cast %109 : vector<1x1x4x360xf32> to vector<4x360xf32>
    %c18 = arith.constant 18 : index
    %c0_124 = arith.constant 0 : index
    %c0_125 = arith.constant 0 : index
    %111 = vector.load %arg5[%c18, %c0_124, %c0_125] : memref<27x8x4xf32, #tpu.memory_space<vmem>>, vector<1x8x4xf32>
    %112 = vector.shape_cast %111 : vector<1x8x4xf32> to vector<8x4xf32>
    %cst_126 = arith.constant dense<0.000000e+00> : vector<8x360xf32>
    %113 = tpu.matmul %112, %110, %cst_126 {dimension_numbers = #tpu.dot_dimension_numbers<[1], [0], [0], [1], [0, 0, 1, 1], [], []>} : vector<8x4xf32>, vector<4x360xf32>, vector<8x360xf32> -> vector<8x360xf32>
    %114 = arith.addf %108, %113 : vector<8x360xf32>
    %c0_127 = arith.constant 0 : index
    %c0_128 = arith.constant 0 : index
    %c0_129 = arith.constant 0 : index
    %c1_130 = arith.constant 1 : index
    %115 = vector.load %arg4[%c0_127, %c0_128, %c0_129, %c1_130] : memref<1x1x4x420xf32, #tpu.memory_space<vmem>>, vector<1x1x4x360xf32>
    %116 = vector.shape_cast %115 : vector<1x1x4x360xf32> to vector<4x360xf32>
    %c19 = arith.constant 19 : index
    %c0_131 = arith.constant 0 : index
    %c0_132 = arith.constant 0 : index
    %117 = vector.load %arg5[%c19, %c0_131, %c0_132] : memref<27x8x4xf32, #tpu.memory_space<vmem>>, vector<1x8x4xf32>
    %118 = vector.shape_cast %117 : vector<1x8x4xf32> to vector<8x4xf32>
    %cst_133 = arith.constant dense<0.000000e+00> : vector<8x360xf32>
    %119 = tpu.matmul %118, %116, %cst_133 {dimension_numbers = #tpu.dot_dimension_numbers<[1], [0], [0], [1], [0, 0, 1, 1], [], []>} : vector<8x4xf32>, vector<4x360xf32>, vector<8x360xf32> -> vector<8x360xf32>
    %120 = arith.addf %114, %119 : vector<8x360xf32>
    %c0_134 = arith.constant 0 : index
    %c0_135 = arith.constant 0 : index
    %c0_136 = arith.constant 0 : index
    %c2_137 = arith.constant 2 : index
    %121 = vector.load %arg4[%c0_134, %c0_135, %c0_136, %c2_137] : memref<1x1x4x420xf32, #tpu.memory_space<vmem>>, vector<1x1x4x360xf32>
    %122 = vector.shape_cast %121 : vector<1x1x4x360xf32> to vector<4x360xf32>
    %c20_138 = arith.constant 20 : index
    %c0_139 = arith.constant 0 : index
    %c0_140 = arith.constant 0 : index
    %123 = vector.load %arg5[%c20_138, %c0_139, %c0_140] : memref<27x8x4xf32, #tpu.memory_space<vmem>>, vector<1x8x4xf32>
    %124 = vector.shape_cast %123 : vector<1x8x4xf32> to vector<8x4xf32>
    %cst_141 = arith.constant dense<0.000000e+00> : vector<8x360xf32>
    %125 = tpu.matmul %124, %122, %cst_141 {dimension_numbers = #tpu.dot_dimension_numbers<[1], [0], [0], [1], [0, 0, 1, 1], [], []>} : vector<8x4xf32>, vector<4x360xf32>, vector<8x360xf32> -> vector<8x360xf32>
    %126 = arith.addf %120, %125 : vector<8x360xf32>
    %c0_142 = arith.constant 0 : index
    %c0_143 = arith.constant 0 : index
    %c0_144 = arith.constant 0 : index
    %c20_145 = arith.constant 20 : index
    %127 = vector.load %arg4[%c0_142, %c0_143, %c0_144, %c20_145] : memref<1x1x4x420xf32, #tpu.memory_space<vmem>>, vector<1x1x4x360xf32>
    %128 = vector.shape_cast %127 : vector<1x1x4x360xf32> to vector<4x360xf32>
    %c21_146 = arith.constant 21 : index
    %c0_147 = arith.constant 0 : index
    %c0_148 = arith.constant 0 : index
    %129 = vector.load %arg5[%c21_146, %c0_147, %c0_148] : memref<27x8x4xf32, #tpu.memory_space<vmem>>, vector<1x8x4xf32>
    %130 = vector.shape_cast %129 : vector<1x8x4xf32> to vector<8x4xf32>
    %cst_149 = arith.constant dense<0.000000e+00> : vector<8x360xf32>
    %131 = tpu.matmul %130, %128, %cst_149 {dimension_numbers = #tpu.dot_dimension_numbers<[1], [0], [0], [1], [0, 0, 1, 1], [], []>} : vector<8x4xf32>, vector<4x360xf32>, vector<8x360xf32> -> vector<8x360xf32>
    %132 = arith.addf %126, %131 : vector<8x360xf32>
    %c0_150 = arith.constant 0 : index
    %c0_151 = arith.constant 0 : index
    %c0_152 = arith.constant 0 : index
    %c21_153 = arith.constant 21 : index
    %133 = vector.load %arg4[%c0_150, %c0_151, %c0_152, %c21_153] : memref<1x1x4x420xf32, #tpu.memory_space<vmem>>, vector<1x1x4x360xf32>
    %134 = vector.shape_cast %133 : vector<1x1x4x360xf32> to vector<4x360xf32>
    %c22_154 = arith.constant 22 : index
    %c0_155 = arith.constant 0 : index
    %c0_156 = arith.constant 0 : index
    %135 = vector.load %arg5[%c22_154, %c0_155, %c0_156] : memref<27x8x4xf32, #tpu.memory_space<vmem>>, vector<1x8x4xf32>
    %136 = vector.shape_cast %135 : vector<1x8x4xf32> to vector<8x4xf32>
    %cst_157 = arith.constant dense<0.000000e+00> : vector<8x360xf32>
    %137 = tpu.matmul %136, %134, %cst_157 {dimension_numbers = #tpu.dot_dimension_numbers<[1], [0], [0], [1], [0, 0, 1, 1], [], []>} : vector<8x4xf32>, vector<4x360xf32>, vector<8x360xf32> -> vector<8x360xf32>
    %138 = arith.addf %132, %137 : vector<8x360xf32>
    %c0_158 = arith.constant 0 : index
    %c0_159 = arith.constant 0 : index
    %c0_160 = arith.constant 0 : index
    %c22_161 = arith.constant 22 : index
    %139 = vector.load %arg4[%c0_158, %c0_159, %c0_160, %c22_161] : memref<1x1x4x420xf32, #tpu.memory_space<vmem>>, vector<1x1x4x360xf32>
    %140 = vector.shape_cast %139 : vector<1x1x4x360xf32> to vector<4x360xf32>
    %c23 = arith.constant 23 : index
    %c0_162 = arith.constant 0 : index
    %c0_163 = arith.constant 0 : index
    %141 = vector.load %arg5[%c23, %c0_162, %c0_163] : memref<27x8x4xf32, #tpu.memory_space<vmem>>, vector<1x8x4xf32>
    %142 = vector.shape_cast %141 : vector<1x8x4xf32> to vector<8x4xf32>
    %cst_164 = arith.constant dense<0.000000e+00> : vector<8x360xf32>
    %143 = tpu.matmul %142, %140, %cst_164 {dimension_numbers = #tpu.dot_dimension_numbers<[1], [0], [0], [1], [0, 0, 1, 1], [], []>} : vector<8x4xf32>, vector<4x360xf32>, vector<8x360xf32> -> vector<8x360xf32>
    %144 = arith.addf %138, %143 : vector<8x360xf32>
    %c0_165 = arith.constant 0 : index
    %c0_166 = arith.constant 0 : index
    %c0_167 = arith.constant 0 : index
    %c40_168 = arith.constant 40 : index
    %145 = vector.load %arg4[%c0_165, %c0_166, %c0_167, %c40_168] : memref<1x1x4x420xf32, #tpu.memory_space<vmem>>, vector<1x1x4x360xf32>
    %146 = vector.shape_cast %145 : vector<1x1x4x360xf32> to vector<4x360xf32>
    %c24 = arith.constant 24 : index
    %c0_169 = arith.constant 0 : index
    %c0_170 = arith.constant 0 : index
    %147 = vector.load %arg5[%c24, %c0_169, %c0_170] : memref<27x8x4xf32, #tpu.memory_space<vmem>>, vector<1x8x4xf32>
    %148 = vector.shape_cast %147 : vector<1x8x4xf32> to vector<8x4xf32>
    %cst_171 = arith.constant dense<0.000000e+00> : vector<8x360xf32>
    %149 = tpu.matmul %148, %146, %cst_171 {dimension_numbers = #tpu.dot_dimension_numbers<[1], [0], [0], [1], [0, 0, 1, 1], [], []>} : vector<8x4xf32>, vector<4x360xf32>, vector<8x360xf32> -> vector<8x360xf32>
    %150 = arith.addf %144, %149 : vector<8x360xf32>
    %c0_172 = arith.constant 0 : index
    %c0_173 = arith.constant 0 : index
    %c0_174 = arith.constant 0 : index
    %c41_175 = arith.constant 41 : index
    %151 = vector.load %arg4[%c0_172, %c0_173, %c0_174, %c41_175] : memref<1x1x4x420xf32, #tpu.memory_space<vmem>>, vector<1x1x4x360xf32>
    %152 = vector.shape_cast %151 : vector<1x1x4x360xf32> to vector<4x360xf32>
    %c25 = arith.constant 25 : index
    %c0_176 = arith.constant 0 : index
    %c0_177 = arith.constant 0 : index
    %153 = vector.load %arg5[%c25, %c0_176, %c0_177] : memref<27x8x4xf32, #tpu.memory_space<vmem>>, vector<1x8x4xf32>
    %154 = vector.shape_cast %153 : vector<1x8x4xf32> to vector<8x4xf32>
    %cst_178 = arith.constant dense<0.000000e+00> : vector<8x360xf32>
    %155 = tpu.matmul %154, %152, %cst_178 {dimension_numbers = #tpu.dot_dimension_numbers<[1], [0], [0], [1], [0, 0, 1, 1], [], []>} : vector<8x4xf32>, vector<4x360xf32>, vector<8x360xf32> -> vector<8x360xf32>
    %156 = arith.addf %150, %155 : vector<8x360xf32>
    %c0_179 = arith.constant 0 : index
    %c0_180 = arith.constant 0 : index
    %c0_181 = arith.constant 0 : index
    %c42_182 = arith.constant 42 : index
    %157 = vector.load %arg4[%c0_179, %c0_180, %c0_181, %c42_182] : memref<1x1x4x420xf32, #tpu.memory_space<vmem>>, vector<1x1x4x360xf32>
    %158 = vector.shape_cast %157 : vector<1x1x4x360xf32> to vector<4x360xf32>
    %c26 = arith.constant 26 : index
    %c0_183 = arith.constant 0 : index
    %c0_184 = arith.constant 0 : index
    %159 = vector.load %arg5[%c26, %c0_183, %c0_184] : memref<27x8x4xf32, #tpu.memory_space<vmem>>, vector<1x8x4xf32>
    %160 = vector.shape_cast %159 : vector<1x8x4xf32> to vector<8x4xf32>
    %cst_185 = arith.constant dense<0.000000e+00> : vector<8x360xf32>
    %161 = tpu.matmul %160, %158, %cst_185 {dimension_numbers = #tpu.dot_dimension_numbers<[1], [0], [0], [1], [0, 0, 1, 1], [], []>} : vector<8x4xf32>, vector<4x360xf32>, vector<8x360xf32> -> vector<8x360xf32>
    %162 = arith.addf %156, %161 : vector<8x360xf32>
    %c0_186 = arith.constant 0 : index
    %c0_187 = arith.constant 0 : index
    %163 = vector.load %arg6[%c0_186, %c0_187] : memref<8x1xf32, #tpu.memory_space<vmem>>, vector<8x1xf32>
    %164 = vector.broadcast %163 : vector<8x1xf32> to vector<8x360xf32>
    %165 = arith.mulf %162, %164 : vector<8x360xf32>
    %c0_188 = arith.constant 0 : index
    %c0_189 = arith.constant 0 : index
    %166 = vector.load %arg7[%c0_188, %c0_189] : memref<8x1xf32, #tpu.memory_space<vmem>>, vector<8x1xf32>
    %167 = vector.broadcast %166 : vector<8x1xf32> to vector<8x360xf32>
    %168 = arith.addf %165, %167 : vector<8x360xf32>
    %cst_190 = arith.constant 0.000000e+00 : f32
    %169 = vector.broadcast %cst_190 : f32 to vector<8x360xf32>
    %170 = arith.maximumf %168, %169 : vector<8x360xf32>
    %c0_191 = arith.constant 0 : index
    %c0_192 = arith.constant 0 : index
    %c0_193 = arith.constant 0 : index
    %c0_194 = arith.constant 0 : index
    %171 = vector.load %arg8[%c0_191, %c0_192, %c0_193, %c0_194] : memref<1x1x8x360xf32, #tpu.memory_space<vmem>>, vector<1x1x8x360xf32>
    %172 = vector.shape_cast %171 : vector<1x1x8x360xf32> to vector<8x360xf32>
    %173 = vector.shape_cast %170 : vector<8x360xf32> to vector<1x1x8x360xf32>
    tpu.vector_store %arg8[%c0_191, %c0_192, %c0_193, %c0_194], %173 {strides = array<i32>} : memref<1x1x8x360xf32, #tpu.memory_space<vmem>>, vector<1x1x8x360xf32>,
    return
  }
  func.func @transform_0(%arg0: i32, %arg1: i32) -> (i32, i32, i32, i32) {
    %c0_i32 = arith.constant 0 : i32
    %0 = arith.addi %arg1, %c0_i32 : i32
    %c0_i32_0 = arith.constant 0 : i32
    %c0_i32_1 = arith.constant 0 : i32
    %c0_i32_2 = arith.constant 0 : i32
    return %arg0, %0, %c0_i32_0, %c0_i32_1 : i32, i32, i32, i32
  }
  func.func @transform_1(%arg0: i32, %arg1: i32) -> (i32, i32, i32, i32) {
    %c1_i32 = arith.constant 1 : i32
    %0 = arith.addi %arg1, %c1_i32 : i32
    %c0_i32 = arith.constant 0 : i32
    %c0_i32_0 = arith.constant 0 : i32
    %c0_i32_1 = arith.constant 0 : i32
    return %arg0, %0, %c0_i32, %c0_i32_0 : i32, i32, i32, i32
  }
  func.func @transform_2(%arg0: i32, %arg1: i32) -> (i32, i32, i32, i32) {
    %c2_i32 = arith.constant 2 : i32
    %0 = arith.addi %arg1, %c2_i32 : i32
    %c0_i32 = arith.constant 0 : i32
    %c0_i32_0 = arith.constant 0 : i32
    %c0_i32_1 = arith.constant 0 : i32
    return %arg0, %0, %c0_i32, %c0_i32_0 : i32, i32, i32, i32
  }
  func.func @transform_3(%arg0: i32, %arg1: i32) -> (i32, i32, i32) {
    %c0_i32 = arith.constant 0 : i32
    %c0_i32_0 = arith.constant 0 : i32
    %c0_i32_1 = arith.constant 0 : i32
    %c0_i32_2 = arith.constant 0 : i32
    return %c0_i32, %c0_i32_0, %c0_i32_1 : i32, i32, i32
  }
  func.func @transform_4(%arg0: i32, %arg1: i32) -> (i32, i32) {
    %c0_i32 = arith.constant 0 : i32
    %c0_i32_0 = arith.constant 0 : i32
    %c0_i32_1 = arith.constant 0 : i32
    return %c0_i32, %c0_i32_0 : i32, i32
  }
  func.func @transform_5(%arg0: i32, %arg1: i32) -> (i32, i32) {
    %c0_i32 = arith.constant 0 : i32
    %c0_i32_0 = arith.constant 0 : i32
    %c0_i32_1 = arith.constant 0 : i32
    return %c0_i32, %c0_i32_0 : i32, i32
  }
  func.func @transform_6(%arg0: i32, %arg1: i32) -> (i32, i32, i32, i32) {
    %c0_i32 = arith.constant 0 : i32
    %c0_i32_0 = arith.constant 0 : i32
    %c0_i32_1 = arith.constant 0 : i32
    return %arg0, %arg1, %c0_i32, %c0_i32_0 : i32, i32, i32, i32
  }
}

</mosaic_0001>

<llo_original>
// kernel: tpu_custom_call.1
$region0: #{tpu_custom_call.1}
  #allocation0 [shape = 'u32[]', space=smem, size = 0x4, offset = 0x4, fixed_abs, tag = 'smem constant byte address 0x4 - core index']
  #allocation1 [shape = 'u32[144,128]{1,0:T(1,128)}', space=vmem, size = 0x12000, scoped, tag = 'internal scratch']
  %s0 = inlined_call_operand.hbm [shape: f32[2,10,4,420], index: 0, kind: input, shape index: {}]
  %s1 = inlined_call_operand.hbm [shape: f32[2,10,4,420], index: 1, kind: input, shape index: {}]
  %s2 = inlined_call_operand.hbm [shape: f32[2,10,4,420], index: 2, kind: input, shape index: {}]
  %s3 = inlined_call_operand.hbm [shape: f32[27,8,4], index: 3, kind: input, shape index: {}]
  %s4 = inlined_call_operand.hbm [shape: f32[8,1], index: 4, kind: input, shape index: {}]
  %s5 = inlined_call_operand.hbm [shape: f32[8,1], index: 5, kind: input, shape index: {}]
  %s6 = inlined_call_operand.hbm [shape: f32[2,8,8,360], index: 6, kind: output, shape index: {}]
  %s7 = sld [smem:[#allocation0]]
  $region81: #{tpu_custom_call.1} parent=0
    _
  %s9 = ssub.s32 1, %s7
  %s10 = scalar_select 0, %s9, %s7
  $region1: #{tpu_custom_call.1} parent=0
    #allocation2 [shape = 'u8[16384]{0}', space=vmem, size = 0x4000, scoped, tag = 'input window, operand 0']
    #allocation3 [shape = 's32[2]{0}', space=sflag, size = 0x8, scoped, tag = 'scoped memory for tpu_custom_call.1']
    #allocation4 [shape = 's32[2]{0}', space=sflag, size = 0x8, scoped, tag = 'scoped memory for tpu_custom_call.1']
    #allocation5 [shape = 'u8[16384]{0}', space=vmem, size = 0x4000, scoped, tag = 'input window, operand 1']
    #allocation6 [shape = 's32[2]{0}', space=sflag, size = 0x8, scoped, tag = 'scoped memory for tpu_custom_call.1']
    #allocation7 [shape = 'u8[16384]{0}', space=vmem, size = 0x4000, scoped, tag = 'input window, operand 2']
    #allocation8 [shape = 'u8[110592]{0}', space=vmem, size = 0x1b000, scoped, tag = 'input window, operand 3, single buffered']
    #allocation9 [shape = 's32[1]{0}', space=sflag, size = 0x4, scoped, tag = 'scoped memory for tpu_custom_call.1']
    #allocation10 [shape = 'u8[4096]{0}', space=vmem, size = 0x1000, scoped, tag = 'input window, operand 4, single buffered']
    #allocation11 [shape = 'u8[4096]{0}', space=vmem, size = 0x1000, scoped, tag = 'input window, operand 5, single buffered']
    #allocation12 [shape = 's32[1]{0}', space=sflag, size = 0x4, scoped, tag = 'scoped memory for tpu_custom_call.1']
    #allocation13 [shape = 'u8[24576]{0}', space=vmem, size = 0x6000, scoped, tag = 'output window, operand 0']
    %11 = vsyncpa [#allocation3], 0
    %s12 = scalar_lea.sflag [#allocation3], 1
    %13 = vsyncpa %s12, 0
    %14 = vsyncpa [#allocation6], 0
    %s15 = scalar_lea.sflag [#allocation6], 1
    %16 = vsyncpa %s15, 0
    %17 = vsyncpa [#allocation9], 0
    %18 = vsyncpa [#allocation12], 0
    %19 = vsyncpa [#allocation4], 0
    %s20 = scalar_lea.sflag [#allocation4], 1
    %21 = vsyncpa %s20, 0
    loop: start=0, step=1, limit=18
    $region2: #{tpu_custom_call.1} parent=1 // loop_pre_header
      _
    $region3: #{tpu_custom_call.1} parent=1 // loop_header
      %s23 = sphi 0, %s27
      %p24 = scmp.ge.s32.totalorder %s23, 18
      %s30 = sphi 0, %s42
      %s31 = sphi 0, %s38
      %s32 = sphi 0, %s30
      %s33 = sphi 0, %s31
      %s34 = sphi 0, %s32
      %s35 = sphi 0, %s33
      %s47 = sphi 0, %s49
      %s50 = sphi 0, %s47
      %s51 = sphi 0, %s50
      %s67 = sphi 0, %s51
      %s77 = sphi 0, %s79
      %s80 = sphi 0, %s77
      %s81 = sphi 0, %s80
      %s97 = sphi 0, %s81
      %s107 = sphi 0, %s109
      %s110 = sphi 0, %s107
      %s111 = sphi 0, %s110
      %s127 = sphi 0, %s111
      %s131 = sphi 0, %s131
      %s133 = sphi 0, %s131
      %s134 = sphi 0, %s133
      %s148 = sphi 0, %s134
      %s152 = sphi 0, %s152
      %s154 = sphi 0, %s152
      %s155 = sphi 0, %s154
      %s169 = sphi 0, %s155
      %s173 = sphi 0, %s173
      %s175 = sphi 0, %s173
      %s176 = sphi 0, %s175
      %s190 = sphi 0, %s176
      %s198 = sphi 0, %s200
      %s201 = sphi 0, %s198
      %s202 = sphi 0, %s201
      %s218 = sphi 0, %s202
    $region4: #{tpu_custom_call.1} parent=1 // loop_header_branch
      %26 = sbr.rel (%p24) target = $region8
    $region5: #{tpu_custom_call.1} parent=1 // loop_body
      %s28 = ssub.s32 %s23, 1
      %s29 = ssub.s32 %s23, 2
      %s36 = sadd.s32 1, %s31
      %p37 = scmp.ge.s32.totalorder %s36, 8
      %s38 = scalar_select %p37, 0, %s36
      %s39 = sadd.s32 1, %s30
      %s40 = scalar_select %p37, %s39, %s30
      %p41 = scmp.ge.s32.totalorder %s40, 2
      %s42 = scalar_select %p41, 0, %s40
      %s43 = ssub.s32 %s30, %s42
      %s44 = ssub.s32 %s31, %s38
      %s45 = sor.u32 %s43, %s44
      %p46 = scmp.eq.s32.totalorder %s45, 0
      %s48 = sadd.s32 %s47, 1
      %s49 = scalar_select %p46, %s47, %s48
      %p52 = pneg %p46
      %p53 = scmp.eq.s32.totalorder %s23, 15
      %p54 = por %p52, %p53
      %p55 = scmp.ne.s32.totalorder %s47, %s50
      %p56 = scmp.eq.s32.totalorder %s23, 0
      %p57 = por %p55, %p56
      %p58 = scmp.ne.s32.totalorder %s47, %s50
      %p59 = scmp.eq.s32.totalorder %s28, 15
      %p60 = por %p58, %p59
      %p61 = scmp.ne.s32.totalorder %s50, %s51
      %p62 = scmp.eq.s32.totalorder %s28, 0
      %p63 = por %p61, %p62
      %p64 = scmp.ne.s32.totalorder %s50, %s51
      %p65 = scmp.eq.s32.totalorder %s29, 15
      %p66 = por %p64, %p65
      %p68 = scmp.ne.s32.totalorder %s51, %s67
      %p69 = scmp.eq.s32.totalorder %s29, 0
      %p70 = por %p68, %p69
      %s71 = sadd.s32 %s31, 1
      %s72 = sadd.s32 %s38, 1
      %s73 = ssub.s32 %s30, %s42
      %s74 = ssub.s32 %s71, %s72
      %s75 = sor.u32 %s73, %s74
      %p76 = scmp.eq.s32.totalorder %s75, 0
      %s78 = sadd.s32 %s77, 1
      %s79 = scalar_select %p76, %s77, %s78
      %p82 = pneg %p76
      %p83 = scmp.eq.s32.totalorder %s23, 15
      %p84 = por %p82, %p83
      %p85 = scmp.ne.s32.totalorder %s77, %s80
      %p86 = scmp.eq.s32.totalorder %s23, 0
      %p87 = por %p85, %p86
      %p88 = scmp.ne.s32.totalorder %s77, %s80
      %p89 = scmp.eq.s32.totalorder %s28, 15
      %p90 = por %p88, %p89
      %p91 = scmp.ne.s32.totalorder %s80, %s81
      %p92 = scmp.eq.s32.totalorder %s28, 0
      %p93 = por %p91, %p92
      %p94 = scmp.ne.s32.totalorder %s80, %s81
      %p95 = scmp.eq.s32.totalorder %s29, 15
      %p96 = por %p94, %p95
      %p98 = scmp.ne.s32.totalorder %s81, %s97
      %p99 = scmp.eq.s32.totalorder %s29, 0
      %p100 = por %p98, %p99
      %s101 = sadd.s32 %s31, 2
      %s102 = sadd.s32 %s38, 2
      %s103 = ssub.s32 %s30, %s42
      %s104 = ssub.s32 %s101, %s102
      %s105 = sor.u32 %s103, %s104
      %p106 = scmp.eq.s32.totalorder %s105, 0
      %s108 = sadd.s32 %s107, 1
      %s109 = scalar_select %p106, %s107, %s108
      %p112 = pneg %p106
      %p113 = scmp.eq.s32.totalorder %s23, 15
      %p114 = por %p112, %p113
      %p115 = scmp.ne.s32.totalorder %s107, %s110
      %p116 = scmp.eq.s32.totalorder %s23, 0
      %p117 = por %p115, %p116
      %p118 = scmp.ne.s32.totalorder %s107, %s110
      %p119 = scmp.eq.s32.totalorder %s28, 15
      %p120 = por %p118, %p119
      %p121 = scmp.ne.s32.totalorder %s110, %s111
      %p122 = scmp.eq.s32.totalorder %s28, 0
      %p123 = por %p121, %p122
      %p124 = scmp.ne.s32.totalorder %s110, %s111
      %p125 = scmp.eq.s32.totalorder %s29, 15
      %p126 = por %p124, %p125
      %p128 = scmp.ne.s32.totalorder %s111, %s127
      %p129 = scmp.eq.s32.totalorder %s29, 0
      %p130 = por %p128, %p129
      %s132 = sadd.s32 %s131, 1
      %p135 = scmp.eq.s32.totalorder %s23, 15
      %p136 = scmp.ne.s32.totalorder %s131, %s133
      %p137 = scmp.eq.s32.totalorder %s23, 0
      %p138 = por %p136, %p137
      %p139 = scmp.ne.s32.totalorder %s131, %s133
      %p140 = scmp.eq.s32.totalorder %s28, 15
      %p141 = por %p139, %p140
      %p142 = scmp.ne.s32.totalorder %s133, %s134
      %p143 = scmp.eq.s32.totalorder %s28, 0
      %p144 = por %p142, %p143
      %p145 = scmp.ne.s32.totalorder %s133, %s134
      %p146 = scmp.eq.s32.totalorder %s29, 15
      %p147 = por %p145, %p146
      %p149 = scmp.ne.s32.totalorder %s134, %s148
      %p150 = scmp.eq.s32.totalorder %s29, 0
      %p151 = por %p149, %p150
      %s153 = sadd.s32 %s152, 1
      %p156 = scmp.eq.s32.totalorder %s23, 15
      %p157 = scmp.ne.s32.totalorder %s152, %s154
      %p158 = scmp.eq.s32.totalorder %s23, 0
      %p159 = por %p157, %p158
      %p160 = scmp.ne.s32.totalorder %s152, %s154
      %p161 = scmp.eq.s32.totalorder %s28, 15
      %p162 = por %p160, %p161
      %p163 = scmp.ne.s32.totalorder %s154, %s155
      %p164 = scmp.eq.s32.totalorder %s28, 0
      %p165 = por %p163, %p164
      %p166 = scmp.ne.s32.totalorder %s154, %s155
      %p167 = scmp.eq.s32.totalorder %s29, 15
      %p168 = por %p166, %p167
      %p170 = scmp.ne.s32.totalorder %s155, %s169
      %p171 = scmp.eq.s32.totalorder %s29, 0
      %p172 = por %p170, %p171
      %s174 = sadd.s32 %s173, 1
      %p177 = scmp.eq.s32.totalorder %s23, 15
      %p178 = scmp.ne.s32.totalorder %s173, %s175
      %p179 = scmp.eq.s32.totalorder %s23, 0
      %p180 = por %p178, %p179
      %p181 = scmp.ne.s32.totalorder %s173, %s175
      %p182 = scmp.eq.s32.totalorder %s28, 15
      %p183 = por %p181, %p182
      %p184 = scmp.ne.s32.totalorder %s175, %s176
      %p185 = scmp.eq.s32.totalorder %s28, 0
      %p186 = por %p184, %p185
      %p187 = scmp.ne.s32.totalorder %s175, %s176
      %p188 = scmp.eq.s32.totalorder %s29, 15
      %p189 = por %p187, %p188
      %p191 = scmp.ne.s32.totalorder %s176, %s190
      %p192 = scmp.eq.s32.totalorder %s29, 0
      %p193 = por %p191, %p192
      %s194 = ssub.s32 %s30, %s42
      %s195 = ssub.s32 %s31, %s38
      %s196 = sor.u32 %s194, %s195
      %p197 = scmp.eq.s32.totalorder %s196, 0
      %s199 = sadd.s32 %s198, 1
      %s200 = scalar_select %p197, %s198, %s199
      %p203 = pneg %p197
      %p204 = scmp.eq.s32.totalorder %s23, 15
      %p205 = por %p203, %p204
      %p206 = scmp.ne.s32.totalorder %s198, %s201
      %p207 = scmp.eq.s32.totalorder %s23, 0
      %p208 = por %p206, %p207
      %p209 = scmp.ne.s32.totalorder %s198, %s201
      %p210 = scmp.eq.s32.totalorder %s28, 15
      %p211 = por %p209, %p210
      %p212 = scmp.ne.s32.totalorder %s201, %s202
      %p213 = scmp.eq.s32.totalorder %s28, 0
      %p214 = por %p212, %p213
      %p215 = scmp.ne.s32.totalorder %s201, %s202
      %p216 = scmp.eq.s32.totalorder %s29, 15
      %p217 = por %p215, %p216
      %p219 = scmp.ne.s32.totalorder %s202, %s218
      %p220 = scmp.eq.s32.totalorder %s29, 0
      %p221 = por %p219, %p220
      %p222 = scmp.le.s32.totalorder 1, %s23
      %p223 = scmp.lt.s32.totalorder %s23, 17
      %p224 = pnand %p222, %p223
      %p225 = pneg %p224
      // Predicated region
      $region9: #{tpu_custom_call.1} parent=5 // pred_check
        _
      $region10: #{tpu_custom_call.1} parent=5 // pred_check_branch
        %227 = sbr.rel (%p224) target = $region12
      $region11: #{tpu_custom_call.1} parent=5 // pred_region
        %s228 = ssub.s32 %s23, 1
        // Predicated region
        $region13: #{tpu_custom_call.1} parent=11 // pred_check
          %p229 = pneg %p144
        $region14: #{tpu_custom_call.1} parent=11 // pred_check_branch
          %231 = sbr.rel (%p229) target = $region16
        $region15: #{tpu_custom_call.1} parent=11 // pred_region
          %s233 = ssub.s32 3456, 3456
          %234 = vsyncadd [#allocation9], %s233
          %s235 = sshll.u32 [#allocation8], 4
          %s236 = int_to_ptr.vmem [resolvable:$true] %s235
          %241 = dma.hbm_to_vmem [thread:$0]  %s3, 3456, %s236, [#allocation9], 128, 128, 8
        $region16: #{tpu_custom_call.1} parent=11 // pred_fallthru
          _
        // Predicated region
        $region17: #{tpu_custom_call.1} parent=11 // pred_check
          %p242 = pneg %p165
        $region18: #{tpu_custom_call.1} parent=11 // pred_check_branch
          %244 = sbr.rel (%p242) target = $region20
        $region19: #{tpu_custom_call.1} parent=11 // pred_region
          %s246 = ssub.s32 128, 128
          %247 = vsyncadd [#allocation9], %s246
          %s249 = sshll.u32 [#allocation10], 4
          %s250 = int_to_ptr.vmem [resolvable:$true] %s249
          %252 = dma.hbm_to_vmem [thread:$0]  %s4, 128, %s250, [#allocation9]
        $region20: #{tpu_custom_call.1} parent=11 // pred_fallthru
          _
        // Predicated region
        $region21: #{tpu_custom_call.1} parent=11 // pred_check
          %p253 = pneg %p186
        $region22: #{tpu_custom_call.1} parent=11 // pred_check_branch
          %255 = sbr.rel (%p253) target = $region24
        $region23: #{tpu_custom_call.1} parent=11 // pred_region
          %s257 = ssub.s32 128, 128
          %258 = vsyncadd [#allocation12], %s257
          %s260 = sshll.u32 [#allocation11], 4
          %s261 = int_to_ptr.vmem [resolvable:$true] %s260
          %263 = dma.hbm_to_vmem [thread:$0]  %s5, 128, %s261, [#allocation12]
        $region24: #{tpu_custom_call.1} parent=11 // pred_fallthru
          _
      $region12: #{tpu_custom_call.1} parent=5 // pred_fallthru
        _
      %p264 = scmp.lt.s32.totalorder %s23, 16
      // Predicated region
      $region25: #{tpu_custom_call.1} parent=5 // pred_check
        %p265 = pneg %p264
      $region26: #{tpu_custom_call.1} parent=5 // pred_check_branch
        %267 = sbr.rel (%p265) target = $region28
      $region27: #{tpu_custom_call.1} parent=5 // pred_region
        // Predicated region
        $region29: #{tpu_custom_call.1} parent=27 // pred_check
          %p268 = pneg %p57
        $region30: #{tpu_custom_call.1} parent=27 // pred_check_branch
          %270 = sbr.rel (%p268) target = $region32
        $region31: #{tpu_custom_call.1} parent=27 // pred_region
          %s271 = sand.u32 %s47, 1
          %s272 = scalar_lea.sflag [#allocation3], %s271
          %s273 = sand.u32 %s47, 1
          %s274 = smul.addr %s273, 16
          %s275 = scalar_lea.vmem [#allocation2], %s274
          %s277 = ssub.s32 256, 256
          %278 = vsyncadd %s272, %s277
          %s279 = smul.addr %s31, 4
          %s280 = smul.addr %s30, 40
          %s281 = sadd.s32 %s279, %s280
          %s282 = smul.addr %s281, 64
          %s283 = scalar_lea.hbm %s0, %s282
          %s285 = sshll.u32 %s275, 4
          %s286 = int_to_ptr.vmem [resolvable:$true] %s285
          %288 = dma.hbm_to_vmem [thread:$0]  %s283, 256, %s286, %s272
        $region32: #{tpu_custom_call.1} parent=27 // pred_fallthru
          _
        // Predicated region
        $region33: #{tpu_custom_call.1} parent=27 // pred_check
          %p289 = pneg %p87
        $region34: #{tpu_custom_call.1} parent=27 // pred_check_branch
          %291 = sbr.rel (%p289) target = $region36
        $region35: #{tpu_custom_call.1} parent=27 // pred_region
          %s292 = sand.u32 %s23, 1
          %s293 = scalar_lea.sflag [#allocation6], %s292
          %s294 = sand.u32 %s77, 1
          %s295 = smul.addr %s294, 16
          %s296 = scalar_lea.vmem [#allocation5], %s295
          %s297 = sadd.s32 %s31, 1
          %s299 = ssub.s32 256, 256
          %300 = vsyncadd %s293, %s299
          %s301 = smul.addr %s297, 4
          %s302 = smul.addr %s30, 40
          %s303 = sadd.s32 %s301, %s302
          %s304 = smul.addr %s303, 64
          %s305 = scalar_lea.hbm %s1, %s304
          %s307 = sshll.u32 %s296, 4
          %s308 = int_to_ptr.vmem [resolvable:$true] %s307
          %310 = dma.hbm_to_vmem [thread:$0]  %s305, 256, %s308, %s293
        $region36: #{tpu_custom_call.1} parent=27 // pred_fallthru
          _
        // Predicated region
        $region37: #{tpu_custom_call.1} parent=27 // pred_check
          %p311 = pneg %p117
        $region38: #{tpu_custom_call.1} parent=27 // pred_check_branch
          %313 = sbr.rel (%p311) target = $region40
        $region39: #{tpu_custom_call.1} parent=27 // pred_region
          %s314 = sand.u32 %s23, 1
          %s315 = scalar_lea.sflag [#allocation6], %s314
          %s316 = sand.u32 %s107, 1
          %s317 = smul.addr %s316, 16
          %s318 = scalar_lea.vmem [#allocation7], %s317
          %s319 = sadd.s32 %s31, 2
          %s321 = ssub.s32 256, 256
          %322 = vsyncadd %s315, %s321
          %s323 = smul.addr %s319, 4
          %s324 = smul.addr %s30, 40
          %s325 = sadd.s32 %s323, %s324
          %s326 = smul.addr %s325, 64
          %s327 = scalar_lea.hbm %s2, %s326
          %s329 = sshll.u32 %s318, 4
          %s330 = int_to_ptr.vmem [resolvable:$true] %s329
          %332 = dma.hbm_to_vmem [thread:$0]  %s327, 256, %s330, %s315
        $region40: #{tpu_custom_call.1} parent=27 // pred_fallthru
          _
      $region28: #{tpu_custom_call.1} parent=5 // pred_fallthru
        _
      %p333 = scmp.le.s32.totalorder 1, %s23
      %p334 = scmp.lt.s32.totalorder %s23, 17
      %p335 = pnand %p333, %p334
      %p336 = pneg %p335
      // Predicated region
      $region41: #{tpu_custom_call.1} parent=5 // pred_check
        _
      $region42: #{tpu_custom_call.1} parent=5 // pred_check_branch
        %338 = sbr.rel (%p335) target = $region44
      $region43: #{tpu_custom_call.1} parent=5 // pred_region
        %s339 = ssub.s32 %s23, 1
        %s340 = sand.u32 %s50, 1
        %s341 = scalar_lea.sflag [#allocation3], %s340
        %s342 = sand.u32 %s50, 1
        %s343 = smul.addr %s342, 16
        %s344 = scalar_lea.vmem [#allocation2], %s343
        // Predicated region
        $region45: #{tpu_custom_call.1} parent=43 // pred_check
          %p345 = pneg %p63
        $region46: #{tpu_custom_call.1} parent=43 // pred_check_branch
          %347 = sbr.rel (%p345) target = $region48
        $region47: #{tpu_custom_call.1} parent=43 // pred_region
          %348 = dma.done %s341, 256
        $region48: #{tpu_custom_call.1} parent=43 // pred_fallthru
          _
        %s349 = sand.u32 %s28, 1
        %s350 = scalar_lea.sflag [#allocation6], %s349
        %s351 = sand.u32 %s80, 1
        %s352 = smul.addr %s351, 16
        %s353 = scalar_lea.vmem [#allocation5], %s352
        // Predicated region
        $region49: #{tpu_custom_call.1} parent=43 // pred_check
          %p354 = pneg %p93
        $region50: #{tpu_custom_call.1} parent=43 // pred_check_branch
          %356 = sbr.rel (%p354) target = $region52
        $region51: #{tpu_custom_call.1} parent=43 // pred_region
          %357 = dma.done %s350, 256
        $region52: #{tpu_custom_call.1} parent=43 // pred_fallthru
          _
        %s358 = sand.u32 %s28, 1
        %s359 = scalar_lea.sflag [#allocation6], %s358
        %s360 = sand.u32 %s110, 1
        %s361 = smul.addr %s360, 16
        %s362 = scalar_lea.vmem [#allocation7], %s361
        // Predicated region
        $region53: #{tpu_custom_call.1} parent=43 // pred_check
          %p363 = pneg %p123
        $region54: #{tpu_custom_call.1} parent=43 // pred_check_branch
          %365 = sbr.rel (%p363) target = $region56
        $region55: #{tpu_custom_call.1} parent=43 // pred_region
          %366 = dma.done %s359, 256
        $region56: #{tpu_custom_call.1} parent=43 // pred_fallthru
          _
        // Predicated region
        $region57: #{tpu_custom_call.1} parent=43 // pred_check
          %p367 = pneg %p144
        $region58: #{tpu_custom_call.1} parent=43 // pred_check_branch
          %369 = sbr.rel (%p367) target = $region60
        $region59: #{tpu_custom_call.1} parent=43 // pred_region
          %370 = dma.done [#allocation9], 3456
        $region60: #{tpu_custom_call.1} parent=43 // pred_fallthru
          _
        // Predicated region
        $region61: #{tpu_custom_call.1} parent=43 // pred_check
          %p371 = pneg %p165
        $region62: #{tpu_custom_call.1} parent=43 // pred_check_branch
          %373 = sbr.rel (%p371) target = $region64
        $region63: #{tpu_custom_call.1} parent=43 // pred_region
          %374 = dma.done [#allocation9], 128
        $region64: #{tpu_custom_call.1} parent=43 // pred_fallthru
          _
        // Predicated region
        $region65: #{tpu_custom_call.1} parent=43 // pred_check
          %p375 = pneg %p186
        $region66: #{tpu_custom_call.1} parent=43 // pred_check_branch
          %377 = sbr.rel (%p375) target = $region68
        $region67: #{tpu_custom_call.1} parent=43 // pred_region
          %378 = dma.done [#allocation12], 128
        $region68: #{tpu_custom_call.1} parent=43 // pred_fallthru
          _
        %s379 = sand.u32 %s50, 1
        %s380 = scalar_lea.sflag [#allocation3], %s379
        %s381 = sand.u32 %s50, 1
        %s382 = smul.addr %s381, 16
        %s383 = scalar_lea.vmem [#allocation2], %s382
        %p384 = pneg %p63
        %p385 = pneg %p60
        %s386 = sand.u32 %s28, 1
        %s387 = scalar_lea.sflag [#allocation6], %s386
        %s388 = sand.u32 %s80, 1
        %s389 = smul.addr %s388, 16
        %s390 = scalar_lea.vmem [#allocation5], %s389
        %p391 = pneg %p93
        %p392 = pneg %p90
        %s393 = sand.u32 %s28, 1
        %s394 = scalar_lea.sflag [#allocation6], %s393
        %s395 = sand.u32 %s110, 1
        %s396 = smul.addr %s395, 16
        %s397 = scalar_lea.vmem [#allocation7], %s396
        %p398 = pneg %p123
        %p399 = pneg %p120
        %p400 = pneg %p144
        %p401 = pneg %p141
        %p402 = pneg %p165
        %p403 = pneg %p162
        %p404 = pneg %p186
        %p405 = pneg %p183
        %p406 = pneg %p214
        %p407 = pneg %p211
        %s408 = sand.u32 %s201, 1
        %s409 = scalar_lea.sflag [#allocation4], %s408
        %s410 = sand.u32 %s201, 1
        %s411 = smul.addr %s410, 24
        %s412 = scalar_lea.vmem [#allocation13], %s411
        %s413 = sadd.s32 %s33, 1
        %s414 = sadd.s32 %s33, 2
        %v415 = vld [vmem:[%s344] sm:$0xff]
        %v416 = vld [vmem:[%s344 + $0x8] sm:$0xf]
        %v417 = vld [vmem:[#allocation8] sm:$0xff]
        %s418 = scalar_lea.vmem [#allocation8], 8
        %v419 = vld [vmem:[%s418] sm:$0xff]
        %v422 = vcombine.high %v415, %v415
        %423 = vrot.lane.b32.xlu0 %v415, 127
        %v424 = vpop.permute.xlu0 %423
        %425 = vrot.lane.b32.xlu0 %v422, 127
        %v426 = vpop.permute.xlu0 %425
        %427 = vrot.lane.b32.xlu0 %v416, 127
        %v428 = vpop.permute.xlu0 %427
        %vm429 = vcmask 1039360
        %v430 = vsel %vm429, %v424, %v426
        %v431 = vsel %vm429, %v426, %v428
        %vm432 = vcmask 31744
        %v434 = vsel %vm432, %v419, 0
        %vm436 = vcmask 1043456
        %v437 = vsel %vm436, %v430, 0
        %v439 = vsel %vm436, %v431, 0
        %v441 = vsel %vm436, %v428, 0
        %443 = vmatprep.subr.mxu0 %v439
        %444 = vmatpush1.msra.mxu0 %v437
        %445 = vmatprep.subr.mxu0 0.0
        %446 = vmatpush1.msra.mxu0 0.0
        %447 = vmatprep.subr.mxu0 0.0
        %448 = vmatpush1.msra.mxu0 0.0
        %449 = vmatprep.subr.mxu0 0.0
        %450 = vmatpush1.msra.mxu0 0.0
        %451 = vmatprep.subr.mxu0 0.0
        %452 = vmatpush1.msra.mxu0 0.0
        %453 = vmatprep.subr.mxu0 0.0
        %454 = vmatpush1.msra.mxu0 0.0
        %455 = vmatprep.subr.mxu0 0.0
        %456 = vmatpush1.msra.mxu0 0.0
        %457 = vmatprep.subr.mxu0 0.0
        %458 = vmatpush1.msra.mxu0 0.0
        %459 = vmatprep.subr.mxu0 0.0
        %460 = vmatpush1.msra.mxu0 0.0
        %461 = vmatprep.subr.mxu0 0.0
        %462 = vmatpush1.msra.mxu0 0.0
        %463 = vmatprep.subr.mxu0 0.0
        %464 = vmatpush1.msra.mxu0 0.0
        %465 = vmatprep.subr.mxu0 0.0
        %466 = vmatpush1.msra.mxu0 0.0
        %467 = vmatprep.subr.mxu0 0.0
        %468 = vmatpush1.msra.mxu0 0.0
        %469 = vmatprep.subr.mxu0 0.0
        %470 = vmatpush1.msra.mxu0 0.0
        %471 = vmatprep.subr.mxu0 0.0
        %472 = vmatpush1.msra.mxu0 0.0
        %473 = vmatprep.subr.mxu0 0.0
        %474 = vmatpush1.msra.mxu0 0.0
        %475 = vmatprep.subr.mxu0 0.0
        %476 = vmatpush1.msra.mxu0 0.0
        %477 = vmatprep.subr.mxu0 0.0
        %478 = vmatpush1.msra.mxu0 0.0
        %479 = vmatprep.subr.mxu0 0.0
        %480 = vmatpush1.msra.mxu0 0.0
        %481 = vmatprep.subr.mxu0 0.0
        %482 = vmatpush1.msra.mxu0 0.0
        %483 = vmatprep.subr.mxu0 0.0
        %484 = vmatpush1.msra.mxu0 0.0
        %485 = vmatprep.subr.mxu0 0.0
        %486 = vmatpush1.msra.mxu0 0.0
        %487 = vmatprep.subr.mxu0 0.0
        %488 = vmatpush1.msra.mxu0 0.0
        %489 = vmatprep.subr.mxu0 0.0
        %490 = vmatpush1.msra.mxu0 0.0
        %491 = vmatprep.subr.mxu0 0.0
        %492 = vmatpush1.msra.mxu0 0.0
        %493 = vmatprep.subr.mxu0 0.0
        %494 = vmatpush1.msra.mxu0 0.0
        %495 = vmatprep.subr.mxu0 0.0
        %496 = vmatpush1.msra.mxu0 0.0
        %497 = vmatprep.subr.mxu0 0.0
        %498 = vmatpush1.msra.mxu0 0.0
        %499 = vmatprep.subr.mxu0 0.0
        %500 = vmatpush1.msra.mxu0 0.0
        %501 = vmatprep.subr.mxu0 0.0
        %502 = vmatpush1.msra.mxu0 0.0
        %503 = vmatprep.subr.mxu0 0.0
        %504 = vmatpush1.msra.mxu0 0.0
        %505 = vmatprep.subr.mxu0 0.0
        %506 = vmatpush1.msra.mxu0 0.0
        %507 = vmatprep.mubr.f32.mxu0 0.0
        %508 = vmatmul.mubr.f32.gmra.mrb[0].mxu0 %v434
        %v509 = vpop.f32.mrb[0].mxu0
        %v510 = vadd.f32 0.0, %v509
        %v511 = vpop.f32.mrb[0].mxu0
        %v512 = vadd.f32 0.0, %v511
        %513 = vdwg.mxu0
        %514 = vmatprep.subr.mxu0 0.0
        %515 = vmatpush1.msra.mxu0 %v441
        %516 = vmatprep.subr.mxu0 0.0
        %517 = vmatpush1.msra.mxu0 0.0
        %518 = vmatprep.subr.mxu0 0.0
        %519 = vmatpush1.msra.mxu0 0.0
        %520 = vmatprep.subr.mxu0 0.0
        %521 = vmatpush1.msra.mxu0 0.0
        %522 = vmatprep.subr.mxu0 0.0
        %523 = vmatpush1.msra.mxu0 0.0
        %524 = vmatprep.subr.mxu0 0.0
        %525 = vmatpush1.msra.mxu0 0.0
        %526 = vmatprep.subr.mxu0 0.0
        %527 = vmatpush1.msra.mxu0 0.0
        %528 = vmatprep.subr.mxu0 0.0
        %529 = vmatpush1.msra.mxu0 0.0
        %530 = vmatprep.subr.mxu0 0.0
        %531 = vmatpush1.msra.mxu0 0.0
        %532 = vmatprep.subr.mxu0 0.0
        %533 = vmatpush1.msra.mxu0 0.0
        %534 = vmatprep.subr.mxu0 0.0
        %535 = vmatpush1.msra.mxu0 0.0
        %536 = vmatprep.subr.mxu0 0.0
        %537 = vmatpush1.msra.mxu0 0.0
        %538 = vmatprep.subr.mxu0 0.0
        %539 = vmatpush1.msra.mxu0 0.0
        %540 = vmatprep.subr.mxu0 0.0
        %541 = vmatpush1.msra.mxu0 0.0
        %542 = vmatprep.subr.mxu0 0.0
        %543 = vmatpush1.msra.mxu0 0.0
        %544 = vmatprep.subr.mxu0 0.0
        %545 = vmatpush1.msra.mxu0 0.0
        %546 = vmatprep.subr.mxu0 0.0
        %547 = vmatpush1.msra.mxu0 0.0
        %548 = vmatprep.subr.mxu0 0.0
        %549 = vmatpush1.msra.mxu0 0.0
        %550 = vmatprep.subr.mxu0 0.0
        %551 = vmatpush1.msra.mxu0 0.0
        %552 = vmatprep.subr.mxu0 0.0
        %553 = vmatpush1.msra.mxu0 0.0
        %554 = vmatprep.subr.mxu0 0.0
        %555 = vmatpush1.msra.mxu0 0.0
        %556 = vmatprep.subr.mxu0 0.0
        %557 = vmatpush1.msra.mxu0 0.0
        %558 = vmatprep.subr.mxu0 0.0
        %559 = vmatpush1.msra.mxu0 0.0
        %560 = vmatprep.subr.mxu0 0.0
        %561 = vmatpush1.msra.mxu0 0.0
        %562 = vmatprep.subr.mxu0 0.0
        %563 = vmatpush1.msra.mxu0 0.0
        %564 = vmatprep.subr.mxu0 0.0
        %565 = vmatpush1.msra.mxu0 0.0
        %566 = vmatprep.subr.mxu0 0.0
        %567 = vmatpush1.msra.mxu0 0.0
        %568 = vmatprep.subr.mxu0 0.0
        %569 = vmatpush1.msra.mxu0 0.0
        %570 = vmatprep.subr.mxu0 0.0
        %571 = vmatpush1.msra.mxu0 0.0
        %572 = vmatprep.subr.mxu0 0.0
        %573 = vmatpush1.msra.mxu0 0.0
        %574 = vmatprep.subr.mxu0 0.0
        %575 = vmatpush1.msra.mxu0 0.0
        %576 = vmatprep.subr.mxu0 0.0
        %577 = vmatpush1.msra.mxu0 0.0
        %578 = vmatprep.mubr.f32.mxu0 0.0
        %579 = vmatmul.mubr.f32.gmra.mrb[0].mxu0 %v434
        %v580 = vpop.f32.mrb[0].mxu0
        %v581 = vadd.f32 0.0, %v580
        %v582 = vpop.f32.mrb[0].mxu0
        %583 = vdwg.mxu0
        %v585 = vsel %vm432, %v417, 0
        %v587 = vsel %vm436, %v415, 0
        %v589 = vsel %vm436, %v422, 0
        %v591 = vsel %vm436, %v416, 0
        %593 = vmatprep.subr.mxu0 %v589
        %594 = vmatpush1.msra.mxu0 %v587
        %595 = vmatprep.subr.mxu0 0.0
        %596 = vmatpush1.msra.mxu0 0.0
        %597 = vmatprep.subr.mxu0 0.0
        %598 = vmatpush1.msra.mxu0 0.0
        %599 = vmatprep.subr.mxu0 0.0
        %600 = vmatpush1.msra.mxu0 0.0
        %601 = vmatprep.subr.mxu0 0.0
        %602 = vmatpush1.msra.mxu0 0.0
        %603 = vmatprep.subr.mxu0 0.0
        %604 = vmatpush1.msra.mxu0 0.0
        %605 = vmatprep.subr.mxu0 0.0
        %606 = vmatpush1.msra.mxu0 0.0
        %607 = vmatprep.subr.mxu0 0.0
        %608 = vmatpush1.msra.mxu0 0.0
        %609 = vmatprep.subr.mxu0 0.0
        %610 = vmatpush1.msra.mxu0 0.0
        %611 = vmatprep.subr.mxu0 0.0
        %612 = vmatpush1.msra.mxu0 0.0
        %613 = vmatprep.subr.mxu0 0.0
        %614 = vmatpush1.msra.mxu0 0.0
        %615 = vmatprep.subr.mxu0 0.0
        %616 = vmatpush1.msra.mxu0 0.0
        %617 = vmatprep.subr.mxu0 0.0
        %618 = vmatpush1.msra.mxu0 0.0
        %619 = vmatprep.subr.mxu0 0.0
        %620 = vmatpush1.msra.mxu0 0.0
        %621 = vmatprep.subr.mxu0 0.0
        %622 = vmatpush1.msra.mxu0 0.0
        %623 = vmatprep.subr.mxu0 0.0
        %624 = vmatpush1.msra.mxu0 0.0
        %625 = vmatprep.subr.mxu0 0.0
        %626 = vmatpush1.msra.mxu0 0.0
        %627 = vmatprep.subr.mxu0 0.0
        %628 = vmatpush1.msra.mxu0 0.0
        %629 = vmatprep.subr.mxu0 0.0
        %630 = vmatpush1.msra.mxu0 0.0
        %631 = vmatprep.subr.mxu0 0.0
        %632 = vmatpush1.msra.mxu0 0.0
        %633 = vmatprep.subr.mxu0 0.0
        %634 = vmatpush1.msra.mxu0 0.0
        %635 = vmatprep.subr.mxu0 0.0
        %636 = vmatpush1.msra.mxu0 0.0
        %637 = vmatprep.subr.mxu0 0.0
        %638 = vmatpush1.msra.mxu0 0.0
        %639 = vmatprep.subr.mxu0 0.0
        %640 = vmatpush1.msra.mxu0 0.0
        %641 = vmatprep.subr.mxu0 0.0
        %642 = vmatpush1.msra.mxu0 0.0
        %643 = vmatprep.subr.mxu0 0.0
        %644 = vmatpush1.msra.mxu0 0.0
        %645 = vmatprep.subr.mxu0 0.0
        %646 = vmatpush1.msra.mxu0 0.0
        %647 = vmatprep.subr.mxu0 0.0
        %648 = vmatpush1.msra.mxu0 0.0
        %649 = vmatprep.subr.mxu0 0.0
        %650 = vmatpush1.msra.mxu0 0.0
        %651 = vmatprep.subr.mxu0 0.0
        %652 = vmatpush1.msra.mxu0 0.0
        %653 = vmatprep.subr.mxu0 0.0
        %654 = vmatpush1.msra.mxu0 0.0
        %655 = vmatprep.subr.mxu0 0.0
        %656 = vmatpush1.msra.mxu0 0.0
        %657 = vmatprep.mubr.f32.mxu0 0.0
        %658 = vmatmul.mubr.f32.gmra.mrb[0].mxu0 %v585
        %v659 = vpop.f32.mrb[0].mxu0
        %v660 = vadd.f32 %v510, %v659
        %v661 = vpop.f32.mrb[0].mxu0
        %v662 = vadd.f32 %v512, %v661
        %663 = vdwg.mxu0
        %664 = vmatprep.subr.mxu0 0.0
        %665 = vmatpush1.msra.mxu0 %v591
        %666 = vmatprep.subr.mxu0 0.0
        %667 = vmatpush1.msra.mxu0 0.0
        %668 = vmatprep.subr.mxu0 0.0
        %669 = vmatpush1.msra.mxu0 0.0
        %670 = vmatprep.subr.mxu0 0.0
        %671 = vmatpush1.msra.mxu0 0.0
        %672 = vmatprep.subr.mxu0 0.0
        %673 = vmatpush1.msra.mxu0 0.0
        %674 = vmatprep.subr.mxu0 0.0
        %675 = vmatpush1.msra.mxu0 0.0
        %676 = vmatprep.subr.mxu0 0.0
        %677 = vmatpush1.msra.mxu0 0.0
        %678 = vmatprep.subr.mxu0 0.0
        %679 = vmatpush1.msra.mxu0 0.0
        %680 = vmatprep.subr.mxu0 0.0
        %681 = vmatpush1.msra.mxu0 0.0
        %682 = vmatprep.subr.mxu0 0.0
        %683 = vmatpush1.msra.mxu0 0.0
        %684 = vmatprep.subr.mxu0 0.0
        %685 = vmatpush1.msra.mxu0 0.0
        %686 = vmatprep.subr.mxu0 0.0
        %687 = vmatpush1.msra.mxu0 0.0
        %688 = vmatprep.subr.mxu0 0.0
        %689 = vmatpush1.msra.mxu0 0.0
        %690 = vmatprep.subr.mxu0 0.0
        %691 = vmatpush1.msra.mxu0 0.0
        %692 = vmatprep.subr.mxu0 0.0
        %693 = vmatpush1.msra.mxu0 0.0
        %694 = vmatprep.subr.mxu0 0.0
        %695 = vmatpush1.msra.mxu0 0.0
        %696 = vmatprep.subr.mxu0 0.0
        %697 = vmatpush1.msra.mxu0 0.0
        %698 = vmatprep.subr.mxu0 0.0
        %699 = vmatpush1.msra.mxu0 0.0
        %700 = vmatprep.subr.mxu0 0.0
        %701 = vmatpush1.msra.mxu0 0.0
        %702 = vmatprep.subr.mxu0 0.0
        %703 = vmatpush1.msra.mxu0 0.0
        %704 = vmatprep.subr.mxu0 0.0
        %705 = vmatpush1.msra.mxu0 0.0
        %706 = vmatprep.subr.mxu0 0.0
        %707 = vmatpush1.msra.mxu0 0.0
        %708 = vmatprep.subr.mxu0 0.0
        %709 = vmatpush1.msra.mxu0 0.0
        %710 = vmatprep.subr.mxu0 0.0
        %711 = vmatpush1.msra.mxu0 0.0
        %712 = vmatprep.subr.mxu0 0.0
        %713 = vmatpush1.msra.mxu0 0.0
        %714 = vmatprep.subr.mxu0 0.0
        %715 = vmatpush1.msra.mxu0 0.0
        %716 = vmatprep.subr.mxu0 0.0
        %717 = vmatpush1.msra.mxu0 0.0
        %718 = vmatprep.subr.mxu0 0.0
        %719 = vmatpush1.msra.mxu0 0.0
        %720 = vmatprep.subr.mxu0 0.0
        %721 = vmatpush1.msra.mxu0 0.0
        %722 = vmatprep.subr.mxu0 0.0
        %723 = vmatpush1.msra.mxu0 0.0
        %724 = vmatprep.subr.mxu0 0.0
        %725 = vmatpush1.msra.mxu0 0.0
        %726 = vmatprep.subr.mxu0 0.0
        %727 = vmatpush1.msra.mxu0 0.0
        %728 = vmatprep.mubr.f32.mxu0 0.0
        %729 = vmatmul.mubr.f32.gmra.mrb[0].mxu0 %v585
        %v730 = vpop.f32.mrb[0].mxu0
        %v731 = vadd.f32 %v581, %v730
        %v732 = vpop.f32.mrb[0].mxu0
        %733 = vdwg.mxu0
        %v734 = vld [vmem:[%s344] sm:$0xff]
        %v735 = vld [vmem:[%s344 + $0x8] sm:$0xf]
        %s736 = scalar_lea.vmem [#allocation8], 16
        %v737 = vld [vmem:[%s736] sm:$0xff]
        %v740 = vcombine.high %v734, %v734
        %741 = vrot.lane.b32.xlu0 %v734, 126
        %v742 = vpop.permute.xlu0 %741
        %743 = vrot.lane.b32.xlu0 %v740, 126
        %v744 = vpop.permute.xlu0 %743
        %745 = vrot.lane.b32.xlu0 %v735, 126
        %v746 = vpop.permute.xlu0 %745
        %vm747 = vcmask 1031168
        %v748 = vsel %vm747, %v742, %v744
        %v749 = vsel %vm747, %v744, %v746
        %v751 = vsel %vm432, %v737, 0
        %v753 = vsel %vm436, %v748, 0
        %v755 = vsel %vm436, %v749, 0
        %v757 = vsel %vm436, %v746, 0
        %759 = vmatprep.subr.mxu0 %v755
        %760 = vmatpush1.msra.mxu0 %v753
        %761 = vmatprep.subr.mxu0 0.0
        %762 = vmatpush1.msra.mxu0 0.0
        %763 = vmatprep.subr.mxu0 0.0
        %764 = vmatpush1.msra.mxu0 0.0
        %765 = vmatprep.subr.mxu0 0.0
        %766 = vmatpush1.msra.mxu0 0.0
        %767 = vmatprep.subr.mxu0 0.0
        %768 = vmatpush1.msra.mxu0 0.0
        %769 = vmatprep.subr.mxu0 0.0
        %770 = vmatpush1.msra.mxu0 0.0
        %771 = vmatprep.subr.mxu0 0.0
        %772 = vmatpush1.msra.mxu0 0.0
        %773 = vmatprep.subr.mxu0 0.0
        %774 = vmatpush1.msra.mxu0 0.0
        %775 = vmatprep.subr.mxu0 0.0
        %776 = vmatpush1.msra.mxu0 0.0
        %777 = vmatprep.subr.mxu0 0.0
        %778 = vmatpush1.msra.mxu0 0.0
        %779 = vmatprep.subr.mxu0 0.0
        %780 = vmatpush1.msra.mxu0 0.0
        %781 = vmatprep.subr.mxu0 0.0
        %782 = vmatpush1.msra.mxu0 0.0
        %783 = vmatprep.subr.mxu0 0.0
        %784 = vmatpush1.msra.mxu0 0.0
        %785 = vmatprep.subr.mxu0 0.0
        %786 = vmatpush1.msra.mxu0 0.0
        %787 = vmatprep.subr.mxu0 0.0
        %788 = vmatpush1.msra.mxu0 0.0
        %789 = vmatprep.subr.mxu0 0.0
        %790 = vmatpush1.msra.mxu0 0.0
        %791 = vmatprep.subr.mxu0 0.0
        %792 = vmatpush1.msra.mxu0 0.0
        %793 = vmatprep.subr.mxu0 0.0
        %794 = vmatpush1.msra.mxu0 0.0
        %795 = vmatprep.subr.mxu0 0.0
        %796 = vmatpush1.msra.mxu0 0.0
        %797 = vmatprep.subr.mxu0 0.0
        %798 = vmatpush1.msra.mxu0 0.0
        %799 = vmatprep.subr.mxu0 0.0
        %800 = vmatpush1.msra.mxu0 0.0
        %801 = vmatprep.subr.mxu0 0.0
        %802 = vmatpush1.msra.mxu0 0.0
        %803 = vmatprep.subr.mxu0 0.0
        %804 = vmatpush1.msra.mxu0 0.0
        %805 = vmatprep.subr.mxu0 0.0
        %806 = vmatpush1.msra.mxu0 0.0
        %807 = vmatprep.subr.mxu0 0.0
        %808 = vmatpush1.msra.mxu0 0.0
        %809 = vmatprep.subr.mxu0 0.0
        %810 = vmatpush1.msra.mxu0 0.0
        %811 = vmatprep.subr.mxu0 0.0
        %812 = vmatpush1.msra.mxu0 0.0
        %813 = vmatprep.subr.mxu0 0.0
        %814 = vmatpush1.msra.mxu0 0.0
        %815 = vmatprep.subr.mxu0 0.0
        %816 = vmatpush1.msra.mxu0 0.0
        %817 = vmatprep.subr.mxu0 0.0
        %818 = vmatpush1.msra.mxu0 0.0
        %819 = vmatprep.subr.mxu0 0.0
        %820 = vmatpush1.msra.mxu0 0.0
        %821 = vmatprep.subr.mxu0 0.0
        %822 = vmatpush1.msra.mxu0 0.0
        %823 = vmatprep.mubr.f32.mxu0 0.0
        %824 = vmatmul.mubr.f32.gmra.mrb[0].mxu0 %v751
        %v825 = vpop.f32.mrb[0].mxu0
        %v826 = vadd.f32 0.0, %v825
        %v827 = vpop.f32.mrb[0].mxu0
        %v828 = vadd.f32 0.0, %v827
        %829 = vdwg.mxu0
        %830 = vmatprep.subr.mxu0 0.0
        %831 = vmatpush1.msra.mxu0 %v757
        %832 = vmatprep.subr.mxu0 0.0
        %833 = vmatpush1.msra.mxu0 0.0
        %834 = vmatprep.subr.mxu0 0.0
        %835 = vmatpush1.msra.mxu0 0.0
        %836 = vmatprep.subr.mxu0 0.0
        %837 = vmatpush1.msra.mxu0 0.0
        %838 = vmatprep.subr.mxu0 0.0
        %839 = vmatpush1.msra.mxu0 0.0
        %840 = vmatprep.subr.mxu0 0.0
        %841 = vmatpush1.msra.mxu0 0.0
        %842 = vmatprep.subr.mxu0 0.0
        %843 = vmatpush1.msra.mxu0 0.0
        %844 = vmatprep.subr.mxu0 0.0
        %845 = vmatpush1.msra.mxu0 0.0
        %846 = vmatprep.subr.mxu0 0.0
        %847 = vmatpush1.msra.mxu0 0.0
        %848 = vmatprep.subr.mxu0 0.0
        %849 = vmatpush1.msra.mxu0 0.0
        %850 = vmatprep.subr.mxu0 0.0
        %851 = vmatpush1.msra.mxu0 0.0
        %852 = vmatprep.subr.mxu0 0.0
        %853 = vmatpush1.msra.mxu0 0.0
        %854 = vmatprep.subr.mxu0 0.0
        %855 = vmatpush1.msra.mxu0 0.0
        %856 = vmatprep.subr.mxu0 0.0
        %857 = vmatpush1.msra.mxu0 0.0
        %858 = vmatprep.subr.mxu0 0.0
        %859 = vmatpush1.msra.mxu0 0.0
        %860 = vmatprep.subr.mxu0 0.0
        %861 = vmatpush1.msra.mxu0 0.0
        %862 = vmatprep.subr.mxu0 0.0
        %863 = vmatpush1.msra.mxu0 0.0
        %864 = vmatprep.subr.mxu0 0.0
        %865 = vmatpush1.msra.mxu0 0.0
        %866 = vmatprep.subr.mxu0 0.0
        %867 = vmatpush1.msra.mxu0 0.0
        %868 = vmatprep.subr.mxu0 0.0
        %869 = vmatpush1.msra.mxu0 0.0
        %870 = vmatprep.subr.mxu0 0.0
        %871 = vmatpush1.msra.mxu0 0.0
        %872 = vmatprep.subr.mxu0 0.0
        %873 = vmatpush1.msra.mxu0 0.0
        %874 = vmatprep.subr.mxu0 0.0
        %875 = vmatpush1.msra.mxu0 0.0
        %876 = vmatprep.subr.mxu0 0.0
        %877 = vmatpush1.msra.mxu0 0.0
        %878 = vmatprep.subr.mxu0 0.0
        %879 = vmatpush1.msra.mxu0 0.0
        %880 = vmatprep.subr.mxu0 0.0
        %881 = vmatpush1.msra.mxu0 0.0
        %882 = vmatprep.subr.mxu0 0.0
        %883 = vmatpush1.msra.mxu0 0.0
        %884 = vmatprep.subr.mxu0 0.0
        %885 = vmatpush1.msra.mxu0 0.0
        %886 = vmatprep.subr.mxu0 0.0
        %887 = vmatpush1.msra.mxu0 0.0
        %888 = vmatprep.subr.mxu0 0.0
        %889 = vmatpush1.msra.mxu0 0.0
        %890 = vmatprep.subr.mxu0 0.0
        %891 = vmatpush1.msra.mxu0 0.0
        %892 = vmatprep.subr.mxu0 0.0
        %893 = vmatpush1.msra.mxu0 0.0
        %894 = vmatprep.mubr.f32.mxu0 0.0
        %895 = vmatmul.mubr.f32.gmra.mrb[0].mxu0 %v751
        %v896 = vpop.f32.mrb[0].mxu0
        %v897 = vadd.f32 0.0, %v896
        %v898 = vpop.f32.mrb[0].mxu0
        %899 = vdwg.mxu0
        %v900 = vadd.f32 %v660, %v826
        %v901 = vadd.f32 %v662, %v828
        %v902 = vadd.f32 %v731, %v897
        %v903 = vld [vmem:[%s344] sm:$0xff]
        %v904 = vld [vmem:[%s344 + $0x8] sm:$0xf]
        %s905 = scalar_lea.vmem [#allocation8], 24
        %v906 = vld [vmem:[%s905] sm:$0xff]
        %v909 = vcombine.high %v903, %v903
        %910 = vrot.lane.b32.xlu0 %v903, 108
        %v911 = vpop.permute.xlu0 %910
        %912 = vrot.lane.b32.xlu0 %v909, 108
        %v913 = vpop.permute.xlu0 %912
        %914 = vrot.lane.b32.xlu0 %v904, 108
        %v915 = vpop.permute.xlu0 %914
        %vm916 = vcmask 883712
        %v917 = vsel %vm916, %v911, %v913
        %v918 = vsel %vm916, %v913, %v915
        %v920 = vsel %vm432, %v906, 0
        %v922 = vsel %vm436, %v917, 0
        %v924 = vsel %vm436, %v918, 0
        %v926 = vsel %vm436, %v915, 0
        %928 = vmatprep.subr.mxu0 %v924
        %929 = vmatpush1.msra.mxu0 %v922
        %930 = vmatprep.subr.mxu0 0.0
        %931 = vmatpush1.msra.mxu0 0.0
        %932 = vmatprep.subr.mxu0 0.0
        %933 = vmatpush1.msra.mxu0 0.0
        %934 = vmatprep.subr.mxu0 0.0
        %935 = vmatpush1.msra.mxu0 0.0
        %936 = vmatprep.subr.mxu0 0.0
        %937 = vmatpush1.msra.mxu0 0.0
        %938 = vmatprep.subr.mxu0 0.0
        %939 = vmatpush1.msra.mxu0 0.0
        %940 = vmatprep.subr.mxu0 0.0
        %941 = vmatpush1.msra.mxu0 0.0
        %942 = vmatprep.subr.mxu0 0.0
        %943 = vmatpush1.msra.mxu0 0.0
        %944 = vmatprep.subr.mxu0 0.0
        %945 = vmatpush1.msra.mxu0 0.0
        %946 = vmatprep.subr.mxu0 0.0
        %947 = vmatpush1.msra.mxu0 0.0
        %948 = vmatprep.subr.mxu0 0.0
        %949 = vmatpush1.msra.mxu0 0.0
        %950 = vmatprep.subr.mxu0 0.0
        %951 = vmatpush1.msra.mxu0 0.0
        %952 = vmatprep.subr.mxu0 0.0
        %953 = vmatpush1.msra.mxu0 0.0
        %954 = vmatprep.subr.mxu0 0.0
        %955 = vmatpush1.msra.mxu0 0.0
        %956 = vmatprep.subr.mxu0 0.0
        %957 = vmatpush1.msra.mxu0 0.0
        %958 = vmatprep.subr.mxu0 0.0
        %959 = vmatpush1.msra.mxu0 0.0
        %960 = vmatprep.subr.mxu0 0.0
        %961 = vmatpush1.msra.mxu0 0.0
        %962 = vmatprep.subr.mxu0 0.0
        %963 = vmatpush1.msra.mxu0 0.0
        %964 = vmatprep.subr.mxu0 0.0
        %965 = vmatpush1.msra.mxu0 0.0
        %966 = vmatprep.subr.mxu0 0.0
        %967 = vmatpush1.msra.mxu0 0.0
        %968 = vmatprep.subr.mxu0 0.0
        %969 = vmatpush1.msra.mxu0 0.0
        %970 = vmatprep.subr.mxu0 0.0
        %971 = vmatpush1.msra.mxu0 0.0
        %972 = vmatprep.subr.mxu0 0.0
        %973 = vmatpush1.msra.mxu0 0.0
        %974 = vmatprep.subr.mxu0 0.0
        %975 = vmatpush1.msra.mxu0 0.0
        %976 = vmatprep.subr.mxu0 0.0
        %977 = vmatpush1.msra.mxu0 0.0
        %978 = vmatprep.subr.mxu0 0.0
        %979 = vmatpush1.msra.mxu0 0.0
        %980 = vmatprep.subr.mxu0 0.0
        %981 = vmatpush1.msra.mxu0 0.0
        %982 = vmatprep.subr.mxu0 0.0
        %983 = vmatpush1.msra.mxu0 0.0
        %984 = vmatprep.subr.mxu0 0.0
        %985 = vmatpush1.msra.mxu0 0.0
        %986 = vmatprep.subr.mxu0 0.0
        %987 = vmatpush1.msra.mxu0 0.0
        %988 = vmatprep.subr.mxu0 0.0
        %989 = vmatpush1.msra.mxu0 0.0
        %990 = vmatprep.subr.mxu0 0.0
        %991 = vmatpush1.msra.mxu0 0.0
        %992 = vmatprep.mubr.f32.mxu0 0.0
        %993 = vmatmul.mubr.f32.gmra.mrb[0].mxu0 %v920
        %v994 = vpop.f32.mrb[0].mxu0
        %v995 = vadd.f32 0.0, %v994
        %v996 = vpop.f32.mrb[0].mxu0
        %v997 = vadd.f32 0.0, %v996
        %998 = vdwg.mxu0
        %999 = vmatprep.subr.mxu0 0.0
        %1000 = vmatpush1.msra.mxu0 %v926
        %1001 = vmatprep.subr.mxu0 0.0
        %1002 = vmatpush1.msra.mxu0 0.0
        %1003 = vmatprep.subr.mxu0 0.0
        %1004 = vmatpush1.msra.mxu0 0.0
        %1005 = vmatprep.subr.mxu0 0.0
        %1006 = vmatpush1.msra.mxu0 0.0
        %1007 = vmatprep.subr.mxu0 0.0
        %1008 = vmatpush1.msra.mxu0 0.0
        %1009 = vmatprep.subr.mxu0 0.0
        %1010 = vmatpush1.msra.mxu0 0.0
        %1011 = vmatprep.subr.mxu0 0.0
        %1012 = vmatpush1.msra.mxu0 0.0
        %1013 = vmatprep.subr.mxu0 0.0
        %1014 = vmatpush1.msra.mxu0 0.0
        %1015 = vmatprep.subr.mxu0 0.0
        %1016 = vmatpush1.msra.mxu0 0.0
        %1017 = vmatprep.subr.mxu0 0.0
        %1018 = vmatpush1.msra.mxu0 0.0
        %1019 = vmatprep.subr.mxu0 0.0
        %1020 = vmatpush1.msra.mxu0 0.0
        %1021 = vmatprep.subr.mxu0 0.0
        %1022 = vmatpush1.msra.mxu0 0.0
        %1023 = vmatprep.subr.mxu0 0.0
        %1024 = vmatpush1.msra.mxu0 0.0
        %1025 = vmatprep.subr.mxu0 0.0
        %1026 = vmatpush1.msra.mxu0 0.0
        %1027 = vmatprep.subr.mxu0 0.0
        %1028 = vmatpush1.msra.mxu0 0.0
        %1029 = vmatprep.subr.mxu0 0.0
        %1030 = vmatpush1.msra.mxu0 0.0
        %1031 = vmatprep.subr.mxu0 0.0
        %1032 = vmatpush1.msra.mxu0 0.0
        %1033 = vmatprep.subr.mxu0 0.0
        %1034 = vmatpush1.msra.mxu0 0.0
        %1035 = vmatprep.subr.mxu0 0.0
        %1036 = vmatpush1.msra.mxu0 0.0
        %1037 = vmatprep.subr.mxu0 0.0
        %1038 = vmatpush1.msra.mxu0 0.0
        %1039 = vmatprep.subr.mxu0 0.0
        %1040 = vmatpush1.msra.mxu0 0.0
        %1041 = vmatprep.subr.mxu0 0.0
        %1042 = vmatpush1.msra.mxu0 0.0
        %1043 = vmatprep.subr.mxu0 0.0
        %1044 = vmatpush1.msra.mxu0 0.0
        %1045 = vmatprep.subr.mxu0 0.0
        %1046 = vmatpush1.msra.mxu0 0.0
        %1047 = vmatprep.subr.mxu0 0.0
        %1048 = vmatpush1.msra.mxu0 0.0
        %1049 = vmatprep.subr.mxu0 0.0
        %1050 = vmatpush1.msra.mxu0 0.0
        %1051 = vmatprep.subr.mxu0 0.0
        %1052 = vmatpush1.msra.mxu0 0.0
        %1053 = vmatprep.subr.mxu0 0.0
        %1054 = vmatpush1.msra.mxu0 0.0
        %1055 = vmatprep.subr.mxu0 0.0
        %1056 = vmatpush1.msra.mxu0 0.0
        %1057 = vmatprep.subr.mxu0 0.0
        %1058 = vmatpush1.msra.mxu0 0.0
        %1059 = vmatprep.subr.mxu0 0.0
        %1060 = vmatpush1.msra.mxu0 0.0
        %1061 = vmatprep.subr.mxu0 0.0
        %1062 = vmatpush1.msra.mxu0 0.0
        %1063 = vmatprep.mubr.f32.mxu0 0.0
        %1064 = vmatmul.mubr.f32.gmra.mrb[0].mxu0 %v920
        %v1065 = vpop.f32.mrb[0].mxu0
        %v1066 = vadd.f32 0.0, %v1065
        %v1067 = vpop.f32.mrb[0].mxu0
        %1068 = vdwg.mxu0
        %v1069 = vadd.f32 %v900, %v995
        %v1070 = vadd.f32 %v901, %v997
        %v1071 = vadd.f32 %v902, %v1066
        %v1072 = vld [vmem:[%s344] sm:$0xff]
        %v1073 = vld [vmem:[%s344 + $0x8] sm:$0xf]
        %s1074 = scalar_lea.vmem [#allocation8], 32
        %v1075 = vld [vmem:[%s1074] sm:$0xff]
        %v1078 = vcombine.high %v1072, %v1072
        %1079 = vrot.lane.b32.xlu0 %v1072, 107
        %v1080 = vpop.permute.xlu0 %1079
        %1081 = vrot.lane.b32.xlu0 %v1078, 107
        %v1082 = vpop.permute.xlu0 %1081
        %1083 = vrot.lane.b32.xlu0 %v1073, 107
        %v1084 = vpop.permute.xlu0 %1083
        %vm1085 = vcmask 875520
        %v1086 = vsel %vm1085, %v1080, %v1082
        %v1087 = vsel %vm1085, %v1082, %v1084
        %v1089 = vsel %vm432, %v1075, 0
        %v1091 = vsel %vm436, %v1086, 0
        %v1093 = vsel %vm436, %v1087, 0
        %v1095 = vsel %vm436, %v1084, 0
        %1097 = vmatprep.subr.mxu0 %v1093
        %1098 = vmatpush1.msra.mxu0 %v1091
        %1099 = vmatprep.subr.mxu0 0.0
        %1100 = vmatpush1.msra.mxu0 0.0
        %1101 = vmatprep.subr.mxu0 0.0
        %1102 = vmatpush1.msra.mxu0 0.0
        %1103 = vmatprep.subr.mxu0 0.0
        %1104 = vmatpush1.msra.mxu0 0.0
        %1105 = vmatprep.subr.mxu0 0.0
        %1106 = vmatpush1.msra.mxu0 0.0
        %1107 = vmatprep.subr.mxu0 0.0
        %1108 = vmatpush1.msra.mxu0 0.0
        %1109 = vmatprep.subr.mxu0 0.0
        %1110 = vmatpush1.msra.mxu0 0.0
        %1111 = vmatprep.subr.mxu0 0.0
        %1112 = vmatpush1.msra.mxu0 0.0
        %1113 = vmatprep.subr.mxu0 0.0
        %1114 = vmatpush1.msra.mxu0 0.0
        %1115 = vmatprep.subr.mxu0 0.0
        %1116 = vmatpush1.msra.mxu0 0.0
        %1117 = vmatprep.subr.mxu0 0.0
        %1118 = vmatpush1.msra.mxu0 0.0
        %1119 = vmatprep.subr.mxu0 0.0
        %1120 = vmatpush1.msra.mxu0 0.0
        %1121 = vmatprep.subr.mxu0 0.0
        %1122 = vmatpush1.msra.mxu0 0.0
        %1123 = vmatprep.subr.mxu0 0.0
        %1124 = vmatpush1.msra.mxu0 0.0
        %1125 = vmatprep.subr.mxu0 0.0
        %1126 = vmatpush1.msra.mxu0 0.0
        %1127 = vmatprep.subr.mxu0 0.0
        %1128 = vmatpush1.msra.mxu0 0.0
        %1129 = vmatprep.subr.mxu0 0.0
        %1130 = vmatpush1.msra.mxu0 0.0
        %1131 = vmatprep.subr.mxu0 0.0
        %1132 = vmatpush1.msra.mxu0 0.0
        %1133 = vmatprep.subr.mxu0 0.0
        %1134 = vmatpush1.msra.mxu0 0.0
        %1135 = vmatprep.subr.mxu0 0.0
        %1136 = vmatpush1.msra.mxu0 0.0
        %1137 = vmatprep.subr.mxu0 0.0
        %1138 = vmatpush1.msra.mxu0 0.0
        %1139 = vmatprep.subr.mxu0 0.0
        %1140 = vmatpush1.msra.mxu0 0.0
        %1141 = vmatprep.subr.mxu0 0.0
        %1142 = vmatpush1.msra.mxu0 0.0
        %1143 = vmatprep.subr.mxu0 0.0
        %1144 = vmatpush1.msra.mxu0 0.0
        %1145 = vmatprep.subr.mxu0 0.0
        %1146 = vmatpush1.msra.mxu0 0.0
        %1147 = vmatprep.subr.mxu0 0.0
        %1148 = vmatpush1.msra.mxu0 0.0
        %1149 = vmatprep.subr.mxu0 0.0
        %1150 = vmatpush1.msra.mxu0 0.0
        %1151 = vmatprep.subr.mxu0 0.0
        %1152 = vmatpush1.msra.mxu0 0.0
        %1153 = vmatprep.subr.mxu0 0.0
        %1154 = vmatpush1.msra.mxu0 0.0
        %1155 = vmatprep.subr.mxu0 0.0
        %1156 = vmatpush1.msra.mxu0 0.0
        %1157 = vmatprep.subr.mxu0 0.0
        %1158 = vmatpush1.msra.mxu0 0.0
        %1159 = vmatprep.subr.mxu0 0.0
        %1160 = vmatpush1.msra.mxu0 0.0
        %1161 = vmatprep.mubr.f32.mxu0 0.0
        %1162 = vmatmul.mubr.f32.gmra.mrb[0].mxu0 %v1089
        %v1163 = vpop.f32.mrb[0].mxu0
        %v1164 = vadd.f32 0.0, %v1163
        %v1165 = vpop.f32.mrb[0].mxu0
        %v1166 = vadd.f32 0.0, %v1165
        %1167 = vdwg.mxu0
        %1168 = vmatprep.subr.mxu0 0.0
        %1169 = vmatpush1.msra.mxu0 %v1095
        %1170 = vmatprep.subr.mxu0 0.0
        %1171 = vmatpush1.msra.mxu0 0.0
        %1172 = vmatprep.subr.mxu0 0.0
        %1173 = vmatpush1.msra.mxu0 0.0
        %1174 = vmatprep.subr.mxu0 0.0
        %1175 = vmatpush1.msra.mxu0 0.0
        %1176 = vmatprep.subr.mxu0 0.0
        %1177 = vmatpush1.msra.mxu0 0.0
        %1178 = vmatprep.subr.mxu0 0.0
        %1179 = vmatpush1.msra.mxu0 0.0
        %1180 = vmatprep.subr.mxu0 0.0
        %1181 = vmatpush1.msra.mxu0 0.0
        %1182 = vmatprep.subr.mxu0 0.0
        %1183 = vmatpush1.msra.mxu0 0.0
        %1184 = vmatprep.subr.mxu0 0.0
        %1185 = vmatpush1.msra.mxu0 0.0
        %1186 = vmatprep.subr.mxu0 0.0
        %1187 = vmatpush1.msra.mxu0 0.0
        %1188 = vmatprep.subr.mxu0 0.0
        %1189 = vmatpush1.msra.mxu0 0.0
        %1190 = vmatprep.subr.mxu0 0.0
        %1191 = vmatpush1.msra.mxu0 0.0
        %1192 = vmatprep.subr.mxu0 0.0
        %1193 = vmatpush1.msra.mxu0 0.0
        %1194 = vmatprep.subr.mxu0 0.0
        %1195 = vmatpush1.msra.mxu0 0.0
        %1196 = vmatprep.subr.mxu0 0.0
        %1197 = vmatpush1.msra.mxu0 0.0
        %1198 = vmatprep.subr.mxu0 0.0
        %1199 = vmatpush1.msra.mxu0 0.0
        %1200 = vmatprep.subr.mxu0 0.0
        %1201 = vmatpush1.msra.mxu0 0.0
        %1202 = vmatprep.subr.mxu0 0.0
        %1203 = vmatpush1.msra.mxu0 0.0
        %1204 = vmatprep.subr.mxu0 0.0
        %1205 = vmatpush1.msra.mxu0 0.0
        %1206 = vmatprep.subr.mxu0 0.0
        %1207 = vmatpush1.msra.mxu0 0.0
        %1208 = vmatprep.subr.mxu0 0.0
        %1209 = vmatpush1.msra.mxu0 0.0
        %1210 = vmatprep.subr.mxu0 0.0
        %1211 = vmatpush1.msra.mxu0 0.0
        %1212 = vmatprep.subr.mxu0 0.0
        %1213 = vmatpush1.msra.mxu0 0.0
        %1214 = vmatprep.subr.mxu0 0.0
        %1215 = vmatpush1.msra.mxu0 0.0
        %1216 = vmatprep.subr.mxu0 0.0
        %1217 = vmatpush1.msra.mxu0 0.0
        %1218 = vmatprep.subr.mxu0 0.0
        %1219 = vmatpush1.msra.mxu0 0.0
        %1220 = vmatprep.subr.mxu0 0.0
        %1221 = vmatpush1.msra.mxu0 0.0
        %1222 = vmatprep.subr.mxu0 0.0
        %1223 = vmatpush1.msra.mxu0 0.0
        %1224 = vmatprep.subr.mxu0 0.0
        %1225 = vmatpush1.msra.mxu0 0.0
        %1226 = vmatprep.subr.mxu0 0.0
        %1227 = vmatpush1.msra.mxu0 0.0
        %1228 = vmatprep.subr.mxu0 0.0
        %1229 = vmatpush1.msra.mxu0 0.0
        %1230 = vmatprep.subr.mxu0 0.0
        %1231 = vmatpush1.msra.mxu0 0.0
        %1232 = vmatprep.mubr.f32.mxu0 0.0
        %1233 = vmatmul.mubr.f32.gmra.mrb[0].mxu0 %v1089
        %v1234 = vpop.f32.mrb[0].mxu0
        %v1235 = vadd.f32 0.0, %v1234
        %v1236 = vpop.f32.mrb[0].mxu0
        %1237 = vdwg.mxu0
        %v1238 = vadd.f32 %v1069, %v1164
        %v1239 = vadd.f32 %v1070, %v1166
        %v1240 = vadd.f32 %v1071, %v1235
        %v1241 = vld [vmem:[%s344] sm:$0xff]
        %v1242 = vld [vmem:[%s344 + $0x8] sm:$0xf]
        %s1243 = scalar_lea.vmem [#allocation8], 40
        %v1244 = vld [vmem:[%s1243] sm:$0xff]
        %v1247 = vcombine.high %v1241, %v1241
        %1248 = vrot.lane.b32.xlu0 %v1241, 106
        %v1249 = vpop.permute.xlu0 %1248
        %1250 = vrot.lane.b32.xlu0 %v1247, 106
        %v1251 = vpop.permute.xlu0 %1250
        %1252 = vrot.lane.b32.xlu0 %v1242, 106
        %v1253 = vpop.permute.xlu0 %1252
        %vm1254 = vcmask 867328
        %v1255 = vsel %vm1254, %v1249, %v1251
        %v1256 = vsel %vm1254, %v1251, %v1253
        %v1258 = vsel %vm432, %v1244, 0
        %v1260 = vsel %vm436, %v1255, 0
        %v1262 = vsel %vm436, %v1256, 0
        %v1264 = vsel %vm436, %v1253, 0
        %1266 = vmatprep.subr.mxu0 %v1262
        %1267 = vmatpush1.msra.mxu0 %v1260
        %1268 = vmatprep.subr.mxu0 0.0
        %1269 = vmatpush1.msra.mxu0 0.0
        %1270 = vmatprep.subr.mxu0 0.0
        %1271 = vmatpush1.msra.mxu0 0.0
        %1272 = vmatprep.subr.mxu0 0.0
        %1273 = vmatpush1.msra.mxu0 0.0
        %1274 = vmatprep.subr.mxu0 0.0
        %1275 = vmatpush1.msra.mxu0 0.0
        %1276 = vmatprep.subr.mxu0 0.0
        %1277 = vmatpush1.msra.mxu0 0.0
        %1278 = vmatprep.subr.mxu0 0.0
        %1279 = vmatpush1.msra.mxu0 0.0
        %1280 = vmatprep.subr.mxu0 0.0
        %1281 = vmatpush1.msra.mxu0 0.0
        %1282 = vmatprep.subr.mxu0 0.0
        %1283 = vmatpush1.msra.mxu0 0.0
        %1284 = vmatprep.subr.mxu0 0.0
        %1285 = vmatpush1.msra.mxu0 0.0
        %1286 = vmatprep.subr.mxu0 0.0
        %1287 = vmatpush1.msra.mxu0 0.0
        %1288 = vmatprep.subr.mxu0 0.0
        %1289 = vmatpush1.msra.mxu0 0.0
        %1290 = vmatprep.subr.mxu0 0.0
        %1291 = vmatpush1.msra.mxu0 0.0
        %1292 = vmatprep.subr.mxu0 0.0
        %1293 = vmatpush1.msra.mxu0 0.0
        %1294 = vmatprep.subr.mxu0 0.0
        %1295 = vmatpush1.msra.mxu0 0.0
        %1296 = vmatprep.subr.mxu0 0.0
        %1297 = vmatpush1.msra.mxu0 0.0
        %1298 = vmatprep.subr.mxu0 0.0
        %1299 = vmatpush1.msra.mxu0 0.0
        %1300 = vmatprep.subr.mxu0 0.0
        %1301 = vmatpush1.msra.mxu0 0.0
        %1302 = vmatprep.subr.mxu0 0.0
        %1303 = vmatpush1.msra.mxu0 0.0
        %1304 = vmatprep.subr.mxu0 0.0
        %1305 = vmatpush1.msra.mxu0 0.0
        %1306 = vmatprep.subr.mxu0 0.0
        %1307 = vmatpush1.msra.mxu0 0.0
        %1308 = vmatprep.subr.mxu0 0.0
        %1309 = vmatpush1.msra.mxu0 0.0
        %1310 = vmatprep.subr.mxu0 0.0
        %1311 = vmatpush1.msra.mxu0 0.0
        %1312 = vmatprep.subr.mxu0 0.0
        %1313 = vmatpush1.msra.mxu0 0.0
        %1314 = vmatprep.subr.mxu0 0.0
        %1315 = vmatpush1.msra.mxu0 0.0
        %1316 = vmatprep.subr.mxu0 0.0
        %1317 = vmatpush1.msra.mxu0 0.0
        %1318 = vmatprep.subr.mxu0 0.0
        %1319 = vmatpush1.msra.mxu0 0.0
        %1320 = vmatprep.subr.mxu0 0.0
        %1321 = vmatpush1.msra.mxu0 0.0
        %1322 = vmatprep.subr.mxu0 0.0
        %1323 = vmatpush1.msra.mxu0 0.0
        %1324 = vmatprep.subr.mxu0 0.0
        %1325 = vmatpush1.msra.mxu0 0.0
        %1326 = vmatprep.subr.mxu0 0.0
        %1327 = vmatpush1.msra.mxu0 0.0
        %1328 = vmatprep.subr.mxu0 0.0
        %1329 = vmatpush1.msra.mxu0 0.0
        %1330 = vmatprep.mubr.f32.mxu0 0.0
        %1331 = vmatmul.mubr.f32.gmra.mrb[0].mxu0 %v1258
        %v1332 = vpop.f32.mrb[0].mxu0
        %v1333 = vadd.f32 0.0, %v1332
        %v1334 = vpop.f32.mrb[0].mxu0
        %v1335 = vadd.f32 0.0, %v1334
        %1336 = vdwg.mxu0
        %1337 = vmatprep.subr.mxu0 0.0
        %1338 = vmatpush1.msra.mxu0 %v1264
        %1339 = vmatprep.subr.mxu0 0.0
        %1340 = vmatpush1.msra.mxu0 0.0
        %1341 = vmatprep.subr.mxu0 0.0
        %1342 = vmatpush1.msra.mxu0 0.0
        %1343 = vmatprep.subr.mxu0 0.0
        %1344 = vmatpush1.msra.mxu0 0.0
        %1345 = vmatprep.subr.mxu0 0.0
        %1346 = vmatpush1.msra.mxu0 0.0
        %1347 = vmatprep.subr.mxu0 0.0
        %1348 = vmatpush1.msra.mxu0 0.0
        %1349 = vmatprep.subr.mxu0 0.0
        %1350 = vmatpush1.msra.mxu0 0.0
        %1351 = vmatprep.subr.mxu0 0.0
        %1352 = vmatpush1.msra.mxu0 0.0
        %1353 = vmatprep.subr.mxu0 0.0
        %1354 = vmatpush1.msra.mxu0 0.0
        %1355 = vmatprep.subr.mxu0 0.0
        %1356 = vmatpush1.msra.mxu0 0.0
        %1357 = vmatprep.subr.mxu0 0.0
        %1358 = vmatpush1.msra.mxu0 0.0
        %1359 = vmatprep.subr.mxu0 0.0
        %1360 = vmatpush1.msra.mxu0 0.0
        %1361 = vmatprep.subr.mxu0 0.0
        %1362 = vmatpush1.msra.mxu0 0.0
        %1363 = vmatprep.subr.mxu0 0.0
        %1364 = vmatpush1.msra.mxu0 0.0
        %1365 = vmatprep.subr.mxu0 0.0
        %1366 = vmatpush1.msra.mxu0 0.0
        %1367 = vmatprep.subr.mxu0 0.0
        %1368 = vmatpush1.msra.mxu0 0.0
        %1369 = vmatprep.subr.mxu0 0.0
        %1370 = vmatpush1.msra.mxu0 0.0
        %1371 = vmatprep.subr.mxu0 0.0
        %1372 = vmatpush1.msra.mxu0 0.0
        %1373 = vmatprep.subr.mxu0 0.0
        %1374 = vmatpush1.msra.mxu0 0.0
        %1375 = vmatprep.subr.mxu0 0.0
        %1376 = vmatpush1.msra.mxu0 0.0
        %1377 = vmatprep.subr.mxu0 0.0
        %1378 = vmatpush1.msra.mxu0 0.0
        %1379 = vmatprep.subr.mxu0 0.0
        %1380 = vmatpush1.msra.mxu0 0.0
        %1381 = vmatprep.subr.mxu0 0.0
        %1382 = vmatpush1.msra.mxu0 0.0
        %1383 = vmatprep.subr.mxu0 0.0
        %1384 = vmatpush1.msra.mxu0 0.0
        %1385 = vmatprep.subr.mxu0 0.0
        %1386 = vmatpush1.msra.mxu0 0.0
        %1387 = vmatprep.subr.mxu0 0.0
        %1388 = vmatpush1.msra.mxu0 0.0
        %1389 = vmatprep.subr.mxu0 0.0
        %1390 = vmatpush1.msra.mxu0 0.0
        %1391 = vmatprep.subr.mxu0 0.0
        %1392 = vmatpush1.msra.mxu0 0.0
        %1393 = vmatprep.subr.mxu0 0.0
        %1394 = vmatpush1.msra.mxu0 0.0
        %1395 = vmatprep.subr.mxu0 0.0
        %1396 = vmatpush1.msra.mxu0 0.0
        %1397 = vmatprep.subr.mxu0 0.0
        %1398 = vmatpush1.msra.mxu0 0.0
        %1399 = vmatprep.subr.mxu0 0.0
        %1400 = vmatpush1.msra.mxu0 0.0
        %1401 = vmatprep.mubr.f32.mxu0 0.0
        %1402 = vmatmul.mubr.f32.gmra.mrb[0].mxu0 %v1258
        %v1403 = vpop.f32.mrb[0].mxu0
        %v1404 = vadd.f32 0.0, %v1403
        %v1405 = vpop.f32.mrb[0].mxu0
        %1406 = vdwg.mxu0
        %v1407 = vadd.f32 %v1238, %v1333
        %v1408 = vadd.f32 %v1239, %v1335
        %v1409 = vadd.f32 %v1240, %v1404
        %v1410 = vld [vmem:[%s344] sm:$0xff]
        %v1411 = vld [vmem:[%s344 + $0x8] sm:$0xff]
        %s1412 = scalar_lea.vmem [#allocation8], 48
        %v1413 = vld [vmem:[%s1412] sm:$0xff]
        %v1416 = vcombine.high %v1410, %v1410
        %v1417 = vcombine.high %v1411, %v1411
        %1418 = vrot.lane.b32.xlu0 %v1410, 88
        %v1419 = vpop.permute.xlu0 %1418
        %1420 = vrot.lane.b32.xlu0 %v1416, 88
        %v1421 = vpop.permute.xlu0 %1420
        %1422 = vrot.lane.b32.xlu0 %v1411, 88
        %v1423 = vpop.permute.xlu0 %1422
        %1424 = vrot.lane.b32.xlu0 %v1417, 88
        %v1425 = vpop.permute.xlu0 %1424
        %vm1426 = vcmask 719872
        %v1427 = vsel %vm1426, %v1419, %v1421
        %v1428 = vsel %vm1426, %v1421, %v1423
        %v1429 = vsel %vm1426, %v1423, %v1425
        %v1431 = vsel %vm432, %v1413, 0
        %v1433 = vsel %vm436, %v1427, 0
        %v1435 = vsel %vm436, %v1428, 0
        %v1437 = vsel %vm436, %v1429, 0
        %1439 = vmatprep.subr.mxu0 %v1435
        %1440 = vmatpush1.msra.mxu0 %v1433
        %1441 = vmatprep.subr.mxu0 0.0
        %1442 = vmatpush1.msra.mxu0 0.0
        %1443 = vmatprep.subr.mxu0 0.0
        %1444 = vmatpush1.msra.mxu0 0.0
        %1445 = vmatprep.subr.mxu0 0.0
        %1446 = vmatpush1.msra.mxu0 0.0
        %1447 = vmatprep.subr.mxu0 0.0
        %1448 = vmatpush1.msra.mxu0 0.0
        %1449 = vmatprep.subr.mxu0 0.0
        %1450 = vmatpush1.msra.mxu0 0.0
        %1451 = vmatprep.subr.mxu0 0.0
        %1452 = vmatpush1.msra.mxu0 0.0
        %1453 = vmatprep.subr.mxu0 0.0
        %1454 = vmatpush1.msra.mxu0 0.0
        %1455 = vmatprep.subr.mxu0 0.0
        %1456 = vmatpush1.msra.mxu0 0.0
        %1457 = vmatprep.subr.mxu0 0.0
        %1458 = vmatpush1.msra.mxu0 0.0
        %1459 = vmatprep.subr.mxu0 0.0
        %1460 = vmatpush1.msra.mxu0 0.0
        %1461 = vmatprep.subr.mxu0 0.0
        %1462 = vmatpush1.msra.mxu0 0.0
        %1463 = vmatprep.subr.mxu0 0.0
        %1464 = vmatpush1.msra.mxu0 0.0
        %1465 = vmatprep.subr.mxu0 0.0
        %1466 = vmatpush1.msra.mxu0 0.0
        %1467 = vmatprep.subr.mxu0 0.0
        %1468 = vmatpush1.msra.mxu0 0.0
        %1469 = vmatprep.subr.mxu0 0.0
        %1470 = vmatpush1.msra.mxu0 0.0
        %1471 = vmatprep.subr.mxu0 0.0
        %1472 = vmatpush1.msra.mxu0 0.0
        %1473 = vmatprep.subr.mxu0 0.0
        %1474 = vmatpush1.msra.mxu0 0.0
        %1475 = vmatprep.subr.mxu0 0.0
        %1476 = vmatpush1.msra.mxu0 0.0
        %1477 = vmatprep.subr.mxu0 0.0
        %1478 = vmatpush1.msra.mxu0 0.0
        %1479 = vmatprep.subr.mxu0 0.0
        %1480 = vmatpush1.msra.mxu0 0.0
        %1481 = vmatprep.subr.mxu0 0.0
        %1482 = vmatpush1.msra.mxu0 0.0
        %1483 = vmatprep.subr.mxu0 0.0
        %1484 = vmatpush1.msra.mxu0 0.0
        %1485 = vmatprep.subr.mxu0 0.0
        %1486 = vmatpush1.msra.mxu0 0.0
        %1487 = vmatprep.subr.mxu0 0.0
        %1488 = vmatpush1.msra.mxu0 0.0
        %1489 = vmatprep.subr.mxu0 0.0
        %1490 = vmatpush1.msra.mxu0 0.0
        %1491 = vmatprep.subr.mxu0 0.0
        %1492 = vmatpush1.msra.mxu0 0.0
        %1493 = vmatprep.subr.mxu0 0.0
        %1494 = vmatpush1.msra.mxu0 0.0
        %1495 = vmatprep.subr.mxu0 0.0
        %1496 = vmatpush1.msra.mxu0 0.0
        %1497 = vmatprep.subr.mxu0 0.0
        %1498 = vmatpush1.msra.mxu0 0.0
        %1499 = vmatprep.subr.mxu0 0.0
        %1500 = vmatpush1.msra.mxu0 0.0
        %1501 = vmatprep.subr.mxu0 0.0
        %1502 = vmatpush1.msra.mxu0 0.0
        %1503 = vmatprep.mubr.f32.mxu0 0.0
        %1504 = vmatmul.mubr.f32.gmra.mrb[0].mxu0 %v1431
        %v1505 = vpop.f32.mrb[0].mxu0
        %v1506 = vadd.f32 0.0, %v1505
        %v1507 = vpop.f32.mrb[0].mxu0
        %v1508 = vadd.f32 0.0, %v1507
        %1509 = vdwg.mxu0
        %1510 = vmatprep.subr.mxu0 0.0
        %1511 = vmatpush1.msra.mxu0 %v1437
        %1512 = vmatprep.subr.mxu0 0.0
        %1513 = vmatpush1.msra.mxu0 0.0
        %1514 = vmatprep.subr.mxu0 0.0
        %1515 = vmatpush1.msra.mxu0 0.0
        %1516 = vmatprep.subr.mxu0 0.0
        %1517 = vmatpush1.msra.mxu0 0.0
        %1518 = vmatprep.subr.mxu0 0.0
        %1519 = vmatpush1.msra.mxu0 0.0
        %1520 = vmatprep.subr.mxu0 0.0
        %1521 = vmatpush1.msra.mxu0 0.0
        %1522 = vmatprep.subr.mxu0 0.0
        %1523 = vmatpush1.msra.mxu0 0.0
        %1524 = vmatprep.subr.mxu0 0.0
        %1525 = vmatpush1.msra.mxu0 0.0
        %1526 = vmatprep.subr.mxu0 0.0
        %1527 = vmatpush1.msra.mxu0 0.0
        %1528 = vmatprep.subr.mxu0 0.0
        %1529 = vmatpush1.msra.mxu0 0.0
        %1530 = vmatprep.subr.mxu0 0.0
        %1531 = vmatpush1.msra.mxu0 0.0
        %1532 = vmatprep.subr.mxu0 0.0
        %1533 = vmatpush1.msra.mxu0 0.0
        %1534 = vmatprep.subr.mxu0 0.0
        %1535 = vmatpush1.msra.mxu0 0.0
        %1536 = vmatprep.subr.mxu0 0.0
        %1537 = vmatpush1.msra.mxu0 0.0
        %1538 = vmatprep.subr.mxu0 0.0
        %1539 = vmatpush1.msra.mxu0 0.0
        %1540 = vmatprep.subr.mxu0 0.0
        %1541 = vmatpush1.msra.mxu0 0.0
        %1542 = vmatprep.subr.mxu0 0.0
        %1543 = vmatpush1.msra.mxu0 0.0
        %1544 = vmatprep.subr.mxu0 0.0
        %1545 = vmatpush1.msra.mxu0 0.0
        %1546 = vmatprep.subr.mxu0 0.0
        %1547 = vmatpush1.msra.mxu0 0.0
        %1548 = vmatprep.subr.mxu0 0.0
        %1549 = vmatpush1.msra.mxu0 0.0
        %1550 = vmatprep.subr.mxu0 0.0
        %1551 = vmatpush1.msra.mxu0 0.0
        %1552 = vmatprep.subr.mxu0 0.0
        %1553 = vmatpush1.msra.mxu0 0.0
        %1554 = vmatprep.subr.mxu0 0.0
        %1555 = vmatpush1.msra.mxu0 0.0
        %1556 = vmatprep.subr.mxu0 0.0
        %1557 = vmatpush1.msra.mxu0 0.0
        %1558 = vmatprep.subr.mxu0 0.0
        %1559 = vmatpush1.msra.mxu0 0.0
        %1560 = vmatprep.subr.mxu0 0.0
        %1561 = vmatpush1.msra.mxu0 0.0
        %1562 = vmatprep.subr.mxu0 0.0
        %1563 = vmatpush1.msra.mxu0 0.0
        %1564 = vmatprep.subr.mxu0 0.0
        %1565 = vmatpush1.msra.mxu0 0.0
        %1566 = vmatprep.subr.mxu0 0.0
        %1567 = vmatpush1.msra.mxu0 0.0
        %1568 = vmatprep.subr.mxu0 0.0
        %1569 = vmatpush1.msra.mxu0 0.0
        %1570 = vmatprep.subr.mxu0 0.0
        %1571 = vmatpush1.msra.mxu0 0.0
        %1572 = vmatprep.subr.mxu0 0.0
        %1573 = vmatpush1.msra.mxu0 0.0
        %1574 = vmatprep.mubr.f32.mxu0 0.0
        %1575 = vmatmul.mubr.f32.gmra.mrb[0].mxu0 %v1431
        %v1576 = vpop.f32.mrb[0].mxu0
        %v1577 = vadd.f32 0.0, %v1576
        %v1578 = vpop.f32.mrb[0].mxu0
        %1579 = vdwg.mxu0
        %v1580 = vadd.f32 %v1407, %v1506
        %v1581 = vadd.f32 %v1408, %v1508
        %v1582 = vadd.f32 %v1409, %v1577
        %v1583 = vld [vmem:[%s344] sm:$0xff]
        %v1584 = vld [vmem:[%s344 + $0x8] sm:$0xff]
        %s1585 = scalar_lea.vmem [#allocation8], 56
        %v1586 = vld [vmem:[%s1585] sm:$0xff]
        %v1589 = vcombine.high %v1583, %v1583
        %v1590 = vcombine.high %v1584, %v1584
        %1591 = vrot.lane.b32.xlu0 %v1583, 87
        %v1592 = vpop.permute.xlu0 %1591
        %1593 = vrot.lane.b32.xlu0 %v1589, 87
        %v1594 = vpop.permute.xlu0 %1593
        %1595 = vrot.lane.b32.xlu0 %v1584, 87
        %v1596 = vpop.permute.xlu0 %1595
        %1597 = vrot.lane.b32.xlu0 %v1590, 87
        %v1598 = vpop.permute.xlu0 %1597
        %vm1599 = vcmask 711680
        %v1600 = vsel %vm1599, %v1592, %v1594
        %v1601 = vsel %vm1599, %v1594, %v1596
        %v1602 = vsel %vm1599, %v1596, %v1598
        %v1604 = vsel %vm432, %v1586, 0
        %v1606 = vsel %vm436, %v1600, 0
        %v1608 = vsel %vm436, %v1601, 0
        %v1610 = vsel %vm436, %v1602, 0
        %1612 = vmatprep.subr.mxu0 %v1608
        %1613 = vmatpush1.msra.mxu0 %v1606
        %1614 = vmatprep.subr.mxu0 0.0
        %1615 = vmatpush1.msra.mxu0 0.0
        %1616 = vmatprep.subr.mxu0 0.0
        %1617 = vmatpush1.msra.mxu0 0.0
        %1618 = vmatprep.subr.mxu0 0.0
        %1619 = vmatpush1.msra.mxu0 0.0
        %1620 = vmatprep.subr.mxu0 0.0
        %1621 = vmatpush1.msra.mxu0 0.0
        %1622 = vmatprep.subr.mxu0 0.0
        %1623 = vmatpush1.msra.mxu0 0.0
        %1624 = vmatprep.subr.mxu0 0.0
        %1625 = vmatpush1.msra.mxu0 0.0
        %1626 = vmatprep.subr.mxu0 0.0
        %1627 = vmatpush1.msra.mxu0 0.0
        %1628 = vmatprep.subr.mxu0 0.0
        %1629 = vmatpush1.msra.mxu0 0.0
        %1630 = vmatprep.subr.mxu0 0.0
        %1631 = vmatpush1.msra.mxu0 0.0
        %1632 = vmatprep.subr.mxu0 0.0
        %1633 = vmatpush1.msra.mxu0 0.0
        %1634 = vmatprep.subr.mxu0 0.0
        %1635 = vmatpush1.msra.mxu0 0.0
        %1636 = vmatprep.subr.mxu0 0.0
        %1637 = vmatpush1.msra.mxu0 0.0
        %1638 = vmatprep.subr.mxu0 0.0
        %1639 = vmatpush1.msra.mxu0 0.0
        %1640 = vmatprep.subr.mxu0 0.0
        %1641 = vmatpush1.msra.mxu0 0.0
        %1642 = vmatprep.subr.mxu0 0.0
        %1643 = vmatpush1.msra.mxu0 0.0
        %1644 = vmatprep.subr.mxu0 0.0
        %1645 = vmatpush1.msra.mxu0 0.0
        %1646 = vmatprep.subr.mxu0 0.0
        %1647 = vmatpush1.msra.mxu0 0.0
        %1648 = vmatprep.subr.mxu0 0.0
        %1649 = vmatpush1.msra.mxu0 0.0
        %1650 = vmatprep.subr.mxu0 0.0
        %1651 = vmatpush1.msra.mxu0 0.0
        %1652 = vmatprep.subr.mxu0 0.0
        %1653 = vmatpush1.msra.mxu0 0.0
        %1654 = vmatprep.subr.mxu0 0.0
        %1655 = vmatpush1.msra.mxu0 0.0
        %1656 = vmatprep.subr.mxu0 0.0
        %1657 = vmatpush1.msra.mxu0 0.0
        %1658 = vmatprep.subr.mxu0 0.0
        %1659 = vmatpush1.msra.mxu0 0.0
        %1660 = vmatprep.subr.mxu0 0.0
        %1661 = vmatpush1.msra.mxu0 0.0
        %1662 = vmatprep.subr.mxu0 0.0
        %1663 = vmatpush1.msra.mxu0 0.0
        %1664 = vmatprep.subr.mxu0 0.0
        %1665 = vmatpush1.msra.mxu0 0.0
        %1666 = vmatprep.subr.mxu0 0.0
        %1667 = vmatpush1.msra.mxu0 0.0
        %1668 = vmatprep.subr.mxu0 0.0
        %1669 = vmatpush1.msra.mxu0 0.0
        %1670 = vmatprep.subr.mxu0 0.0
        %1671 = vmatpush1.msra.mxu0 0.0
        %1672 = vmatprep.subr.mxu0 0.0
        %1673 = vmatpush1.msra.mxu0 0.0
        %1674 = vmatprep.subr.mxu0 0.0
        %1675 = vmatpush1.msra.mxu0 0.0
        %1676 = vmatprep.mubr.f32.mxu0 0.0
        %1677 = vmatmul.mubr.f32.gmra.mrb[0].mxu0 %v1604
        %v1678 = vpop.f32.mrb[0].mxu0
        %v1679 = vadd.f32 0.0, %v1678
        %v1680 = vpop.f32.mrb[0].mxu0
        %v1681 = vadd.f32 0.0, %v1680
        %1682 = vdwg.mxu0
        %1683 = vmatprep.subr.mxu0 0.0
        %1684 = vmatpush1.msra.mxu0 %v1610
        %1685 = vmatprep.subr.mxu0 0.0
        %1686 = vmatpush1.msra.mxu0 0.0
        %1687 = vmatprep.subr.mxu0 0.0
        %1688 = vmatpush1.msra.mxu0 0.0
        %1689 = vmatprep.subr.mxu0 0.0
        %1690 = vmatpush1.msra.mxu0 0.0
        %1691 = vmatprep.subr.mxu0 0.0
        %1692 = vmatpush1.msra.mxu0 0.0
        %1693 = vmatprep.subr.mxu0 0.0
        %1694 = vmatpush1.msra.mxu0 0.0
        %1695 = vmatprep.subr.mxu0 0.0
        %1696 = vmatpush1.msra.mxu0 0.0
        %1697 = vmatprep.subr.mxu0 0.0
        %1698 = vmatpush1.msra.mxu0 0.0
        %1699 = vmatprep.subr.mxu0 0.0
        %1700 = vmatpush1.msra.mxu0 0.0
        %1701 = vmatprep.subr.mxu0 0.0
        %1702 = vmatpush1.msra.mxu0 0.0
        %1703 = vmatprep.subr.mxu0 0.0
        %1704 = vmatpush1.msra.mxu0 0.0
        %1705 = vmatprep.subr.mxu0 0.0
        %1706 = vmatpush1.msra.mxu0 0.0
        %1707 = vmatprep.subr.mxu0 0.0
        %1708 = vmatpush1.msra.mxu0 0.0
        %1709 = vmatprep.subr.mxu0 0.0
        %1710 = vmatpush1.msra.mxu0 0.0
        %1711 = vmatprep.subr.mxu0 0.0
        %1712 = vmatpush1.msra.mxu0 0.0
        %1713 = vmatprep.subr.mxu0 0.0
        %1714 = vmatpush1.msra.mxu0 0.0
        %1715 = vmatprep.subr.mxu0 0.0
        %1716 = vmatpush1.msra.mxu0 0.0
        %1717 = vmatprep.subr.mxu0 0.0
        %1718 = vmatpush1.msra.mxu0 0.0
        %1719 = vmatprep.subr.mxu0 0.0
        %1720 = vmatpush1.msra.mxu0 0.0
        %1721 = vmatprep.subr.mxu0 0.0
        %1722 = vmatpush1.msra.mxu0 0.0
        %1723 = vmatprep.subr.mxu0 0.0
        %1724 = vmatpush1.msra.mxu0 0.0
        %1725 = vmatprep.subr.mxu0 0.0
        %1726 = vmatpush1.msra.mxu0 0.0
        %1727 = vmatprep.subr.mxu0 0.0
        %1728 = vmatpush1.msra.mxu0 0.0
        %1729 = vmatprep.subr.mxu0 0.0
        %1730 = vmatpush1.msra.mxu0 0.0
        %1731 = vmatprep.subr.mxu0 0.0
        %1732 = vmatpush1.msra.mxu0 0.0
        %1733 = vmatprep.subr.mxu0 0.0
        %1734 = vmatpush1.msra.mxu0 0.0
        %1735 = vmatprep.subr.mxu0 0.0
        %1736 = vmatpush1.msra.mxu0 0.0
        %1737 = vmatprep.subr.mxu0 0.0
        %1738 = vmatpush1.msra.mxu0 0.0
        %1739 = vmatprep.subr.mxu0 0.0
        %1740 = vmatpush1.msra.mxu0 0.0
        %1741 = vmatprep.subr.mxu0 0.0
        %1742 = vmatpush1.msra.mxu0 0.0
        %1743 = vmatprep.subr.mxu0 0.0
        %1744 = vmatpush1.msra.mxu0 0.0
        %1745 = vmatprep.subr.mxu0 0.0
        %1746 = vmatpush1.msra.mxu0 0.0
        %1747 = vmatprep.mubr.f32.mxu0 0.0
        %1748 = vmatmul.mubr.f32.gmra.mrb[0].mxu0 %v1604
        %v1749 = vpop.f32.mrb[0].mxu0
        %v1750 = vadd.f32 0.0, %v1749
        %v1751 = vpop.f32.mrb[0].mxu0
        %1752 = vdwg.mxu0
        %v1753 = vadd.f32 %v1580, %v1679
        %v1754 = vadd.f32 %v1581, %v1681
        %v1755 = vadd.f32 %v1582, %v1750
        %v1756 = vld [vmem:[%s344] sm:$0xff]
        %v1757 = vld [vmem:[%s344 + $0x8] sm:$0xff]
        %s1758 = scalar_lea.vmem [#allocation8], 64
        %v1759 = vld [vmem:[%s1758] sm:$0xff]
        %v1762 = vcombine.high %v1756, %v1756
        %v1763 = vcombine.high %v1757, %v1757
        %1764 = vrot.lane.b32.xlu0 %v1756, 86
        %v1765 = vpop.permute.xlu0 %1764
        %1766 = vrot.lane.b32.xlu0 %v1762, 86
        %v1767 = vpop.permute.xlu0 %1766
        %1768 = vrot.lane.b32.xlu0 %v1757, 86
        %v1769 = vpop.permute.xlu0 %1768
        %1770 = vrot.lane.b32.xlu0 %v1763, 86
        %v1771 = vpop.permute.xlu0 %1770
        %vm1772 = vcmask 703488
        %v1773 = vsel %vm1772, %v1765, %v1767
        %v1774 = vsel %vm1772, %v1767, %v1769
        %v1775 = vsel %vm1772, %v1769, %v1771
        %v1777 = vsel %vm432, %v1759, 0
        %v1779 = vsel %vm436, %v1773, 0
        %v1781 = vsel %vm436, %v1774, 0
        %v1783 = vsel %vm436, %v1775, 0
        %1785 = vmatprep.subr.mxu0 %v1781
        %1786 = vmatpush1.msra.mxu0 %v1779
        %1787 = vmatprep.subr.mxu0 0.0
        %1788 = vmatpush1.msra.mxu0 0.0
        %1789 = vmatprep.subr.mxu0 0.0
        %1790 = vmatpush1.msra.mxu0 0.0
        %1791 = vmatprep.subr.mxu0 0.0
        %1792 = vmatpush1.msra.mxu0 0.0
        %1793 = vmatprep.subr.mxu0 0.0
        %1794 = vmatpush1.msra.mxu0 0.0
        %1795 = vmatprep.subr.mxu0 0.0
        %1796 = vmatpush1.msra.mxu0 0.0
        %1797 = vmatprep.subr.mxu0 0.0
        %1798 = vmatpush1.msra.mxu0 0.0
        %1799 = vmatprep.subr.mxu0 0.0
        %1800 = vmatpush1.msra.mxu0 0.0
        %1801 = vmatprep.subr.mxu0 0.0
        %1802 = vmatpush1.msra.mxu0 0.0
        %1803 = vmatprep.subr.mxu0 0.0
        %1804 = vmatpush1.msra.mxu0 0.0
        %1805 = vmatprep.subr.mxu0 0.0
        %1806 = vmatpush1.msra.mxu0 0.0
        %1807 = vmatprep.subr.mxu0 0.0
        %1808 = vmatpush1.msra.mxu0 0.0
        %1809 = vmatprep.subr.mxu0 0.0
        %1810 = vmatpush1.msra.mxu0 0.0
        %1811 = vmatprep.subr.mxu0 0.0
        %1812 = vmatpush1.msra.mxu0 0.0
        %1813 = vmatprep.subr.mxu0 0.0
        %1814 = vmatpush1.msra.mxu0 0.0
        %1815 = vmatprep.subr.mxu0 0.0
        %1816 = vmatpush1.msra.mxu0 0.0
        %1817 = vmatprep.subr.mxu0 0.0
        %1818 = vmatpush1.msra.mxu0 0.0
        %1819 = vmatprep.subr.mxu0 0.0
        %1820 = vmatpush1.msra.mxu0 0.0
        %1821 = vmatprep.subr.mxu0 0.0
        %1822 = vmatpush1.msra.mxu0 0.0
        %1823 = vmatprep.subr.mxu0 0.0
        %1824 = vmatpush1.msra.mxu0 0.0
        %1825 = vmatprep.subr.mxu0 0.0
        %1826 = vmatpush1.msra.mxu0 0.0
        %1827 = vmatprep.subr.mxu0 0.0
        %1828 = vmatpush1.msra.mxu0 0.0
        %1829 = vmatprep.subr.mxu0 0.0
        %1830 = vmatpush1.msra.mxu0 0.0
        %1831 = vmatprep.subr.mxu0 0.0
        %1832 = vmatpush1.msra.mxu0 0.0
        %1833 = vmatprep.subr.mxu0 0.0
        %1834 = vmatpush1.msra.mxu0 0.0
        %1835 = vmatprep.subr.mxu0 0.0
        %1836 = vmatpush1.msra.mxu0 0.0
        %1837 = vmatprep.subr.mxu0 0.0
        %1838 = vmatpush1.msra.mxu0 0.0
        %1839 = vmatprep.subr.mxu0 0.0
        %1840 = vmatpush1.msra.mxu0 0.0
        %1841 = vmatprep.subr.mxu0 0.0
        %1842 = vmatpush1.msra.mxu0 0.0
        %1843 = vmatprep.subr.mxu0 0.0
        %1844 = vmatpush1.msra.mxu0 0.0
        %1845 = vmatprep.subr.mxu0 0.0
        %1846 = vmatpush1.msra.mxu0 0.0
        %1847 = vmatprep.subr.mxu0 0.0
        %1848 = vmatpush1.msra.mxu0 0.0
        %1849 = vmatprep.mubr.f32.mxu0 0.0
        %1850 = vmatmul.mubr.f32.gmra.mrb[0].mxu0 %v1777
        %v1851 = vpop.f32.mrb[0].mxu0
        %v1852 = vadd.f32 0.0, %v1851
        %v1853 = vpop.f32.mrb[0].mxu0
        %v1854 = vadd.f32 0.0, %v1853
        %1855 = vdwg.mxu0
        %1856 = vmatprep.subr.mxu0 0.0
        %1857 = vmatpush1.msra.mxu0 %v1783
        %1858 = vmatprep.subr.mxu0 0.0
        %1859 = vmatpush1.msra.mxu0 0.0
        %1860 = vmatprep.subr.mxu0 0.0
        %1861 = vmatpush1.msra.mxu0 0.0
        %1862 = vmatprep.subr.mxu0 0.0
        %1863 = vmatpush1.msra.mxu0 0.0
        %1864 = vmatprep.subr.mxu0 0.0
        %1865 = vmatpush1.msra.mxu0 0.0
        %1866 = vmatprep.subr.mxu0 0.0
        %1867 = vmatpush1.msra.mxu0 0.0
        %1868 = vmatprep.subr.mxu0 0.0
        %1869 = vmatpush1.msra.mxu0 0.0
        %1870 = vmatprep.subr.mxu0 0.0
        %1871 = vmatpush1.msra.mxu0 0.0
        %1872 = vmatprep.subr.mxu0 0.0
        %1873 = vmatpush1.msra.mxu0 0.0
        %1874 = vmatprep.subr.mxu0 0.0
        %1875 = vmatpush1.msra.mxu0 0.0
        %1876 = vmatprep.subr.mxu0 0.0
        %1877 = vmatpush1.msra.mxu0 0.0
        %1878 = vmatprep.subr.mxu0 0.0
        %1879 = vmatpush1.msra.mxu0 0.0
        %1880 = vmatprep.subr.mxu0 0.0
        %1881 = vmatpush1.msra.mxu0 0.0
        %1882 = vmatprep.subr.mxu0 0.0
        %1883 = vmatpush1.msra.mxu0 0.0
        %1884 = vmatprep.subr.mxu0 0.0
        %1885 = vmatpush1.msra.mxu0 0.0
        %1886 = vmatprep.subr.mxu0 0.0
        %1887 = vmatpush1.msra.mxu0 0.0
        %1888 = vmatprep.subr.mxu0 0.0
        %1889 = vmatpush1.msra.mxu0 0.0
        %1890 = vmatprep.subr.mxu0 0.0
        %1891 = vmatpush1.msra.mxu0 0.0
        %1892 = vmatprep.subr.mxu0 0.0
        %1893 = vmatpush1.msra.mxu0 0.0
        %1894 = vmatprep.subr.mxu0 0.0
        %1895 = vmatpush1.msra.mxu0 0.0
        %1896 = vmatprep.subr.mxu0 0.0
        %1897 = vmatpush1.msra.mxu0 0.0
        %1898 = vmatprep.subr.mxu0 0.0
        %1899 = vmatpush1.msra.mxu0 0.0
        %1900 = vmatprep.subr.mxu0 0.0
        %1901 = vmatpush1.msra.mxu0 0.0
        %1902 = vmatprep.subr.mxu0 0.0
        %1903 = vmatpush1.msra.mxu0 0.0
        %1904 = vmatprep.subr.mxu0 0.0
        %1905 = vmatpush1.msra.mxu0 0.0
        %1906 = vmatprep.subr.mxu0 0.0
        %1907 = vmatpush1.msra.mxu0 0.0
        %1908 = vmatprep.subr.mxu0 0.0
        %1909 = vmatpush1.msra.mxu0 0.0
        %1910 = vmatprep.subr.mxu0 0.0
        %1911 = vmatpush1.msra.mxu0 0.0
        %1912 = vmatprep.subr.mxu0 0.0
        %1913 = vmatpush1.msra.mxu0 0.0
        %1914 = vmatprep.subr.mxu0 0.0
        %1915 = vmatpush1.msra.mxu0 0.0
        %1916 = vmatprep.subr.mxu0 0.0
        %1917 = vmatpush1.msra.mxu0 0.0
        %1918 = vmatprep.subr.mxu0 0.0
        %1919 = vmatpush1.msra.mxu0 0.0
        %1920 = vmatprep.mubr.f32.mxu0 0.0
        %1921 = vmatmul.mubr.f32.gmra.mrb[0].mxu0 %v1777
        %v1922 = vpop.f32.mrb[0].mxu0
        %v1923 = vadd.f32 0.0, %v1922
        %v1924 = vpop.f32.mrb[0].mxu0
        %1925 = vdwg.mxu0
        %v1926 = vadd.f32 %v1753, %v1852
        %v1927 = vadd.f32 %v1754, %v1854
        %v1928 = vadd.f32 %v1755, %v1923
        %v1929 = vld [vmem:[%s353] sm:$0xff]
        %v1930 = vld [vmem:[%s353 + $0x8] sm:$0xf]
        %s1931 = scalar_lea.vmem [#allocation8], 72
        %v1932 = vld [vmem:[%s1931] sm:$0xff]
        %v1935 = vcombine.high %v1929, %v1929
        %v1937 = vsel %vm432, %v1932, 0
        %v1939 = vsel %vm436, %v1929, 0
        %v1941 = vsel %vm436, %v1935, 0
        %v1943 = vsel %vm436, %v1930, 0
        %1945 = vmatprep.subr.mxu0 %v1941
        %1946 = vmatpush1.msra.mxu0 %v1939
        %1947 = vmatprep.subr.mxu0 0.0
        %1948 = vmatpush1.msra.mxu0 0.0
        %1949 = vmatprep.subr.mxu0 0.0
        %1950 = vmatpush1.msra.mxu0 0.0
        %1951 = vmatprep.subr.mxu0 0.0
        %1952 = vmatpush1.msra.mxu0 0.0
        %1953 = vmatprep.subr.mxu0 0.0
        %1954 = vmatpush1.msra.mxu0 0.0
        %1955 = vmatprep.subr.mxu0 0.0
        %1956 = vmatpush1.msra.mxu0 0.0
        %1957 = vmatprep.subr.mxu0 0.0
        %1958 = vmatpush1.msra.mxu0 0.0
        %1959 = vmatprep.subr.mxu0 0.0
        %1960 = vmatpush1.msra.mxu0 0.0
        %1961 = vmatprep.subr.mxu0 0.0
        %1962 = vmatpush1.msra.mxu0 0.0
        %1963 = vmatprep.subr.mxu0 0.0
        %1964 = vmatpush1.msra.mxu0 0.0
        %1965 = vmatprep.subr.mxu0 0.0
        %1966 = vmatpush1.msra.mxu0 0.0
        %1967 = vmatprep.subr.mxu0 0.0
        %1968 = vmatpush1.msra.mxu0 0.0
        %1969 = vmatprep.subr.mxu0 0.0
        %1970 = vmatpush1.msra.mxu0 0.0
        %1971 = vmatprep.subr.mxu0 0.0
        %1972 = vmatpush1.msra.mxu0 0.0
        %1973 = vmatprep.subr.mxu0 0.0
        %1974 = vmatpush1.msra.mxu0 0.0
        %1975 = vmatprep.subr.mxu0 0.0
        %1976 = vmatpush1.msra.mxu0 0.0
        %1977 = vmatprep.subr.mxu0 0.0
        %1978 = vmatpush1.msra.mxu0 0.0
        %1979 = vmatprep.subr.mxu0 0.0
        %1980 = vmatpush1.msra.mxu0 0.0
        %1981 = vmatprep.subr.mxu0 0.0
        %1982 = vmatpush1.msra.mxu0 0.0
        %1983 = vmatprep.subr.mxu0 0.0
        %1984 = vmatpush1.msra.mxu0 0.0
        %1985 = vmatprep.subr.mxu0 0.0
        %1986 = vmatpush1.msra.mxu0 0.0
        %1987 = vmatprep.subr.mxu0 0.0
        %1988 = vmatpush1.msra.mxu0 0.0
        %1989 = vmatprep.subr.mxu0 0.0
        %1990 = vmatpush1.msra.mxu0 0.0
        %1991 = vmatprep.subr.mxu0 0.0
        %1992 = vmatpush1.msra.mxu0 0.0
        %1993 = vmatprep.subr.mxu0 0.0
        %1994 = vmatpush1.msra.mxu0 0.0
        %1995 = vmatprep.subr.mxu0 0.0
        %1996 = vmatpush1.msra.mxu0 0.0
        %1997 = vmatprep.subr.mxu0 0.0
        %1998 = vmatpush1.msra.mxu0 0.0
        %1999 = vmatprep.subr.mxu0 0.0
        %2000 = vmatpush1.msra.mxu0 0.0
        %2001 = vmatprep.subr.mxu0 0.0
        %2002 = vmatpush1.msra.mxu0 0.0
        %2003 = vmatprep.subr.mxu0 0.0
        %2004 = vmatpush1.msra.mxu0 0.0
        %2005 = vmatprep.subr.mxu0 0.0
        %2006 = vmatpush1.msra.mxu0 0.0
        %2007 = vmatprep.subr.mxu0 0.0
        %2008 = vmatpush1.msra.mxu0 0.0
        %2009 = vmatprep.mubr.f32.mxu0 0.0
        %2010 = vmatmul.mubr.f32.gmra.mrb[0].mxu0 %v1937
        %v2011 = vpop.f32.mrb[0].mxu0
        %v2012 = vadd.f32 0.0, %v2011
        %v2013 = vpop.f32.mrb[0].mxu0
        %v2014 = vadd.f32 0.0, %v2013
        %2015 = vdwg.mxu0
        %2016 = vmatprep.subr.mxu0 0.0
        %2017 = vmatpush1.msra.mxu0 %v1943
        %2018 = vmatprep.subr.mxu0 0.0
        %2019 = vmatpush1.msra.mxu0 0.0
        %2020 = vmatprep.subr.mxu0 0.0
        %2021 = vmatpush1.msra.mxu0 0.0
        %2022 = vmatprep.subr.mxu0 0.0
        %2023 = vmatpush1.msra.mxu0 0.0
        %2024 = vmatprep.subr.mxu0 0.0
        %2025 = vmatpush1.msra.mxu0 0.0
        %2026 = vmatprep.subr.mxu0 0.0
        %2027 = vmatpush1.msra.mxu0 0.0
        %2028 = vmatprep.subr.mxu0 0.0
        %2029 = vmatpush1.msra.mxu0 0.0
        %2030 = vmatprep.subr.mxu0 0.0
        %2031 = vmatpush1.msra.mxu0 0.0
        %2032 = vmatprep.subr.mxu0 0.0
        %2033 = vmatpush1.msra.mxu0 0.0
        %2034 = vmatprep.subr.mxu0 0.0
        %2035 = vmatpush1.msra.mxu0 0.0
        %2036 = vmatprep.subr.mxu0 0.0
        %2037 = vmatpush1.msra.mxu0 0.0
        %2038 = vmatprep.subr.mxu0 0.0
        %2039 = vmatpush1.msra.mxu0 0.0
        %2040 = vmatprep.subr.mxu0 0.0
        %2041 = vmatpush1.msra.mxu0 0.0
        %2042 = vmatprep.subr.mxu0 0.0
        %2043 = vmatpush1.msra.mxu0 0.0
        %2044 = vmatprep.subr.mxu0 0.0
        %2045 = vmatpush1.msra.mxu0 0.0
        %2046 = vmatprep.subr.mxu0 0.0
        %2047 = vmatpush1.msra.mxu0 0.0
        %2048 = vmatprep.subr.mxu0 0.0
        %2049 = vmatpush1.msra.mxu0 0.0
        %2050 = vmatprep.subr.mxu0 0.0
        %2051 = vmatpush1.msra.mxu0 0.0
        %2052 = vmatprep.subr.mxu0 0.0
        %2053 = vmatpush1.msra.mxu0 0.0
        %2054 = vmatprep.subr.mxu0 0.0
        %2055 = vmatpush1.msra.mxu0 0.0
        %2056 = vmatprep.subr.mxu0 0.0
        %2057 = vmatpush1.msra.mxu0 0.0
        %2058 = vmatprep.subr.mxu0 0.0
        %2059 = vmatpush1.msra.mxu0 0.0
        %2060 = vmatprep.subr.mxu0 0.0
        %2061 = vmatpush1.msra.mxu0 0.0
        %2062 = vmatprep.subr.mxu0 0.0
        %2063 = vmatpush1.msra.mxu0 0.0
        %2064 = vmatprep.subr.mxu0 0.0
        %2065 = vmatpush1.msra.mxu0 0.0
        %2066 = vmatprep.subr.mxu0 0.0
        %2067 = vmatpush1.msra.mxu0 0.0
        %2068 = vmatprep.subr.mxu0 0.0
        %2069 = vmatpush1.msra.mxu0 0.0
        %2070 = vmatprep.subr.mxu0 0.0
        %2071 = vmatpush1.msra.mxu0 0.0
        %2072 = vmatprep.subr.mxu0 0.0
        %2073 = vmatpush1.msra.mxu0 0.0
        %2074 = vmatprep.subr.mxu0 0.0
        %2075 = vmatpush1.msra.mxu0 0.0
        %2076 = vmatprep.subr.mxu0 0.0
        %2077 = vmatpush1.msra.mxu0 0.0
        %2078 = vmatprep.subr.mxu0 0.0
        %2079 = vmatpush1.msra.mxu0 0.0
        %2080 = vmatprep.mubr.f32.mxu0 0.0
        %2081 = vmatmul.mubr.f32.gmra.mrb[0].mxu0 %v1937
        %v2082 = vpop.f32.mrb[0].mxu0
        %v2083 = vadd.f32 0.0, %v2082
        %v2084 = vpop.f32.mrb[0].mxu0
        %2085 = vdwg.mxu0
        %v2086 = vadd.f32 %v1926, %v2012
        %v2087 = vadd.f32 %v1927, %v2014
        %v2088 = vadd.f32 %v1928, %v2083
        %v2089 = vld [vmem:[%s353] sm:$0xff]
        %v2090 = vld [vmem:[%s353 + $0x8] sm:$0xf]
        %s2091 = scalar_lea.vmem [#allocation8], 80
        %v2092 = vld [vmem:[%s2091] sm:$0xff]
        %v2095 = vcombine.high %v2089, %v2089
        %2096 = vrot.lane.b32.xlu0 %v2089, 127
        %v2097 = vpop.permute.xlu0 %2096
        %2098 = vrot.lane.b32.xlu0 %v2095, 127
        %v2099 = vpop.permute.xlu0 %2098
        %2100 = vrot.lane.b32.xlu0 %v2090, 127
        %v2101 = vpop.permute.xlu0 %2100
        %v2102 = vsel %vm429, %v2097, %v2099
        %v2103 = vsel %vm429, %v2099, %v2101
        %v2105 = vsel %vm432, %v2092, 0
        %v2107 = vsel %vm436, %v2102, 0
        %v2109 = vsel %vm436, %v2103, 0
        %v2111 = vsel %vm436, %v2101, 0
        %2113 = vmatprep.subr.mxu0 %v2109
        %2114 = vmatpush1.msra.mxu0 %v2107
        %2115 = vmatprep.subr.mxu0 0.0
        %2116 = vmatpush1.msra.mxu0 0.0
        %2117 = vmatprep.subr.mxu0 0.0
        %2118 = vmatpush1.msra.mxu0 0.0
        %2119 = vmatprep.subr.mxu0 0.0
        %2120 = vmatpush1.msra.mxu0 0.0
        %2121 = vmatprep.subr.mxu0 0.0
        %2122 = vmatpush1.msra.mxu0 0.0
        %2123 = vmatprep.subr.mxu0 0.0
        %2124 = vmatpush1.msra.mxu0 0.0
        %2125 = vmatprep.subr.mxu0 0.0
        %2126 = vmatpush1.msra.mxu0 0.0
        %2127 = vmatprep.subr.mxu0 0.0
        %2128 = vmatpush1.msra.mxu0 0.0
        %2129 = vmatprep.subr.mxu0 0.0
        %2130 = vmatpush1.msra.mxu0 0.0
        %2131 = vmatprep.subr.mxu0 0.0
        %2132 = vmatpush1.msra.mxu0 0.0
        %2133 = vmatprep.subr.mxu0 0.0
        %2134 = vmatpush1.msra.mxu0 0.0
        %2135 = vmatprep.subr.mxu0 0.0
        %2136 = vmatpush1.msra.mxu0 0.0
        %2137 = vmatprep.subr.mxu0 0.0
        %2138 = vmatpush1.msra.mxu0 0.0
        %2139 = vmatprep.subr.mxu0 0.0
        %2140 = vmatpush1.msra.mxu0 0.0
        %2141 = vmatprep.subr.mxu0 0.0
        %2142 = vmatpush1.msra.mxu0 0.0
        %2143 = vmatprep.subr.mxu0 0.0
        %2144 = vmatpush1.msra.mxu0 0.0
        %2145 = vmatprep.subr.mxu0 0.0
        %2146 = vmatpush1.msra.mxu0 0.0
        %2147 = vmatprep.subr.mxu0 0.0
        %2148 = vmatpush1.msra.mxu0 0.0
        %2149 = vmatprep.subr.mxu0 0.0
        %2150 = vmatpush1.msra.mxu0 0.0
        %2151 = vmatprep.subr.mxu0 0.0
        %2152 = vmatpush1.msra.mxu0 0.0
        %2153 = vmatprep.subr.mxu0 0.0
        %2154 = vmatpush1.msra.mxu0 0.0
        %2155 = vmatprep.subr.mxu0 0.0
        %2156 = vmatpush1.msra.mxu0 0.0
        %2157 = vmatprep.subr.mxu0 0.0
        %2158 = vmatpush1.msra.mxu0 0.0
        %2159 = vmatprep.subr.mxu0 0.0
        %2160 = vmatpush1.msra.mxu0 0.0
        %2161 = vmatprep.subr.mxu0 0.0
        %2162 = vmatpush1.msra.mxu0 0.0
        %2163 = vmatprep.subr.mxu0 0.0
        %2164 = vmatpush1.msra.mxu0 0.0
        %2165 = vmatprep.subr.mxu0 0.0
        %2166 = vmatpush1.msra.mxu0 0.0
        %2167 = vmatprep.subr.mxu0 0.0
        %2168 = vmatpush1.msra.mxu0 0.0
        %2169 = vmatprep.subr.mxu0 0.0
        %2170 = vmatpush1.msra.mxu0 0.0
        %2171 = vmatprep.subr.mxu0 0.0
        %2172 = vmatpush1.msra.mxu0 0.0
        %2173 = vmatprep.subr.mxu0 0.0
        %2174 = vmatpush1.msra.mxu0 0.0
        %2175 = vmatprep.subr.mxu0 0.0
        %2176 = vmatpush1.msra.mxu0 0.0
        %2177 = vmatprep.mubr.f32.mxu0 0.0
        %2178 = vmatmul.mubr.f32.gmra.mrb[0].mxu0 %v2105
        %v2179 = vpop.f32.mrb[0].mxu0
        %v2180 = vadd.f32 0.0, %v2179
        %v2181 = vpop.f32.mrb[0].mxu0
        %v2182 = vadd.f32 0.0, %v2181
        %2183 = vdwg.mxu0
        %2184 = vmatprep.subr.mxu0 0.0
        %2185 = vmatpush1.msra.mxu0 %v2111
        %2186 = vmatprep.subr.mxu0 0.0
        %2187 = vmatpush1.msra.mxu0 0.0
        %2188 = vmatprep.subr.mxu0 0.0
        %2189 = vmatpush1.msra.mxu0 0.0
        %2190 = vmatprep.subr.mxu0 0.0
        %2191 = vmatpush1.msra.mxu0 0.0
        %2192 = vmatprep.subr.mxu0 0.0
        %2193 = vmatpush1.msra.mxu0 0.0
        %2194 = vmatprep.subr.mxu0 0.0
        %2195 = vmatpush1.msra.mxu0 0.0
        %2196 = vmatprep.subr.mxu0 0.0
        %2197 = vmatpush1.msra.mxu0 0.0
        %2198 = vmatprep.subr.mxu0 0.0
        %2199 = vmatpush1.msra.mxu0 0.0
        %2200 = vmatprep.subr.mxu0 0.0
        %2201 = vmatpush1.msra.mxu0 0.0
        %2202 = vmatprep.subr.mxu0 0.0
        %2203 = vmatpush1.msra.mxu0 0.0
        %2204 = vmatprep.subr.mxu0 0.0
        %2205 = vmatpush1.msra.mxu0 0.0
        %2206 = vmatprep.subr.mxu0 0.0
        %2207 = vmatpush1.msra.mxu0 0.0
        %2208 = vmatprep.subr.mxu0 0.0
        %2209 = vmatpush1.msra.mxu0 0.0
        %2210 = vmatprep.subr.mxu0 0.0
        %2211 = vmatpush1.msra.mxu0 0.0
        %2212 = vmatprep.subr.mxu0 0.0
        %2213 = vmatpush1.msra.mxu0 0.0
        %2214 = vmatprep.subr.mxu0 0.0
        %2215 = vmatpush1.msra.mxu0 0.0
        %2216 = vmatprep.subr.mxu0 0.0
        %2217 = vmatpush1.msra.mxu0 0.0
        %2218 = vmatprep.subr.mxu0 0.0
        %2219 = vmatpush1.msra.mxu0 0.0
        %2220 = vmatprep.subr.mxu0 0.0
        %2221 = vmatpush1.msra.mxu0 0.0
        %2222 = vmatprep.subr.mxu0 0.0
        %2223 = vmatpush1.msra.mxu0 0.0
        %2224 = vmatprep.subr.mxu0 0.0
        %2225 = vmatpush1.msra.mxu0 0.0
        %2226 = vmatprep.subr.mxu0 0.0
        %2227 = vmatpush1.msra.mxu0 0.0
        %2228 = vmatprep.subr.mxu0 0.0
        %2229 = vmatpush1.msra.mxu0 0.0
        %2230 = vmatprep.subr.mxu0 0.0
        %2231 = vmatpush1.msra.mxu0 0.0
        %2232 = vmatprep.subr.mxu0 0.0
        %2233 = vmatpush1.msra.mxu0 0.0
        %2234 = vmatprep.subr.mxu0 0.0
        %2235 = vmatpush1.msra.mxu0 0.0
        %2236 = vmatprep.subr.mxu0 0.0
        %2237 = vmatpush1.msra.mxu0 0.0
        %2238 = vmatprep.subr.mxu0 0.0
        %2239 = vmatpush1.msra.mxu0 0.0
        %2240 = vmatprep.subr.mxu0 0.0
        %2241 = vmatpush1.msra.mxu0 0.0
        %2242 = vmatprep.subr.mxu0 0.0
        %2243 = vmatpush1.msra.mxu0 0.0
        %2244 = vmatprep.subr.mxu0 0.0
        %2245 = vmatpush1.msra.mxu0 0.0
        %2246 = vmatprep.subr.mxu0 0.0
        %2247 = vmatpush1.msra.mxu0 0.0
        %2248 = vmatprep.mubr.f32.mxu0 0.0
        %2249 = vmatmul.mubr.f32.gmra.mrb[0].mxu0 %v2105
        %v2250 = vpop.f32.mrb[0].mxu0
        %v2251 = vadd.f32 0.0, %v2250
        %v2252 = vpop.f32.mrb[0].mxu0
        %2253 = vdwg.mxu0
        %v2254 = vadd.f32 %v2086, %v2180
        %v2255 = vadd.f32 %v2087, %v2182
        %v2256 = vadd.f32 %v2088, %v2251
        %v2257 = vld [vmem:[%s353] sm:$0xff]
        %v2258 = vld [vmem:[%s353 + $0x8] sm:$0xf]
        %s2259 = scalar_lea.vmem [#allocation8], 88
        %v2260 = vld [vmem:[%s2259] sm:$0xff]
        %v2263 = vcombine.high %v2257, %v2257
        %2264 = vrot.lane.b32.xlu0 %v2257, 126
        %v2265 = vpop.permute.xlu0 %2264
        %2266 = vrot.lane.b32.xlu0 %v2263, 126
        %v2267 = vpop.permute.xlu0 %2266
        %2268 = vrot.lane.b32.xlu0 %v2258, 126
        %v2269 = vpop.permute.xlu0 %2268
        %v2270 = vsel %vm747, %v2265, %v2267
        %v2271 = vsel %vm747, %v2267, %v2269
        %v2273 = vsel %vm432, %v2260, 0
        %v2275 = vsel %vm436, %v2270, 0
        %v2277 = vsel %vm436, %v2271, 0
        %v2279 = vsel %vm436, %v2269, 0
        %2281 = vmatprep.subr.mxu0 %v2277
        %2282 = vmatpush1.msra.mxu0 %v2275
        %2283 = vmatprep.subr.mxu0 0.0
        %2284 = vmatpush1.msra.mxu0 0.0
        %2285 = vmatprep.subr.mxu0 0.0
        %2286 = vmatpush1.msra.mxu0 0.0
        %2287 = vmatprep.subr.mxu0 0.0
        %2288 = vmatpush1.msra.mxu0 0.0
        %2289 = vmatprep.subr.mxu0 0.0
        %2290 = vmatpush1.msra.mxu0 0.0
        %2291 = vmatprep.subr.mxu0 0.0
        %2292 = vmatpush1.msra.mxu0 0.0
        %2293 = vmatprep.subr.mxu0 0.0
        %2294 = vmatpush1.msra.mxu0 0.0
        %2295 = vmatprep.subr.mxu0 0.0
        %2296 = vmatpush1.msra.mxu0 0.0
        %2297 = vmatprep.subr.mxu0 0.0
        %2298 = vmatpush1.msra.mxu0 0.0
        %2299 = vmatprep.subr.mxu0 0.0
        %2300 = vmatpush1.msra.mxu0 0.0
        %2301 = vmatprep.subr.mxu0 0.0
        %2302 = vmatpush1.msra.mxu0 0.0
        %2303 = vmatprep.subr.mxu0 0.0
        %2304 = vmatpush1.msra.mxu0 0.0
        %2305 = vmatprep.subr.mxu0 0.0
        %2306 = vmatpush1.msra.mxu0 0.0
        %2307 = vmatprep.subr.mxu0 0.0
        %2308 = vmatpush1.msra.mxu0 0.0
        %2309 = vmatprep.subr.mxu0 0.0
        %2310 = vmatpush1.msra.mxu0 0.0
        %2311 = vmatprep.subr.mxu0 0.0
        %2312 = vmatpush1.msra.mxu0 0.0
        %2313 = vmatprep.subr.mxu0 0.0
        %2314 = vmatpush1.msra.mxu0 0.0
        %2315 = vmatprep.subr.mxu0 0.0
        %2316 = vmatpush1.msra.mxu0 0.0
        %2317 = vmatprep.subr.mxu0 0.0
        %2318 = vmatpush1.msra.mxu0 0.0
        %2319 = vmatprep.subr.mxu0 0.0
        %2320 = vmatpush1.msra.mxu0 0.0
        %2321 = vmatprep.subr.mxu0 0.0
        %2322 = vmatpush1.msra.mxu0 0.0
        %2323 = vmatprep.subr.mxu0 0.0
        %2324 = vmatpush1.msra.mxu0 0.0
        %2325 = vmatprep.subr.mxu0 0.0
        %2326 = vmatpush1.msra.mxu0 0.0
        %2327 = vmatprep.subr.mxu0 0.0
        %2328 = vmatpush1.msra.mxu0 0.0
        %2329 = vmatprep.subr.mxu0 0.0
        %2330 = vmatpush1.msra.mxu0 0.0
        %2331 = vmatprep.subr.mxu0 0.0
        %2332 = vmatpush1.msra.mxu0 0.0
        %2333 = vmatprep.subr.mxu0 0.0
        %2334 = vmatpush1.msra.mxu0 0.0
        %2335 = vmatprep.subr.mxu0 0.0
        %2336 = vmatpush1.msra.mxu0 0.0
        %2337 = vmatprep.subr.mxu0 0.0
        %2338 = vmatpush1.msra.mxu0 0.0
        %2339 = vmatprep.subr.mxu0 0.0
        %2340 = vmatpush1.msra.mxu0 0.0
        %2341 = vmatprep.subr.mxu0 0.0
        %2342 = vmatpush1.msra.mxu0 0.0
        %2343 = vmatprep.subr.mxu0 0.0
        %2344 = vmatpush1.msra.mxu0 0.0
        %2345 = vmatprep.mubr.f32.mxu0 0.0
        %2346 = vmatmul.mubr.f32.gmra.mrb[0].mxu0 %v2273
        %v2347 = vpop.f32.mrb[0].mxu0
        %v2348 = vadd.f32 0.0, %v2347
        %v2349 = vpop.f32.mrb[0].mxu0
        %v2350 = vadd.f32 0.0, %v2349
        %2351 = vdwg.mxu0
        %2352 = vmatprep.subr.mxu0 0.0
        %2353 = vmatpush1.msra.mxu0 %v2279
        %2354 = vmatprep.subr.mxu0 0.0
        %2355 = vmatpush1.msra.mxu0 0.0
        %2356 = vmatprep.subr.mxu0 0.0
        %2357 = vmatpush1.msra.mxu0 0.0
        %2358 = vmatprep.subr.mxu0 0.0
        %2359 = vmatpush1.msra.mxu0 0.0
        %2360 = vmatprep.subr.mxu0 0.0
        %2361 = vmatpush1.msra.mxu0 0.0
        %2362 = vmatprep.subr.mxu0 0.0
        %2363 = vmatpush1.msra.mxu0 0.0
        %2364 = vmatprep.subr.mxu0 0.0
        %2365 = vmatpush1.msra.mxu0 0.0
        %2366 = vmatprep.subr.mxu0 0.0
        %2367 = vmatpush1.msra.mxu0 0.0
        %2368 = vmatprep.subr.mxu0 0.0
        %2369 = vmatpush1.msra.mxu0 0.0
        %2370 = vmatprep.subr.mxu0 0.0
        %2371 = vmatpush1.msra.mxu0 0.0
        %2372 = vmatprep.subr.mxu0 0.0
        %2373 = vmatpush1.msra.mxu0 0.0
        %2374 = vmatprep.subr.mxu0 0.0
        %2375 = vmatpush1.msra.mxu0 0.0
        %2376 = vmatprep.subr.mxu0 0.0
        %2377 = vmatpush1.msra.mxu0 0.0
        %2378 = vmatprep.subr.mxu0 0.0
        %2379 = vmatpush1.msra.mxu0 0.0
        %2380 = vmatprep.subr.mxu0 0.0
        %2381 = vmatpush1.msra.mxu0 0.0
        %2382 = vmatprep.subr.mxu0 0.0
        %2383 = vmatpush1.msra.mxu0 0.0
        %2384 = vmatprep.subr.mxu0 0.0
        %2385 = vmatpush1.msra.mxu0 0.0
        %2386 = vmatprep.subr.mxu0 0.0
        %2387 = vmatpush1.msra.mxu0 0.0
        %2388 = vmatprep.subr.mxu0 0.0
        %2389 = vmatpush1.msra.mxu0 0.0
        %2390 = vmatprep.subr.mxu0 0.0
        %2391 = vmatpush1.msra.mxu0 0.0
        %2392 = vmatprep.subr.mxu0 0.0
        %2393 = vmatpush1.msra.mxu0 0.0
        %2394 = vmatprep.subr.mxu0 0.0
        %2395 = vmatpush1.msra.mxu0 0.0
        %2396 = vmatprep.subr.mxu0 0.0
        %2397 = vmatpush1.msra.mxu0 0.0
        %2398 = vmatprep.subr.mxu0 0.0
        %2399 = vmatpush1.msra.mxu0 0.0
        %2400 = vmatprep.subr.mxu0 0.0
        %2401 = vmatpush1.msra.mxu0 0.0
        %2402 = vmatprep.subr.mxu0 0.0
        %2403 = vmatpush1.msra.mxu0 0.0
        %2404 = vmatprep.subr.mxu0 0.0
        %2405 = vmatpush1.msra.mxu0 0.0
        %2406 = vmatprep.subr.mxu0 0.0
        %2407 = vmatpush1.msra.mxu0 0.0
        %2408 = vmatprep.subr.mxu0 0.0
        %2409 = vmatpush1.msra.mxu0 0.0
        %2410 = vmatprep.subr.mxu0 0.0
        %2411 = vmatpush1.msra.mxu0 0.0
        %2412 = vmatprep.subr.mxu0 0.0
        %2413 = vmatpush1.msra.mxu0 0.0
        %2414 = vmatprep.subr.mxu0 0.0
        %2415 = vmatpush1.msra.mxu0 0.0
        %2416 = vmatprep.mubr.f32.mxu0 0.0
        %2417 = vmatmul.mubr.f32.gmra.mrb[0].mxu0 %v2273
        %v2418 = vpop.f32.mrb[0].mxu0
        %v2419 = vadd.f32 0.0, %v2418
        %v2420 = vpop.f32.mrb[0].mxu0
        %2421 = vdwg.mxu0
        %v2422 = vadd.f32 %v2254, %v2348
        %v2423 = vadd.f32 %v2255, %v2350
        %v2424 = vadd.f32 %v2256, %v2419
        %v2425 = vld [vmem:[%s353] sm:$0xff]
        %v2426 = vld [vmem:[%s353 + $0x8] sm:$0xf]
        %s2427 = scalar_lea.vmem [#allocation8], 96
        %v2428 = vld [vmem:[%s2427] sm:$0xff]
        %v2431 = vcombine.high %v2425, %v2425
        %2432 = vrot.lane.b32.xlu0 %v2425, 108
        %v2433 = vpop.permute.xlu0 %2432
        %2434 = vrot.lane.b32.xlu0 %v2431, 108
        %v2435 = vpop.permute.xlu0 %2434
        %2436 = vrot.lane.b32.xlu0 %v2426, 108
        %v2437 = vpop.permute.xlu0 %2436
        %v2438 = vsel %vm916, %v2433, %v2435
        %v2439 = vsel %vm916, %v2435, %v2437
        %v2441 = vsel %vm432, %v2428, 0
        %v2443 = vsel %vm436, %v2438, 0
        %v2445 = vsel %vm436, %v2439, 0
        %v2447 = vsel %vm436, %v2437, 0
        %2449 = vmatprep.subr.mxu0 %v2445
        %2450 = vmatpush1.msra.mxu0 %v2443
        %2451 = vmatprep.subr.mxu0 0.0
        %2452 = vmatpush1.msra.mxu0 0.0
        %2453 = vmatprep.subr.mxu0 0.0
        %2454 = vmatpush1.msra.mxu0 0.0
        %2455 = vmatprep.subr.mxu0 0.0
        %2456 = vmatpush1.msra.mxu0 0.0
        %2457 = vmatprep.subr.mxu0 0.0
        %2458 = vmatpush1.msra.mxu0 0.0
        %2459 = vmatprep.subr.mxu0 0.0
        %2460 = vmatpush1.msra.mxu0 0.0
        %2461 = vmatprep.subr.mxu0 0.0
        %2462 = vmatpush1.msra.mxu0 0.0
        %2463 = vmatprep.subr.mxu0 0.0
        %2464 = vmatpush1.msra.mxu0 0.0
        %2465 = vmatprep.subr.mxu0 0.0
        %2466 = vmatpush1.msra.mxu0 0.0
        %2467 = vmatprep.subr.mxu0 0.0
        %2468 = vmatpush1.msra.mxu0 0.0
        %2469 = vmatprep.subr.mxu0 0.0
        %2470 = vmatpush1.msra.mxu0 0.0
        %2471 = vmatprep.subr.mxu0 0.0
        %2472 = vmatpush1.msra.mxu0 0.0
        %2473 = vmatprep.subr.mxu0 0.0
        %2474 = vmatpush1.msra.mxu0 0.0
        %2475 = vmatprep.subr.mxu0 0.0
        %2476 = vmatpush1.msra.mxu0 0.0
        %2477 = vmatprep.subr.mxu0 0.0
        %2478 = vmatpush1.msra.mxu0 0.0
        %2479 = vmatprep.subr.mxu0 0.0
        %2480 = vmatpush1.msra.mxu0 0.0
        %2481 = vmatprep.subr.mxu0 0.0
        %2482 = vmatpush1.msra.mxu0 0.0
        %2483 = vmatprep.subr.mxu0 0.0
        %2484 = vmatpush1.msra.mxu0 0.0
        %2485 = vmatprep.subr.mxu0 0.0
        %2486 = vmatpush1.msra.mxu0 0.0
        %2487 = vmatprep.subr.mxu0 0.0
        %2488 = vmatpush1.msra.mxu0 0.0
        %2489 = vmatprep.subr.mxu0 0.0
        %2490 = vmatpush1.msra.mxu0 0.0
        %2491 = vmatprep.subr.mxu0 0.0
        %2492 = vmatpush1.msra.mxu0 0.0
        %2493 = vmatprep.subr.mxu0 0.0
        %2494 = vmatpush1.msra.mxu0 0.0
        %2495 = vmatprep.subr.mxu0 0.0
        %2496 = vmatpush1.msra.mxu0 0.0
        %2497 = vmatprep.subr.mxu0 0.0
        %2498 = vmatpush1.msra.mxu0 0.0
        %2499 = vmatprep.subr.mxu0 0.0
        %2500 = vmatpush1.msra.mxu0 0.0
        %2501 = vmatprep.subr.mxu0 0.0
        %2502 = vmatpush1.msra.mxu0 0.0
        %2503 = vmatprep.subr.mxu0 0.0
        %2504 = vmatpush1.msra.mxu0 0.0
        %2505 = vmatprep.subr.mxu0 0.0
        %2506 = vmatpush1.msra.mxu0 0.0
        %2507 = vmatprep.subr.mxu0 0.0
        %2508 = vmatpush1.msra.mxu0 0.0
        %2509 = vmatprep.subr.mxu0 0.0
        %2510 = vmatpush1.msra.mxu0 0.0
        %2511 = vmatprep.subr.mxu0 0.0
        %2512 = vmatpush1.msra.mxu0 0.0
        %2513 = vmatprep.mubr.f32.mxu0 0.0
        %2514 = vmatmul.mubr.f32.gmra.mrb[0].mxu0 %v2441
        %v2515 = vpop.f32.mrb[0].mxu0
        %v2516 = vadd.f32 0.0, %v2515
        %v2517 = vpop.f32.mrb[0].mxu0
        %v2518 = vadd.f32 0.0, %v2517
        %2519 = vdwg.mxu0
        %2520 = vmatprep.subr.mxu0 0.0
        %2521 = vmatpush1.msra.mxu0 %v2447
        %2522 = vmatprep.subr.mxu0 0.0
        %2523 = vmatpush1.msra.mxu0 0.0
        %2524 = vmatprep.subr.mxu0 0.0
        %2525 = vmatpush1.msra.mxu0 0.0
        %2526 = vmatprep.subr.mxu0 0.0
        %2527 = vmatpush1.msra.mxu0 0.0
        %2528 = vmatprep.subr.mxu0 0.0
        %2529 = vmatpush1.msra.mxu0 0.0
        %2530 = vmatprep.subr.mxu0 0.0
        %2531 = vmatpush1.msra.mxu0 0.0
        %2532 = vmatprep.subr.mxu0 0.0
        %2533 = vmatpush1.msra.mxu0 0.0
        %2534 = vmatprep.subr.mxu0 0.0
        %2535 = vmatpush1.msra.mxu0 0.0
        %2536 = vmatprep.subr.mxu0 0.0
        %2537 = vmatpush1.msra.mxu0 0.0
        %2538 = vmatprep.subr.mxu0 0.0
        %2539 = vmatpush1.msra.mxu0 0.0
        %2540 = vmatprep.subr.mxu0 0.0
        %2541 = vmatpush1.msra.mxu0 0.0
        %2542 = vmatprep.subr.mxu0 0.0
        %2543 = vmatpush1.msra.mxu0 0.0
        %2544 = vmatprep.subr.mxu0 0.0
        %2545 = vmatpush1.msra.mxu0 0.0
        %2546 = vmatprep.subr.mxu0 0.0
        %2547 = vmatpush1.msra.mxu0 0.0
        %2548 = vmatprep.subr.mxu0 0.0
        %2549 = vmatpush1.msra.mxu0 0.0
        %2550 = vmatprep.subr.mxu0 0.0
        %2551 = vmatpush1.msra.mxu0 0.0
        %2552 = vmatprep.subr.mxu0 0.0
        %2553 = vmatpush1.msra.mxu0 0.0
        %2554 = vmatprep.subr.mxu0 0.0
        %2555 = vmatpush1.msra.mxu0 0.0
        %2556 = vmatprep.subr.mxu0 0.0
        %2557 = vmatpush1.msra.mxu0 0.0
        %2558 = vmatprep.subr.mxu0 0.0
        %2559 = vmatpush1.msra.mxu0 0.0
        %2560 = vmatprep.subr.mxu0 0.0
        %2561 = vmatpush1.msra.mxu0 0.0
        %2562 = vmatprep.subr.mxu0 0.0
        %2563 = vmatpush1.msra.mxu0 0.0
        %2564 = vmatprep.subr.mxu0 0.0
        %2565 = vmatpush1.msra.mxu0 0.0
        %2566 = vmatprep.subr.mxu0 0.0
        %2567 = vmatpush1.msra.mxu0 0.0
        %2568 = vmatprep.subr.mxu0 0.0
        %2569 = vmatpush1.msra.mxu0 0.0
        %2570 = vmatprep.subr.mxu0 0.0
        %2571 = vmatpush1.msra.mxu0 0.0
        %2572 = vmatprep.subr.mxu0 0.0
        %2573 = vmatpush1.msra.mxu0 0.0
        %2574 = vmatprep.subr.mxu0 0.0
        %2575 = vmatpush1.msra.mxu0 0.0
        %2576 = vmatprep.subr.mxu0 0.0
        %2577 = vmatpush1.msra.mxu0 0.0
        %2578 = vmatprep.subr.mxu0 0.0
        %2579 = vmatpush1.msra.mxu0 0.0
        %2580 = vmatprep.subr.mxu0 0.0
        %2581 = vmatpush1.msra.mxu0 0.0
        %2582 = vmatprep.subr.mxu0 0.0
        %2583 = vmatpush1.msra.mxu0 0.0
        %2584 = vmatprep.mubr.f32.mxu0 0.0
        %2585 = vmatmul.mubr.f32.gmra.mrb[0].mxu0 %v2441
        %v2586 = vpop.f32.mrb[0].mxu0
        %v2587 = vadd.f32 0.0, %v2586
        %v2588 = vpop.f32.mrb[0].mxu0
        %2589 = vdwg.mxu0
        %v2590 = vadd.f32 %v2422, %v2516
        %v2591 = vadd.f32 %v2423, %v2518
        %v2592 = vadd.f32 %v2424, %v2587
        %v2593 = vld [vmem:[%s353] sm:$0xff]
        %v2594 = vld [vmem:[%s353 + $0x8] sm:$0xf]
        %s2595 = scalar_lea.vmem [#allocation8], 104
        %v2596 = vld [vmem:[%s2595] sm:$0xff]
        %v2599 = vcombine.high %v2593, %v2593
        %2600 = vrot.lane.b32.xlu0 %v2593, 107
        %v2601 = vpop.permute.xlu0 %2600
        %2602 = vrot.lane.b32.xlu0 %v2599, 107
        %v2603 = vpop.permute.xlu0 %2602
        %2604 = vrot.lane.b32.xlu0 %v2594, 107
        %v2605 = vpop.permute.xlu0 %2604
        %v2606 = vsel %vm1085, %v2601, %v2603
        %v2607 = vsel %vm1085, %v2603, %v2605
        %v2609 = vsel %vm432, %v2596, 0
        %v2611 = vsel %vm436, %v2606, 0
        %v2613 = vsel %vm436, %v2607, 0
        %v2615 = vsel %vm436, %v2605, 0
        %2617 = vmatprep.subr.mxu0 %v2613
        %2618 = vmatpush1.msra.mxu0 %v2611
        %2619 = vmatprep.subr.mxu0 0.0
        %2620 = vmatpush1.msra.mxu0 0.0
        %2621 = vmatprep.subr.mxu0 0.0
        %2622 = vmatpush1.msra.mxu0 0.0
        %2623 = vmatprep.subr.mxu0 0.0
        %2624 = vmatpush1.msra.mxu0 0.0
        %2625 = vmatprep.subr.mxu0 0.0
        %2626 = vmatpush1.msra.mxu0 0.0
        %2627 = vmatprep.subr.mxu0 0.0
        %2628 = vmatpush1.msra.mxu0 0.0
        %2629 = vmatprep.subr.mxu0 0.0
        %2630 = vmatpush1.msra.mxu0 0.0
        %2631 = vmatprep.subr.mxu0 0.0
        %2632 = vmatpush1.msra.mxu0 0.0
        %2633 = vmatprep.subr.mxu0 0.0
        %2634 = vmatpush1.msra.mxu0 0.0
        %2635 = vmatprep.subr.mxu0 0.0
        %2636 = vmatpush1.msra.mxu0 0.0
        %2637 = vmatprep.subr.mxu0 0.0
        %2638 = vmatpush1.msra.mxu0 0.0
        %2639 = vmatprep.subr.mxu0 0.0
        %2640 = vmatpush1.msra.mxu0 0.0
        %2641 = vmatprep.subr.mxu0 0.0
        %2642 = vmatpush1.msra.mxu0 0.0
        %2643 = vmatprep.subr.mxu0 0.0
        %2644 = vmatpush1.msra.mxu0 0.0
        %2645 = vmatprep.subr.mxu0 0.0
        %2646 = vmatpush1.msra.mxu0 0.0
        %2647 = vmatprep.subr.mxu0 0.0
        %2648 = vmatpush1.msra.mxu0 0.0
        %2649 = vmatprep.subr.mxu0 0.0
        %2650 = vmatpush1.msra.mxu0 0.0
        %2651 = vmatprep.subr.mxu0 0.0
        %2652 = vmatpush1.msra.mxu0 0.0
        %2653 = vmatprep.subr.mxu0 0.0
        %2654 = vmatpush1.msra.mxu0 0.0
        %2655 = vmatprep.subr.mxu0 0.0
        %2656 = vmatpush1.msra.mxu0 0.0
        %2657 = vmatprep.subr.mxu0 0.0
        %2658 = vmatpush1.msra.mxu0 0.0
        %2659 = vmatprep.subr.mxu0 0.0
        %2660 = vmatpush1.msra.mxu0 0.0
        %2661 = vmatprep.subr.mxu0 0.0
        %2662 = vmatpush1.msra.mxu0 0.0
        %2663 = vmatprep.subr.mxu0 0.0
        %2664 = vmatpush1.msra.mxu0 0.0
        %2665 = vmatprep.subr.mxu0 0.0
        %2666 = vmatpush1.msra.mxu0 0.0
        %2667 = vmatprep.subr.mxu0 0.0
        %2668 = vmatpush1.msra.mxu0 0.0
        %2669 = vmatprep.subr.mxu0 0.0
        %2670 = vmatpush1.msra.mxu0 0.0
        %2671 = vmatprep.subr.mxu0 0.0
        %2672 = vmatpush1.msra.mxu0 0.0
        %2673 = vmatprep.subr.mxu0 0.0
        %2674 = vmatpush1.msra.mxu0 0.0
        %2675 = vmatprep.subr.mxu0 0.0
        %2676 = vmatpush1.msra.mxu0 0.0
        %2677 = vmatprep.subr.mxu0 0.0
        %2678 = vmatpush1.msra.mxu0 0.0
        %2679 = vmatprep.subr.mxu0 0.0
        %2680 = vmatpush1.msra.mxu0 0.0
        %2681 = vmatprep.mubr.f32.mxu0 0.0
        %2682 = vmatmul.mubr.f32.gmra.mrb[0].mxu0 %v2609
        %v2683 = vpop.f32.mrb[0].mxu0
        %v2684 = vadd.f32 0.0, %v2683
        %v2685 = vpop.f32.mrb[0].mxu0
        %v2686 = vadd.f32 0.0, %v2685
        %2687 = vdwg.mxu0
        %2688 = vmatprep.subr.mxu0 0.0
        %2689 = vmatpush1.msra.mxu0 %v2615
        %2690 = vmatprep.subr.mxu0 0.0
        %2691 = vmatpush1.msra.mxu0 0.0
        %2692 = vmatprep.subr.mxu0 0.0
        %2693 = vmatpush1.msra.mxu0 0.0
        %2694 = vmatprep.subr.mxu0 0.0
        %2695 = vmatpush1.msra.mxu0 0.0
        %2696 = vmatprep.subr.mxu0 0.0
        %2697 = vmatpush1.msra.mxu0 0.0
        %2698 = vmatprep.subr.mxu0 0.0
        %2699 = vmatpush1.msra.mxu0 0.0
        %2700 = vmatprep.subr.mxu0 0.0
        %2701 = vmatpush1.msra.mxu0 0.0
        %2702 = vmatprep.subr.mxu0 0.0
        %2703 = vmatpush1.msra.mxu0 0.0
        %2704 = vmatprep.subr.mxu0 0.0
        %2705 = vmatpush1.msra.mxu0 0.0
        %2706 = vmatprep.subr.mxu0 0.0
        %2707 = vmatpush1.msra.mxu0 0.0
        %2708 = vmatprep.subr.mxu0 0.0
        %2709 = vmatpush1.msra.mxu0 0.0
        %2710 = vmatprep.subr.mxu0 0.0
        %2711 = vmatpush1.msra.mxu0 0.0
        %2712 = vmatprep.subr.mxu0 0.0
        %2713 = vmatpush1.msra.mxu0 0.0
        %2714 = vmatprep.subr.mxu0 0.0
        %2715 = vmatpush1.msra.mxu0 0.0
        %2716 = vmatprep.subr.mxu0 0.0
        %2717 = vmatpush1.msra.mxu0 0.0
        %2718 = vmatprep.subr.mxu0 0.0
        %2719 = vmatpush1.msra.mxu0 0.0
        %2720 = vmatprep.subr.mxu0 0.0
        %2721 = vmatpush1.msra.mxu0 0.0
        %2722 = vmatprep.subr.mxu0 0.0
        %2723 = vmatpush1.msra.mxu0 0.0
        %2724 = vmatprep.subr.mxu0 0.0
        %2725 = vmatpush1.msra.mxu0 0.0
        %2726 = vmatprep.subr.mxu0 0.0
        %2727 = vmatpush1.msra.mxu0 0.0
        %2728 = vmatprep.subr.mxu0 0.0
        %2729 = vmatpush1.msra.mxu0 0.0
        %2730 = vmatprep.subr.mxu0 0.0
        %2731 = vmatpush1.msra.mxu0 0.0
        %2732 = vmatprep.subr.mxu0 0.0
        %2733 = vmatpush1.msra.mxu0 0.0
        %2734 = vmatprep.subr.mxu0 0.0
        %2735 = vmatpush1.msra.mxu0 0.0
        %2736 = vmatprep.subr.mxu0 0.0
        %2737 = vmatpush1.msra.mxu0 0.0
        %2738 = vmatprep.subr.mxu0 0.0
        %2739 = vmatpush1.msra.mxu0 0.0
        %2740 = vmatprep.subr.mxu0 0.0
        %2741 = vmatpush1.msra.mxu0 0.0
        %2742 = vmatprep.subr.mxu0 0.0
        %2743 = vmatpush1.msra.mxu0 0.0
        %2744 = vmatprep.subr.mxu0 0.0
        %2745 = vmatpush1.msra.mxu0 0.0
        %2746 = vmatprep.subr.mxu0 0.0
        %2747 = vmatpush1.msra.mxu0 0.0
        %2748 = vmatprep.subr.mxu0 0.0
        %2749 = vmatpush1.msra.mxu0 0.0
        %2750 = vmatprep.subr.mxu0 0.0
        %2751 = vmatpush1.msra.mxu0 0.0
        %2752 = vmatprep.mubr.f32.mxu0 0.0
        %2753 = vmatmul.mubr.f32.gmra.mrb[0].mxu0 %v2609
        %v2754 = vpop.f32.mrb[0].mxu0
        %v2755 = vadd.f32 0.0, %v2754
        %v2756 = vpop.f32.mrb[0].mxu0
        %2757 = vdwg.mxu0
        %v2758 = vadd.f32 %v2590, %v2684
        %v2759 = vadd.f32 %v2591, %v2686
        %v2760 = vadd.f32 %v2592, %v2755
        %v2761 = vld [vmem:[%s353] sm:$0xff]
        %v2762 = vld [vmem:[%s353 + $0x8] sm:$0xf]
        %s2763 = scalar_lea.vmem [#allocation8], 112
        %v2764 = vld [vmem:[%s2763] sm:$0xff]
        %v2767 = vcombine.high %v2761, %v2761
        %2768 = vrot.lane.b32.xlu0 %v2761, 106
        %v2769 = vpop.permute.xlu0 %2768
        %2770 = vrot.lane.b32.xlu0 %v2767, 106
        %v2771 = vpop.permute.xlu0 %2770
        %2772 = vrot.lane.b32.xlu0 %v2762, 106
        %v2773 = vpop.permute.xlu0 %2772
        %v2774 = vsel %vm1254, %v2769, %v2771
        %v2775 = vsel %vm1254, %v2771, %v2773
        %v2777 = vsel %vm432, %v2764, 0
        %v2779 = vsel %vm436, %v2774, 0
        %v2781 = vsel %vm436, %v2775, 0
        %v2783 = vsel %vm436, %v2773, 0
        %2785 = vmatprep.subr.mxu0 %v2781
        %2786 = vmatpush1.msra.mxu0 %v2779
        %2787 = vmatprep.subr.mxu0 0.0
        %2788 = vmatpush1.msra.mxu0 0.0
        %2789 = vmatprep.subr.mxu0 0.0
        %2790 = vmatpush1.msra.mxu0 0.0
        %2791 = vmatprep.subr.mxu0 0.0
        %2792 = vmatpush1.msra.mxu0 0.0
        %2793 = vmatprep.subr.mxu0 0.0
        %2794 = vmatpush1.msra.mxu0 0.0
        %2795 = vmatprep.subr.mxu0 0.0
        %2796 = vmatpush1.msra.mxu0 0.0
        %2797 = vmatprep.subr.mxu0 0.0
        %2798 = vmatpush1.msra.mxu0 0.0
        %2799 = vmatprep.subr.mxu0 0.0
        %2800 = vmatpush1.msra.mxu0 0.0
        %2801 = vmatprep.subr.mxu0 0.0
        %2802 = vmatpush1.msra.mxu0 0.0
        %2803 = vmatprep.subr.mxu0 0.0
        %2804 = vmatpush1.msra.mxu0 0.0
        %2805 = vmatprep.subr.mxu0 0.0
        %2806 = vmatpush1.msra.mxu0 0.0
        %2807 = vmatprep.subr.mxu0 0.0
        %2808 = vmatpush1.msra.mxu0 0.0
        %2809 = vmatprep.subr.mxu0 0.0
        %2810 = vmatpush1.msra.mxu0 0.0
        %2811 = vmatprep.subr.mxu0 0.0
        %2812 = vmatpush1.msra.mxu0 0.0
        %2813 = vmatprep.subr.mxu0 0.0
        %2814 = vmatpush1.msra.mxu0 0.0
        %2815 = vmatprep.subr.mxu0 0.0
        %2816 = vmatpush1.msra.mxu0 0.0
        %2817 = vmatprep.subr.mxu0 0.0
        %2818 = vmatpush1.msra.mxu0 0.0
        %2819 = vmatprep.subr.mxu0 0.0
        %2820 = vmatpush1.msra.mxu0 0.0
        %2821 = vmatprep.subr.mxu0 0.0
        %2822 = vmatpush1.msra.mxu0 0.0
        %2823 = vmatprep.subr.mxu0 0.0
        %2824 = vmatpush1.msra.mxu0 0.0
        %2825 = vmatprep.subr.mxu0 0.0
        %2826 = vmatpush1.msra.mxu0 0.0
        %2827 = vmatprep.subr.mxu0 0.0
        %2828 = vmatpush1.msra.mxu0 0.0
        %2829 = vmatprep.subr.mxu0 0.0
        %2830 = vmatpush1.msra.mxu0 0.0
        %2831 = vmatprep.subr.mxu0 0.0
        %2832 = vmatpush1.msra.mxu0 0.0
        %2833 = vmatprep.subr.mxu0 0.0
        %2834 = vmatpush1.msra.mxu0 0.0
        %2835 = vmatprep.subr.mxu0 0.0
        %2836 = vmatpush1.msra.mxu0 0.0
        %2837 = vmatprep.subr.mxu0 0.0
        %2838 = vmatpush1.msra.mxu0 0.0
        %2839 = vmatprep.subr.mxu0 0.0
        %2840 = vmatpush1.msra.mxu0 0.0
        %2841 = vmatprep.subr.mxu0 0.0
        %2842 = vmatpush1.msra.mxu0 0.0
        %2843 = vmatprep.subr.mxu0 0.0
        %2844 = vmatpush1.msra.mxu0 0.0
        %2845 = vmatprep.subr.mxu0 0.0
        %2846 = vmatpush1.msra.mxu0 0.0
        %2847 = vmatprep.subr.mxu0 0.0
        %2848 = vmatpush1.msra.mxu0 0.0
        %2849 = vmatprep.mubr.f32.mxu0 0.0
        %2850 = vmatmul.mubr.f32.gmra.mrb[0].mxu0 %v2777
        %v2851 = vpop.f32.mrb[0].mxu0
        %v2852 = vadd.f32 0.0, %v2851
        %v2853 = vpop.f32.mrb[0].mxu0
        %v2854 = vadd.f32 0.0, %v2853
        %2855 = vdwg.mxu0
        %2856 = vmatprep.subr.mxu0 0.0
        %2857 = vmatpush1.msra.mxu0 %v2783
        %2858 = vmatprep.subr.mxu0 0.0
        %2859 = vmatpush1.msra.mxu0 0.0
        %2860 = vmatprep.subr.mxu0 0.0
        %2861 = vmatpush1.msra.mxu0 0.0
        %2862 = vmatprep.subr.mxu0 0.0
        %2863 = vmatpush1.msra.mxu0 0.0
        %2864 = vmatprep.subr.mxu0 0.0
        %2865 = vmatpush1.msra.mxu0 0.0
        %2866 = vmatprep.subr.mxu0 0.0
        %2867 = vmatpush1.msra.mxu0 0.0
        %2868 = vmatprep.subr.mxu0 0.0
        %2869 = vmatpush1.msra.mxu0 0.0
        %2870 = vmatprep.subr.mxu0 0.0
        %2871 = vmatpush1.msra.mxu0 0.0
        %2872 = vmatprep.subr.mxu0 0.0
        %2873 = vmatpush1.msra.mxu0 0.0
        %2874 = vmatprep.subr.mxu0 0.0
        %2875 = vmatpush1.msra.mxu0 0.0
        %2876 = vmatprep.subr.mxu0 0.0
        %2877 = vmatpush1.msra.mxu0 0.0
        %2878 = vmatprep.subr.mxu0 0.0
        %2879 = vmatpush1.msra.mxu0 0.0
        %2880 = vmatprep.subr.mxu0 0.0
        %2881 = vmatpush1.msra.mxu0 0.0
        %2882 = vmatprep.subr.mxu0 0.0
        %2883 = vmatpush1.msra.mxu0 0.0
        %2884 = vmatprep.subr.mxu0 0.0
        %2885 = vmatpush1.msra.mxu0 0.0
        %2886 = vmatprep.subr.mxu0 0.0
        %2887 = vmatpush1.msra.mxu0 0.0
        %2888 = vmatprep.subr.mxu0 0.0
        %2889 = vmatpush1.msra.mxu0 0.0
        %2890 = vmatprep.subr.mxu0 0.0
        %2891 = vmatpush1.msra.mxu0 0.0
        %2892 = vmatprep.subr.mxu0 0.0
        %2893 = vmatpush1.msra.mxu0 0.0
        %2894 = vmatprep.subr.mxu0 0.0
        %2895 = vmatpush1.msra.mxu0 0.0
        %2896 = vmatprep.subr.mxu0 0.0
        %2897 = vmatpush1.msra.mxu0 0.0
        %2898 = vmatprep.subr.mxu0 0.0
        %2899 = vmatpush1.msra.mxu0 0.0
        %2900 = vmatprep.subr.mxu0 0.0
        %2901 = vmatpush1.msra.mxu0 0.0
        %2902 = vmatprep.subr.mxu0 0.0
        %2903 = vmatpush1.msra.mxu0 0.0
        %2904 = vmatprep.subr.mxu0 0.0
        %2905 = vmatpush1.msra.mxu0 0.0
        %2906 = vmatprep.subr.mxu0 0.0
        %2907 = vmatpush1.msra.mxu0 0.0
        %2908 = vmatprep.subr.mxu0 0.0
        %2909 = vmatpush1.msra.mxu0 0.0
        %2910 = vmatprep.subr.mxu0 0.0
        %2911 = vmatpush1.msra.mxu0 0.0
        %2912 = vmatprep.subr.mxu0 0.0
        %2913 = vmatpush1.msra.mxu0 0.0
        %2914 = vmatprep.subr.mxu0 0.0
        %2915 = vmatpush1.msra.mxu0 0.0
        %2916 = vmatprep.subr.mxu0 0.0
        %2917 = vmatpush1.msra.mxu0 0.0
        %2918 = vmatprep.subr.mxu0 0.0
        %2919 = vmatpush1.msra.mxu0 0.0
        %2920 = vmatprep.mubr.f32.mxu0 0.0
        %2921 = vmatmul.mubr.f32.gmra.mrb[0].mxu0 %v2777
        %v2922 = vpop.f32.mrb[0].mxu0
        %v2923 = vadd.f32 0.0, %v2922
        %v2924 = vpop.f32.mrb[0].mxu0
        %2925 = vdwg.mxu0
        %v2926 = vadd.f32 %v2758, %v2852
        %v2927 = vadd.f32 %v2759, %v2854
        %v2928 = vadd.f32 %v2760, %v2923
        %v2929 = vld [vmem:[%s353] sm:$0xff]
        %v2930 = vld [vmem:[%s353 + $0x8] sm:$0xff]
        %s2931 = scalar_lea.vmem [#allocation8], 120
        %v2932 = vld [vmem:[%s2931] sm:$0xff]
        %v2935 = vcombine.high %v2929, %v2929
        %v2936 = vcombine.high %v2930, %v2930
        %2937 = vrot.lane.b32.xlu0 %v2929, 88
        %v2938 = vpop.permute.xlu0 %2937
        %2939 = vrot.lane.b32.xlu0 %v2935, 88
        %v2940 = vpop.permute.xlu0 %2939
        %2941 = vrot.lane.b32.xlu0 %v2930, 88
        %v2942 = vpop.permute.xlu0 %2941
        %2943 = vrot.lane.b32.xlu0 %v2936, 88
        %v2944 = vpop.permute.xlu0 %2943
        %v2945 = vsel %vm1426, %v2938, %v2940
        %v2946 = vsel %vm1426, %v2940, %v2942
        %v2947 = vsel %vm1426, %v2942, %v2944
        %v2949 = vsel %vm432, %v2932, 0
        %v2951 = vsel %vm436, %v2945, 0
        %v2953 = vsel %vm436, %v2946, 0
        %v2955 = vsel %vm436, %v2947, 0
        %2957 = vmatprep.subr.mxu0 %v2953
        %2958 = vmatpush1.msra.mxu0 %v2951
        %2959 = vmatprep.subr.mxu0 0.0
        %2960 = vmatpush1.msra.mxu0 0.0
        %2961 = vmatprep.subr.mxu0 0.0
        %2962 = vmatpush1.msra.mxu0 0.0
        %2963 = vmatprep.subr.mxu0 0.0
        %2964 = vmatpush1.msra.mxu0 0.0
        %2965 = vmatprep.subr.mxu0 0.0
        %2966 = vmatpush1.msra.mxu0 0.0
        %2967 = vmatprep.subr.mxu0 0.0
        %2968 = vmatpush1.msra.mxu0 0.0
        %2969 = vmatprep.subr.mxu0 0.0
        %2970 = vmatpush1.msra.mxu0 0.0
        %2971 = vmatprep.subr.mxu0 0.0
        %2972 = vmatpush1.msra.mxu0 0.0
        %2973 = vmatprep.subr.mxu0 0.0
        %2974 = vmatpush1.msra.mxu0 0.0
        %2975 = vmatprep.subr.mxu0 0.0
        %2976 = vmatpush1.msra.mxu0 0.0
        %2977 = vmatprep.subr.mxu0 0.0
        %2978 = vmatpush1.msra.mxu0 0.0
        %2979 = vmatprep.subr.mxu0 0.0
        %2980 = vmatpush1.msra.mxu0 0.0
        %2981 = vmatprep.subr.mxu0 0.0
        %2982 = vmatpush1.msra.mxu0 0.0
        %2983 = vmatprep.subr.mxu0 0.0
        %2984 = vmatpush1.msra.mxu0 0.0
        %2985 = vmatprep.subr.mxu0 0.0
        %2986 = vmatpush1.msra.mxu0 0.0
        %2987 = vmatprep.subr.mxu0 0.0
        %2988 = vmatpush1.msra.mxu0 0.0
        %2989 = vmatprep.subr.mxu0 0.0
        %2990 = vmatpush1.msra.mxu0 0.0
        %2991 = vmatprep.subr.mxu0 0.0
        %2992 = vmatpush1.msra.mxu0 0.0
        %2993 = vmatprep.subr.mxu0 0.0
        %2994 = vmatpush1.msra.mxu0 0.0
        %2995 = vmatprep.subr.mxu0 0.0
        %2996 = vmatpush1.msra.mxu0 0.0
        %2997 = vmatprep.subr.mxu0 0.0
        %2998 = vmatpush1.msra.mxu0 0.0
        %2999 = vmatprep.subr.mxu0 0.0
        %3000 = vmatpush1.msra.mxu0 0.0
        %3001 = vmatprep.subr.mxu0 0.0
        %3002 = vmatpush1.msra.mxu0 0.0
        %3003 = vmatprep.subr.mxu0 0.0
        %3004 = vmatpush1.msra.mxu0 0.0
        %3005 = vmatprep.subr.mxu0 0.0
        %3006 = vmatpush1.msra.mxu0 0.0
        %3007 = vmatprep.subr.mxu0 0.0
        %3008 = vmatpush1.msra.mxu0 0.0
        %3009 = vmatprep.subr.mxu0 0.0
        %3010 = vmatpush1.msra.mxu0 0.0
        %3011 = vmatprep.subr.mxu0 0.0
        %3012 = vmatpush1.msra.mxu0 0.0
        %3013 = vmatprep.subr.mxu0 0.0
        %3014 = vmatpush1.msra.mxu0 0.0
        %3015 = vmatprep.subr.mxu0 0.0
        %3016 = vmatpush1.msra.mxu0 0.0
        %3017 = vmatprep.subr.mxu0 0.0
        %3018 = vmatpush1.msra.mxu0 0.0
        %3019 = vmatprep.subr.mxu0 0.0
        %3020 = vmatpush1.msra.mxu0 0.0
        %3021 = vmatprep.mubr.f32.mxu0 0.0
        %3022 = vmatmul.mubr.f32.gmra.mrb[0].mxu0 %v2949
        %v3023 = vpop.f32.mrb[0].mxu0
        %v3024 = vadd.f32 0.0, %v3023
        %v3025 = vpop.f32.mrb[0].mxu0
        %v3026 = vadd.f32 0.0, %v3025
        %3027 = vdwg.mxu0
        %3028 = vmatprep.subr.mxu0 0.0
        %3029 = vmatpush1.msra.mxu0 %v2955
        %3030 = vmatprep.subr.mxu0 0.0
        %3031 = vmatpush1.msra.mxu0 0.0
        %3032 = vmatprep.subr.mxu0 0.0
        %3033 = vmatpush1.msra.mxu0 0.0
        %3034 = vmatprep.subr.mxu0 0.0
        %3035 = vmatpush1.msra.mxu0 0.0
        %3036 = vmatprep.subr.mxu0 0.0
        %3037 = vmatpush1.msra.mxu0 0.0
        %3038 = vmatprep.subr.mxu0 0.0
        %3039 = vmatpush1.msra.mxu0 0.0
        %3040 = vmatprep.subr.mxu0 0.0
        %3041 = vmatpush1.msra.mxu0 0.0
        %3042 = vmatprep.subr.mxu0 0.0
        %3043 = vmatpush1.msra.mxu0 0.0
        %3044 = vmatprep.subr.mxu0 0.0
        %3045 = vmatpush1.msra.mxu0 0.0
        %3046 = vmatprep.subr.mxu0 0.0
        %3047 = vmatpush1.msra.mxu0 0.0
        %3048 = vmatprep.subr.mxu0 0.0
        %3049 = vmatpush1.msra.mxu0 0.0
        %3050 = vmatprep.subr.mxu0 0.0
        %3051 = vmatpush1.msra.mxu0 0.0
        %3052 = vmatprep.subr.mxu0 0.0
        %3053 = vmatpush1.msra.mxu0 0.0
        %3054 = vmatprep.subr.mxu0 0.0
        %3055 = vmatpush1.msra.mxu0 0.0
        %3056 = vmatprep.subr.mxu0 0.0
        %3057 = vmatpush1.msra.mxu0 0.0
        %3058 = vmatprep.subr.mxu0 0.0
        %3059 = vmatpush1.msra.mxu0 0.0
        %3060 = vmatprep.subr.mxu0 0.0
        %3061 = vmatpush1.msra.mxu0 0.0
        %3062 = vmatprep.subr.mxu0 0.0
        %3063 = vmatpush1.msra.mxu0 0.0
        %3064 = vmatprep.subr.mxu0 0.0
        %3065 = vmatpush1.msra.mxu0 0.0
        %3066 = vmatprep.subr.mxu0 0.0
        %3067 = vmatpush1.msra.mxu0 0.0
        %3068 = vmatprep.subr.mxu0 0.0
        %3069 = vmatpush1.msra.mxu0 0.0
        %3070 = vmatprep.subr.mxu0 0.0
        %3071 = vmatpush1.msra.mxu0 0.0
        %3072 = vmatprep.subr.mxu0 0.0
        %3073 = vmatpush1.msra.mxu0 0.0
        %3074 = vmatprep.subr.mxu0 0.0
        %3075 = vmatpush1.msra.mxu0 0.0
        %3076 = vmatprep.subr.mxu0 0.0
        %3077 = vmatpush1.msra.mxu0 0.0
        %3078 = vmatprep.subr.mxu0 0.0
        %3079 = vmatpush1.msra.mxu0 0.0
        %3080 = vmatprep.subr.mxu0 0.0
        %3081 = vmatpush1.msra.mxu0 0.0
        %3082 = vmatprep.subr.mxu0 0.0
        %3083 = vmatpush1.msra.mxu0 0.0
        %3084 = vmatprep.subr.mxu0 0.0
        %3085 = vmatpush1.msra.mxu0 0.0
        %3086 = vmatprep.subr.mxu0 0.0
        %3087 = vmatpush1.msra.mxu0 0.0
        %3088 = vmatprep.subr.mxu0 0.0
        %3089 = vmatpush1.msra.mxu0 0.0
        %3090 = vmatprep.subr.mxu0 0.0
        %3091 = vmatpush1.msra.mxu0 0.0
        %3092 = vmatprep.mubr.f32.mxu0 0.0
        %3093 = vmatmul.mubr.f32.gmra.mrb[0].mxu0 %v2949
        %v3094 = vpop.f32.mrb[0].mxu0
        %v3095 = vadd.f32 0.0, %v3094
        %v3096 = vpop.f32.mrb[0].mxu0
        %3097 = vdwg.mxu0
        %v3098 = vadd.f32 %v2926, %v3024
        %v3099 = vadd.f32 %v2927, %v3026
        %v3100 = vadd.f32 %v2928, %v3095
        %v3101 = vld [vmem:[%s353] sm:$0xff]
        %v3102 = vld [vmem:[%s353 + $0x8] sm:$0xff]
        %s3103 = scalar_lea.vmem [#allocation8], 128
        %v3104 = vld [vmem:[%s3103] sm:$0xff]
        %v3107 = vcombine.high %v3101, %v3101
        %v3108 = vcombine.high %v3102, %v3102
        %3109 = vrot.lane.b32.xlu0 %v3101, 87
        %v3110 = vpop.permute.xlu0 %3109
        %3111 = vrot.lane.b32.xlu0 %v3107, 87
        %v3112 = vpop.permute.xlu0 %3111
        %3113 = vrot.lane.b32.xlu0 %v3102, 87
        %v3114 = vpop.permute.xlu0 %3113
        %3115 = vrot.lane.b32.xlu0 %v3108, 87
        %v3116 = vpop.permute.xlu0 %3115
        %v3117 = vsel %vm1599, %v3110, %v3112
        %v3118 = vsel %vm1599, %v3112, %v3114
        %v3119 = vsel %vm1599, %v3114, %v3116
        %v3121 = vsel %vm432, %v3104, 0
        %v3123 = vsel %vm436, %v3117, 0
        %v3125 = vsel %vm436, %v3118, 0
        %v3127 = vsel %vm436, %v3119, 0
        %3129 = vmatprep.subr.mxu0 %v3125
        %3130 = vmatpush1.msra.mxu0 %v3123
        %3131 = vmatprep.subr.mxu0 0.0
        %3132 = vmatpush1.msra.mxu0 0.0
        %3133 = vmatprep.subr.mxu0 0.0
        %3134 = vmatpush1.msra.mxu0 0.0
        %3135 = vmatprep.subr.mxu0 0.0
        %3136 = vmatpush1.msra.mxu0 0.0
        %3137 = vmatprep.subr.mxu0 0.0
        %3138 = vmatpush1.msra.mxu0 0.0
        %3139 = vmatprep.subr.mxu0 0.0
        %3140 = vmatpush1.msra.mxu0 0.0
        %3141 = vmatprep.subr.mxu0 0.0
        %3142 = vmatpush1.msra.mxu0 0.0
        %3143 = vmatprep.subr.mxu0 0.0
        %3144 = vmatpush1.msra.mxu0 0.0
        %3145 = vmatprep.subr.mxu0 0.0
        %3146 = vmatpush1.msra.mxu0 0.0
        %3147 = vmatprep.subr.mxu0 0.0
        %3148 = vmatpush1.msra.mxu0 0.0
        %3149 = vmatprep.subr.mxu0 0.0
        %3150 = vmatpush1.msra.mxu0 0.0
        %3151 = vmatprep.subr.mxu0 0.0
        %3152 = vmatpush1.msra.mxu0 0.0
        %3153 = vmatprep.subr.mxu0 0.0
        %3154 = vmatpush1.msra.mxu0 0.0
        %3155 = vmatprep.subr.mxu0 0.0
        %3156 = vmatpush1.msra.mxu0 0.0
        %3157 = vmatprep.subr.mxu0 0.0
        %3158 = vmatpush1.msra.mxu0 0.0
        %3159 = vmatprep.subr.mxu0 0.0
        %3160 = vmatpush1.msra.mxu0 0.0
        %3161 = vmatprep.subr.mxu0 0.0
        %3162 = vmatpush1.msra.mxu0 0.0
        %3163 = vmatprep.subr.mxu0 0.0
        %3164 = vmatpush1.msra.mxu0 0.0
        %3165 = vmatprep.subr.mxu0 0.0
        %3166 = vmatpush1.msra.mxu0 0.0
        %3167 = vmatprep.subr.mxu0 0.0
        %3168 = vmatpush1.msra.mxu0 0.0
        %3169 = vmatprep.subr.mxu0 0.0
        %3170 = vmatpush1.msra.mxu0 0.0
        %3171 = vmatprep.subr.mxu0 0.0
        %3172 = vmatpush1.msra.mxu0 0.0
        %3173 = vmatprep.subr.mxu0 0.0
        %3174 = vmatpush1.msra.mxu0 0.0
        %3175 = vmatprep.subr.mxu0 0.0
        %3176 = vmatpush1.msra.mxu0 0.0
        %3177 = vmatprep.subr.mxu0 0.0
        %3178 = vmatpush1.msra.mxu0 0.0
        %3179 = vmatprep.subr.mxu0 0.0
        %3180 = vmatpush1.msra.mxu0 0.0
        %3181 = vmatprep.subr.mxu0 0.0
        %3182 = vmatpush1.msra.mxu0 0.0
        %3183 = vmatprep.subr.mxu0 0.0
        %3184 = vmatpush1.msra.mxu0 0.0
        %3185 = vmatprep.subr.mxu0 0.0
        %3186 = vmatpush1.msra.mxu0 0.0
        %3187 = vmatprep.subr.mxu0 0.0
        %3188 = vmatpush1.msra.mxu0 0.0
        %3189 = vmatprep.subr.mxu0 0.0
        %3190 = vmatpush1.msra.mxu0 0.0
        %3191 = vmatprep.subr.mxu0 0.0
        %3192 = vmatpush1.msra.mxu0 0.0
        %3193 = vmatprep.mubr.f32.mxu0 0.0
        %3194 = vmatmul.mubr.f32.gmra.mrb[0].mxu0 %v3121
        %v3195 = vpop.f32.mrb[0].mxu0
        %v3196 = vadd.f32 0.0, %v3195
        %v3197 = vpop.f32.mrb[0].mxu0
        %v3198 = vadd.f32 0.0, %v3197
        %3199 = vdwg.mxu0
        %3200 = vmatprep.subr.mxu0 0.0
        %3201 = vmatpush1.msra.mxu0 %v3127
        %3202 = vmatprep.subr.mxu0 0.0
        %3203 = vmatpush1.msra.mxu0 0.0
        %3204 = vmatprep.subr.mxu0 0.0
        %3205 = vmatpush1.msra.mxu0 0.0
        %3206 = vmatprep.subr.mxu0 0.0
        %3207 = vmatpush1.msra.mxu0 0.0
        %3208 = vmatprep.subr.mxu0 0.0
        %3209 = vmatpush1.msra.mxu0 0.0
        %3210 = vmatprep.subr.mxu0 0.0
        %3211 = vmatpush1.msra.mxu0 0.0
        %3212 = vmatprep.subr.mxu0 0.0
        %3213 = vmatpush1.msra.mxu0 0.0
        %3214 = vmatprep.subr.mxu0 0.0
        %3215 = vmatpush1.msra.mxu0 0.0
        %3216 = vmatprep.subr.mxu0 0.0
        %3217 = vmatpush1.msra.mxu0 0.0
        %3218 = vmatprep.subr.mxu0 0.0
        %3219 = vmatpush1.msra.mxu0 0.0
        %3220 = vmatprep.subr.mxu0 0.0
        %3221 = vmatpush1.msra.mxu0 0.0
        %3222 = vmatprep.subr.mxu0 0.0
        %3223 = vmatpush1.msra.mxu0 0.0
        %3224 = vmatprep.subr.mxu0 0.0
        %3225 = vmatpush1.msra.mxu0 0.0
        %3226 = vmatprep.subr.mxu0 0.0
        %3227 = vmatpush1.msra.mxu0 0.0
        %3228 = vmatprep.subr.mxu0 0.0
        %3229 = vmatpush1.msra.mxu0 0.0
        %3230 = vmatprep.subr.mxu0 0.0
        %3231 = vmatpush1.msra.mxu0 0.0
        %3232 = vmatprep.subr.mxu0 0.0
        %3233 = vmatpush1.msra.mxu0 0.0
        %3234 = vmatprep.subr.mxu0 0.0
        %3235 = vmatpush1.msra.mxu0 0.0
        %3236 = vmatprep.subr.mxu0 0.0
        %3237 = vmatpush1.msra.mxu0 0.0
        %3238 = vmatprep.subr.mxu0 0.0
        %3239 = vmatpush1.msra.mxu0 0.0
        %3240 = vmatprep.subr.mxu0 0.0
        %3241 = vmatpush1.msra.mxu0 0.0
        %3242 = vmatprep.subr.mxu0 0.0
        %3243 = vmatpush1.msra.mxu0 0.0
        %3244 = vmatprep.subr.mxu0 0.0
        %3245 = vmatpush1.msra.mxu0 0.0
        %3246 = vmatprep.subr.mxu0 0.0
        %3247 = vmatpush1.msra.mxu0 0.0
        %3248 = vmatprep.subr.mxu0 0.0
        %3249 = vmatpush1.msra.mxu0 0.0
        %3250 = vmatprep.subr.mxu0 0.0
        %3251 = vmatpush1.msra.mxu0 0.0
        %3252 = vmatprep.subr.mxu0 0.0
        %3253 = vmatpush1.msra.mxu0 0.0
        %3254 = vmatprep.subr.mxu0 0.0
        %3255 = vmatpush1.msra.mxu0 0.0
        %3256 = vmatprep.subr.mxu0 0.0
        %3257 = vmatpush1.msra.mxu0 0.0
        %3258 = vmatprep.subr.mxu0 0.0
        %3259 = vmatpush1.msra.mxu0 0.0
        %3260 = vmatprep.subr.mxu0 0.0
        %3261 = vmatpush1.msra.mxu0 0.0
        %3262 = vmatprep.subr.mxu0 0.0
        %3263 = vmatpush1.msra.mxu0 0.0
        %3264 = vmatprep.mubr.f32.mxu0 0.0
        %3265 = vmatmul.mubr.f32.gmra.mrb[0].mxu0 %v3121
        %v3266 = vpop.f32.mrb[0].mxu0
        %v3267 = vadd.f32 0.0, %v3266
        %v3268 = vpop.f32.mrb[0].mxu0
        %3269 = vdwg.mxu0
        %v3270 = vadd.f32 %v3098, %v3196
        %v3271 = vadd.f32 %v3099, %v3198
        %v3272 = vadd.f32 %v3100, %v3267
        %v3273 = vld [vmem:[%s353] sm:$0xff]
        %v3274 = vld [vmem:[%s353 + $0x8] sm:$0xff]
        %s3275 = scalar_lea.vmem [#allocation8], 136
        %v3276 = vld [vmem:[%s3275] sm:$0xff]
        %v3279 = vcombine.high %v3273, %v3273
        %v3280 = vcombine.high %v3274, %v3274
        %3281 = vrot.lane.b32.xlu0 %v3273, 86
        %v3282 = vpop.permute.xlu0 %3281
        %3283 = vrot.lane.b32.xlu0 %v3279, 86
        %v3284 = vpop.permute.xlu0 %3283
        %3285 = vrot.lane.b32.xlu0 %v3274, 86
        %v3286 = vpop.permute.xlu0 %3285
        %3287 = vrot.lane.b32.xlu0 %v3280, 86
        %v3288 = vpop.permute.xlu0 %3287
        %v3289 = vsel %vm1772, %v3282, %v3284
        %v3290 = vsel %vm1772, %v3284, %v3286
        %v3291 = vsel %vm1772, %v3286, %v3288
        %v3293 = vsel %vm432, %v3276, 0
        %v3295 = vsel %vm436, %v3289, 0
        %v3297 = vsel %vm436, %v3290, 0
        %v3299 = vsel %vm436, %v3291, 0
        %3301 = vmatprep.subr.mxu0 %v3297
        %3302 = vmatpush1.msra.mxu0 %v3295
        %3303 = vmatprep.subr.mxu0 0.0
        %3304 = vmatpush1.msra.mxu0 0.0
        %3305 = vmatprep.subr.mxu0 0.0
        %3306 = vmatpush1.msra.mxu0 0.0
        %3307 = vmatprep.subr.mxu0 0.0
        %3308 = vmatpush1.msra.mxu0 0.0
        %3309 = vmatprep.subr.mxu0 0.0
        %3310 = vmatpush1.msra.mxu0 0.0
        %3311 = vmatprep.subr.mxu0 0.0
        %3312 = vmatpush1.msra.mxu0 0.0
        %3313 = vmatprep.subr.mxu0 0.0
        %3314 = vmatpush1.msra.mxu0 0.0
        %3315 = vmatprep.subr.mxu0 0.0
        %3316 = vmatpush1.msra.mxu0 0.0
        %3317 = vmatprep.subr.mxu0 0.0
        %3318 = vmatpush1.msra.mxu0 0.0
        %3319 = vmatprep.subr.mxu0 0.0
        %3320 = vmatpush1.msra.mxu0 0.0
        %3321 = vmatprep.subr.mxu0 0.0
        %3322 = vmatpush1.msra.mxu0 0.0
        %3323 = vmatprep.subr.mxu0 0.0
        %3324 = vmatpush1.msra.mxu0 0.0
        %3325 = vmatprep.subr.mxu0 0.0
        %3326 = vmatpush1.msra.mxu0 0.0
        %3327 = vmatprep.subr.mxu0 0.0
        %3328 = vmatpush1.msra.mxu0 0.0
        %3329 = vmatprep.subr.mxu0 0.0
        %3330 = vmatpush1.msra.mxu0 0.0
        %3331 = vmatprep.subr.mxu0 0.0
        %3332 = vmatpush1.msra.mxu0 0.0
        %3333 = vmatprep.subr.mxu0 0.0
        %3334 = vmatpush1.msra.mxu0 0.0
        %3335 = vmatprep.subr.mxu0 0.0
        %3336 = vmatpush1.msra.mxu0 0.0
        %3337 = vmatprep.subr.mxu0 0.0
        %3338 = vmatpush1.msra.mxu0 0.0
        %3339 = vmatprep.subr.mxu0 0.0
        %3340 = vmatpush1.msra.mxu0 0.0
        %3341 = vmatprep.subr.mxu0 0.0
        %3342 = vmatpush1.msra.mxu0 0.0
        %3343 = vmatprep.subr.mxu0 0.0
        %3344 = vmatpush1.msra.mxu0 0.0
        %3345 = vmatprep.subr.mxu0 0.0
        %3346 = vmatpush1.msra.mxu0 0.0
        %3347 = vmatprep.subr.mxu0 0.0
        %3348 = vmatpush1.msra.mxu0 0.0
        %3349 = vmatprep.subr.mxu0 0.0
        %3350 = vmatpush1.msra.mxu0 0.0
        %3351 = vmatprep.subr.mxu0 0.0
        %3352 = vmatpush1.msra.mxu0 0.0
        %3353 = vmatprep.subr.mxu0 0.0
        %3354 = vmatpush1.msra.mxu0 0.0
        %3355 = vmatprep.subr.mxu0 0.0
        %3356 = vmatpush1.msra.mxu0 0.0
        %3357 = vmatprep.subr.mxu0 0.0
        %3358 = vmatpush1.msra.mxu0 0.0
        %3359 = vmatprep.subr.mxu0 0.0
        %3360 = vmatpush1.msra.mxu0 0.0
        %3361 = vmatprep.subr.mxu0 0.0
        %3362 = vmatpush1.msra.mxu0 0.0
        %3363 = vmatprep.subr.mxu0 0.0
        %3364 = vmatpush1.msra.mxu0 0.0
        %3365 = vmatprep.mubr.f32.mxu0 0.0
        %3366 = vmatmul.mubr.f32.gmra.mrb[0].mxu0 %v3293
        %v3367 = vpop.f32.mrb[0].mxu0
        %v3368 = vadd.f32 0.0, %v3367
        %v3369 = vpop.f32.mrb[0].mxu0
        %v3370 = vadd.f32 0.0, %v3369
        %3371 = vdwg.mxu0
        %3372 = vmatprep.subr.mxu0 0.0
        %3373 = vmatpush1.msra.mxu0 %v3299
        %3374 = vmatprep.subr.mxu0 0.0
        %3375 = vmatpush1.msra.mxu0 0.0
        %3376 = vmatprep.subr.mxu0 0.0
        %3377 = vmatpush1.msra.mxu0 0.0
        %3378 = vmatprep.subr.mxu0 0.0
        %3379 = vmatpush1.msra.mxu0 0.0
        %3380 = vmatprep.subr.mxu0 0.0
        %3381 = vmatpush1.msra.mxu0 0.0
        %3382 = vmatprep.subr.mxu0 0.0
        %3383 = vmatpush1.msra.mxu0 0.0
        %3384 = vmatprep.subr.mxu0 0.0
        %3385 = vmatpush1.msra.mxu0 0.0
        %3386 = vmatprep.subr.mxu0 0.0
        %3387 = vmatpush1.msra.mxu0 0.0
        %3388 = vmatprep.subr.mxu0 0.0
        %3389 = vmatpush1.msra.mxu0 0.0
        %3390 = vmatprep.subr.mxu0 0.0
        %3391 = vmatpush1.msra.mxu0 0.0
        %3392 = vmatprep.subr.mxu0 0.0
        %3393 = vmatpush1.msra.mxu0 0.0
        %3394 = vmatprep.subr.mxu0 0.0
        %3395 = vmatpush1.msra.mxu0 0.0
        %3396 = vmatprep.subr.mxu0 0.0
        %3397 = vmatpush1.msra.mxu0 0.0
        %3398 = vmatprep.subr.mxu0 0.0
        %3399 = vmatpush1.msra.mxu0 0.0
        %3400 = vmatprep.subr.mxu0 0.0
        %3401 = vmatpush1.msra.mxu0 0.0
        %3402 = vmatprep.subr.mxu0 0.0
        %3403 = vmatpush1.msra.mxu0 0.0
        %3404 = vmatprep.subr.mxu0 0.0
        %3405 = vmatpush1.msra.mxu0 0.0
        %3406 = vmatprep.subr.mxu0 0.0
        %3407 = vmatpush1.msra.mxu0 0.0
        %3408 = vmatprep.subr.mxu0 0.0
        %3409 = vmatpush1.msra.mxu0 0.0
        %3410 = vmatprep.subr.mxu0 0.0
        %3411 = vmatpush1.msra.mxu0 0.0
        %3412 = vmatprep.subr.mxu0 0.0
        %3413 = vmatpush1.msra.mxu0 0.0
        %3414 = vmatprep.subr.mxu0 0.0
        %3415 = vmatpush1.msra.mxu0 0.0
        %3416 = vmatprep.subr.mxu0 0.0
        %3417 = vmatpush1.msra.mxu0 0.0
        %3418 = vmatprep.subr.mxu0 0.0
        %3419 = vmatpush1.msra.mxu0 0.0
        %3420 = vmatprep.subr.mxu0 0.0
        %3421 = vmatpush1.msra.mxu0 0.0
        %3422 = vmatprep.subr.mxu0 0.0
        %3423 = vmatpush1.msra.mxu0 0.0
        %3424 = vmatprep.subr.mxu0 0.0
        %3425 = vmatpush1.msra.mxu0 0.0
        %3426 = vmatprep.subr.mxu0 0.0
        %3427 = vmatpush1.msra.mxu0 0.0
        %3428 = vmatprep.subr.mxu0 0.0
        %3429 = vmatpush1.msra.mxu0 0.0
        %3430 = vmatprep.subr.mxu0 0.0
        %3431 = vmatpush1.msra.mxu0 0.0
        %3432 = vmatprep.subr.mxu0 0.0
        %3433 = vmatpush1.msra.mxu0 0.0
        %3434 = vmatprep.subr.mxu0 0.0
        %3435 = vmatpush1.msra.mxu0 0.0
        %3436 = vmatprep.mubr.f32.mxu0 0.0
        %3437 = vmatmul.mubr.f32.gmra.mrb[0].mxu0 %v3293
        %v3438 = vpop.f32.mrb[0].mxu0
        %v3439 = vadd.f32 0.0, %v3438
        %v3440 = vpop.f32.mrb[0].mxu0
        %3441 = vdwg.mxu0
        %v3442 = vadd.f32 %v3270, %v3368
        %v3443 = vadd.f32 %v3271, %v3370
        %v3444 = vadd.f32 %v3272, %v3439
        %v3445 = vld [vmem:[%s362] sm:$0xff]
        %v3446 = vld [vmem:[%s362 + $0x8] sm:$0xf]
        %s3447 = scalar_lea.vmem [#allocation8], 144
        %v3448 = vld [vmem:[%s3447] sm:$0xff]
        %v3451 = vcombine.high %v3445, %v3445
        %v3453 = vsel %vm432, %v3448, 0
        %v3455 = vsel %vm436, %v3445, 0
        %v3457 = vsel %vm436, %v3451, 0
        %v3459 = vsel %vm436, %v3446, 0
        %3461 = vmatprep.subr.mxu0 %v3457
        %3462 = vmatpush1.msra.mxu0 %v3455
        %3463 = vmatprep.subr.mxu0 0.0
        %3464 = vmatpush1.msra.mxu0 0.0
        %3465 = vmatprep.subr.mxu0 0.0
        %3466 = vmatpush1.msra.mxu0 0.0
        %3467 = vmatprep.subr.mxu0 0.0
        %3468 = vmatpush1.msra.mxu0 0.0
        %3469 = vmatprep.subr.mxu0 0.0
        %3470 = vmatpush1.msra.mxu0 0.0
        %3471 = vmatprep.subr.mxu0 0.0
        %3472 = vmatpush1.msra.mxu0 0.0
        %3473 = vmatprep.subr.mxu0 0.0
        %3474 = vmatpush1.msra.mxu0 0.0
        %3475 = vmatprep.subr.mxu0 0.0
        %3476 = vmatpush1.msra.mxu0 0.0
        %3477 = vmatprep.subr.mxu0 0.0
        %3478 = vmatpush1.msra.mxu0 0.0
        %3479 = vmatprep.subr.mxu0 0.0
        %3480 = vmatpush1.msra.mxu0 0.0
        %3481 = vmatprep.subr.mxu0 0.0
        %3482 = vmatpush1.msra.mxu0 0.0
        %3483 = vmatprep.subr.mxu0 0.0
        %3484 = vmatpush1.msra.mxu0 0.0
        %3485 = vmatprep.subr.mxu0 0.0
        %3486 = vmatpush1.msra.mxu0 0.0
        %3487 = vmatprep.subr.mxu0 0.0
        %3488 = vmatpush1.msra.mxu0 0.0
        %3489 = vmatprep.subr.mxu0 0.0
        %3490 = vmatpush1.msra.mxu0 0.0
        %3491 = vmatprep.subr.mxu0 0.0
        %3492 = vmatpush1.msra.mxu0 0.0
        %3493 = vmatprep.subr.mxu0 0.0
        %3494 = vmatpush1.msra.mxu0 0.0
        %3495 = vmatprep.subr.mxu0 0.0
        %3496 = vmatpush1.msra.mxu0 0.0
        %3497 = vmatprep.subr.mxu0 0.0
        %3498 = vmatpush1.msra.mxu0 0.0
        %3499 = vmatprep.subr.mxu0 0.0
        %3500 = vmatpush1.msra.mxu0 0.0
        %3501 = vmatprep.subr.mxu0 0.0
        %3502 = vmatpush1.msra.mxu0 0.0
        %3503 = vmatprep.subr.mxu0 0.0
        %3504 = vmatpush1.msra.mxu0 0.0
        %3505 = vmatprep.subr.mxu0 0.0
        %3506 = vmatpush1.msra.mxu0 0.0
        %3507 = vmatprep.subr.mxu0 0.0
        %3508 = vmatpush1.msra.mxu0 0.0
        %3509 = vmatprep.subr.mxu0 0.0
        %3510 = vmatpush1.msra.mxu0 0.0
        %3511 = vmatprep.subr.mxu0 0.0
        %3512 = vmatpush1.msra.mxu0 0.0
        %3513 = vmatprep.subr.mxu0 0.0
        %3514 = vmatpush1.msra.mxu0 0.0
        %3515 = vmatprep.subr.mxu0 0.0
        %3516 = vmatpush1.msra.mxu0 0.0
        %3517 = vmatprep.subr.mxu0 0.0
        %3518 = vmatpush1.msra.mxu0 0.0
        %3519 = vmatprep.subr.mxu0 0.0
        %3520 = vmatpush1.msra.mxu0 0.0
        %3521 = vmatprep.subr.mxu0 0.0
        %3522 = vmatpush1.msra.mxu0 0.0
        %3523 = vmatprep.subr.mxu0 0.0
        %3524 = vmatpush1.msra.mxu0 0.0
        %3525 = vmatprep.mubr.f32.mxu0 0.0
        %3526 = vmatmul.mubr.f32.gmra.mrb[0].mxu0 %v3453
        %v3527 = vpop.f32.mrb[0].mxu0
        %v3528 = vadd.f32 0.0, %v3527
        %v3529 = vpop.f32.mrb[0].mxu0
        %v3530 = vadd.f32 0.0, %v3529
        %3531 = vdwg.mxu0
        %3532 = vmatprep.subr.mxu0 0.0
        %3533 = vmatpush1.msra.mxu0 %v3459
        %3534 = vmatprep.subr.mxu0 0.0
        %3535 = vmatpush1.msra.mxu0 0.0
        %3536 = vmatprep.subr.mxu0 0.0
        %3537 = vmatpush1.msra.mxu0 0.0
        %3538 = vmatprep.subr.mxu0 0.0
        %3539 = vmatpush1.msra.mxu0 0.0
        %3540 = vmatprep.subr.mxu0 0.0
        %3541 = vmatpush1.msra.mxu0 0.0
        %3542 = vmatprep.subr.mxu0 0.0
        %3543 = vmatpush1.msra.mxu0 0.0
        %3544 = vmatprep.subr.mxu0 0.0
        %3545 = vmatpush1.msra.mxu0 0.0
        %3546 = vmatprep.subr.mxu0 0.0
        %3547 = vmatpush1.msra.mxu0 0.0
        %3548 = vmatprep.subr.mxu0 0.0
        %3549 = vmatpush1.msra.mxu0 0.0
        %3550 = vmatprep.subr.mxu0 0.0
        %3551 = vmatpush1.msra.mxu0 0.0
        %3552 = vmatprep.subr.mxu0 0.0
        %3553 = vmatpush1.msra.mxu0 0.0
        %3554 = vmatprep.subr.mxu0 0.0
        %3555 = vmatpush1.msra.mxu0 0.0
        %3556 = vmatprep.subr.mxu0 0.0
        %3557 = vmatpush1.msra.mxu0 0.0
        %3558 = vmatprep.subr.mxu0 0.0
        %3559 = vmatpush1.msra.mxu0 0.0
        %3560 = vmatprep.subr.mxu0 0.0
        %3561 = vmatpush1.msra.mxu0 0.0
        %3562 = vmatprep.subr.mxu0 0.0
        %3563 = vmatpush1.msra.mxu0 0.0
        %3564 = vmatprep.subr.mxu0 0.0
        %3565 = vmatpush1.msra.mxu0 0.0
        %3566 = vmatprep.subr.mxu0 0.0
        %3567 = vmatpush1.msra.mxu0 0.0
        %3568 = vmatprep.subr.mxu0 0.0
        %3569 = vmatpush1.msra.mxu0 0.0
        %3570 = vmatprep.subr.mxu0 0.0
        %3571 = vmatpush1.msra.mxu0 0.0
        %3572 = vmatprep.subr.mxu0 0.0
        %3573 = vmatpush1.msra.mxu0 0.0
        %3574 = vmatprep.subr.mxu0 0.0
        %3575 = vmatpush1.msra.mxu0 0.0
        %3576 = vmatprep.subr.mxu0 0.0
        %3577 = vmatpush1.msra.mxu0 0.0
        %3578 = vmatprep.subr.mxu0 0.0
        %3579 = vmatpush1.msra.mxu0 0.0
        %3580 = vmatprep.subr.mxu0 0.0
        %3581 = vmatpush1.msra.mxu0 0.0
        %3582 = vmatprep.subr.mxu0 0.0
        %3583 = vmatpush1.msra.mxu0 0.0
        %3584 = vmatprep.subr.mxu0 0.0
        %3585 = vmatpush1.msra.mxu0 0.0
        %3586 = vmatprep.subr.mxu0 0.0
        %3587 = vmatpush1.msra.mxu0 0.0
        %3588 = vmatprep.subr.mxu0 0.0
        %3589 = vmatpush1.msra.mxu0 0.0
        %3590 = vmatprep.subr.mxu0 0.0
        %3591 = vmatpush1.msra.mxu0 0.0
        %3592 = vmatprep.subr.mxu0 0.0
        %3593 = vmatpush1.msra.mxu0 0.0
        %3594 = vmatprep.subr.mxu0 0.0
        %3595 = vmatpush1.msra.mxu0 0.0
        %3596 = vmatprep.mubr.f32.mxu0 0.0
        %3597 = vmatmul.mubr.f32.gmra.mrb[0].mxu0 %v3453
        %v3598 = vpop.f32.mrb[0].mxu0
        %v3599 = vadd.f32 0.0, %v3598
        %v3600 = vpop.f32.mrb[0].mxu0
        %3601 = vdwg.mxu0
        %v3602 = vadd.f32 %v3442, %v3528
        %v3603 = vadd.f32 %v3443, %v3530
        %v3604 = vadd.f32 %v3444, %v3599
        %v3605 = vld [vmem:[%s362] sm:$0xff]
        %v3606 = vld [vmem:[%s362 + $0x8] sm:$0xf]
        %s3607 = scalar_lea.vmem [#allocation8], 152
        %v3608 = vld [vmem:[%s3607] sm:$0xff]
        %v3611 = vcombine.high %v3605, %v3605
        %3612 = vrot.lane.b32.xlu0 %v3605, 127
        %v3613 = vpop.permute.xlu0 %3612
        %3614 = vrot.lane.b32.xlu0 %v3611, 127
        %v3615 = vpop.permute.xlu0 %3614
        %3616 = vrot.lane.b32.xlu0 %v3606, 127
        %v3617 = vpop.permute.xlu0 %3616
        %v3618 = vsel %vm429, %v3613, %v3615
        %v3619 = vsel %vm429, %v3615, %v3617
        %v3621 = vsel %vm432, %v3608, 0
        %v3623 = vsel %vm436, %v3618, 0
        %v3625 = vsel %vm436, %v3619, 0
        %v3627 = vsel %vm436, %v3617, 0
        %3629 = vmatprep.subr.mxu0 %v3625
        %3630 = vmatpush1.msra.mxu0 %v3623
        %3631 = vmatprep.subr.mxu0 0.0
        %3632 = vmatpush1.msra.mxu0 0.0
        %3633 = vmatprep.subr.mxu0 0.0
        %3634 = vmatpush1.msra.mxu0 0.0
        %3635 = vmatprep.subr.mxu0 0.0
        %3636 = vmatpush1.msra.mxu0 0.0
        %3637 = vmatprep.subr.mxu0 0.0
        %3638 = vmatpush1.msra.mxu0 0.0
        %3639 = vmatprep.subr.mxu0 0.0
        %3640 = vmatpush1.msra.mxu0 0.0
        %3641 = vmatprep.subr.mxu0 0.0
        %3642 = vmatpush1.msra.mxu0 0.0
        %3643 = vmatprep.subr.mxu0 0.0
        %3644 = vmatpush1.msra.mxu0 0.0
        %3645 = vmatprep.subr.mxu0 0.0
        %3646 = vmatpush1.msra.mxu0 0.0
        %3647 = vmatprep.subr.mxu0 0.0
        %3648 = vmatpush1.msra.mxu0 0.0
        %3649 = vmatprep.subr.mxu0 0.0
        %3650 = vmatpush1.msra.mxu0 0.0
        %3651 = vmatprep.subr.mxu0 0.0
        %3652 = vmatpush1.msra.mxu0 0.0
        %3653 = vmatprep.subr.mxu0 0.0
        %3654 = vmatpush1.msra.mxu0 0.0
        %3655 = vmatprep.subr.mxu0 0.0
        %3656 = vmatpush1.msra.mxu0 0.0
        %3657 = vmatprep.subr.mxu0 0.0
        %3658 = vmatpush1.msra.mxu0 0.0
        %3659 = vmatprep.subr.mxu0 0.0
        %3660 = vmatpush1.msra.mxu0 0.0
        %3661 = vmatprep.subr.mxu0 0.0
        %3662 = vmatpush1.msra.mxu0 0.0
        %3663 = vmatprep.subr.mxu0 0.0
        %3664 = vmatpush1.msra.mxu0 0.0
        %3665 = vmatprep.subr.mxu0 0.0
        %3666 = vmatpush1.msra.mxu0 0.0
        %3667 = vmatprep.subr.mxu0 0.0
        %3668 = vmatpush1.msra.mxu0 0.0
        %3669 = vmatprep.subr.mxu0 0.0
        %3670 = vmatpush1.msra.mxu0 0.0
        %3671 = vmatprep.subr.mxu0 0.0
        %3672 = vmatpush1.msra.mxu0 0.0
        %3673 = vmatprep.subr.mxu0 0.0
        %3674 = vmatpush1.msra.mxu0 0.0
        %3675 = vmatprep.subr.mxu0 0.0
        %3676 = vmatpush1.msra.mxu0 0.0
        %3677 = vmatprep.subr.mxu0 0.0
        %3678 = vmatpush1.msra.mxu0 0.0
        %3679 = vmatprep.subr.mxu0 0.0
        %3680 = vmatpush1.msra.mxu0 0.0
        %3681 = vmatprep.subr.mxu0 0.0
        %3682 = vmatpush1.msra.mxu0 0.0
        %3683 = vmatprep.subr.mxu0 0.0
        %3684 = vmatpush1.msra.mxu0 0.0
        %3685 = vmatprep.subr.mxu0 0.0
        %3686 = vmatpush1.msra.mxu0 0.0
        %3687 = vmatprep.subr.mxu0 0.0
        %3688 = vmatpush1.msra.mxu0 0.0
        %3689 = vmatprep.subr.mxu0 0.0
        %3690 = vmatpush1.msra.mxu0 0.0
        %3691 = vmatprep.subr.mxu0 0.0
        %3692 = vmatpush1.msra.mxu0 0.0
        %3693 = vmatprep.mubr.f32.mxu0 0.0
        %3694 = vmatmul.mubr.f32.gmra.mrb[0].mxu0 %v3621
        %v3695 = vpop.f32.mrb[0].mxu0
        %v3696 = vadd.f32 0.0, %v3695
        %v3697 = vpop.f32.mrb[0].mxu0
        %v3698 = vadd.f32 0.0, %v3697
        %3699 = vdwg.mxu0
        %3700 = vmatprep.subr.mxu0 0.0
        %3701 = vmatpush1.msra.mxu0 %v3627
        %3702 = vmatprep.subr.mxu0 0.0
        %3703 = vmatpush1.msra.mxu0 0.0
        %3704 = vmatprep.subr.mxu0 0.0
        %3705 = vmatpush1.msra.mxu0 0.0
        %3706 = vmatprep.subr.mxu0 0.0
        %3707 = vmatpush1.msra.mxu0 0.0
        %3708 = vmatprep.subr.mxu0 0.0
        %3709 = vmatpush1.msra.mxu0 0.0
        %3710 = vmatprep.subr.mxu0 0.0
        %3711 = vmatpush1.msra.mxu0 0.0
        %3712 = vmatprep.subr.mxu0 0.0
        %3713 = vmatpush1.msra.mxu0 0.0
        %3714 = vmatprep.subr.mxu0 0.0
        %3715 = vmatpush1.msra.mxu0 0.0
        %3716 = vmatprep.subr.mxu0 0.0
        %3717 = vmatpush1.msra.mxu0 0.0
        %3718 = vmatprep.subr.mxu0 0.0
        %3719 = vmatpush1.msra.mxu0 0.0
        %3720 = vmatprep.subr.mxu0 0.0
        %3721 = vmatpush1.msra.mxu0 0.0
        %3722 = vmatprep.subr.mxu0 0.0
        %3723 = vmatpush1.msra.mxu0 0.0
        %3724 = vmatprep.subr.mxu0 0.0
        %3725 = vmatpush1.msra.mxu0 0.0
        %3726 = vmatprep.subr.mxu0 0.0
        %3727 = vmatpush1.msra.mxu0 0.0
        %3728 = vmatprep.subr.mxu0 0.0
        %3729 = vmatpush1.msra.mxu0 0.0
        %3730 = vmatprep.subr.mxu0 0.0
        %3731 = vmatpush1.msra.mxu0 0.0
        %3732 = vmatprep.subr.mxu0 0.0
        %3733 = vmatpush1.msra.mxu0 0.0
        %3734 = vmatprep.subr.mxu0 0.0
        %3735 = vmatpush1.msra.mxu0 0.0
        %3736 = vmatprep.subr.mxu0 0.0
        %3737 = vmatpush1.msra.mxu0 0.0
        %3738 = vmatprep.subr.mxu0 0.0
        %3739 = vmatpush1.msra.mxu0 0.0
        %3740 = vmatprep.subr.mxu0 0.0
        %3741 = vmatpush1.msra.mxu0 0.0
        %3742 = vmatprep.subr.mxu0 0.0
        %3743 = vmatpush1.msra.mxu0 0.0
        %3744 = vmatprep.subr.mxu0 0.0
        %3745 = vmatpush1.msra.mxu0 0.0
        %3746 = vmatprep.subr.mxu0 0.0
        %3747 = vmatpush1.msra.mxu0 0.0
        %3748 = vmatprep.subr.mxu0 0.0
        %3749 = vmatpush1.msra.mxu0 0.0
        %3750 = vmatprep.subr.mxu0 0.0
        %3751 = vmatpush1.msra.mxu0 0.0
        %3752 = vmatprep.subr.mxu0 0.0
        %3753 = vmatpush1.msra.mxu0 0.0
        %3754 = vmatprep.subr.mxu0 0.0
        %3755 = vmatpush1.msra.mxu0 0.0
        %3756 = vmatprep.subr.mxu0 0.0
        %3757 = vmatpush1.msra.mxu0 0.0
        %3758 = vmatprep.subr.mxu0 0.0
        %3759 = vmatpush1.msra.mxu0 0.0
        %3760 = vmatprep.subr.mxu0 0.0
        %3761 = vmatpush1.msra.mxu0 0.0
        %3762 = vmatprep.subr.mxu0 0.0
        %3763 = vmatpush1.msra.mxu0 0.0
        %3764 = vmatprep.mubr.f32.mxu0 0.0
        %3765 = vmatmul.mubr.f32.gmra.mrb[0].mxu0 %v3621
        %v3766 = vpop.f32.mrb[0].mxu0
        %v3767 = vadd.f32 0.0, %v3766
        %v3768 = vpop.f32.mrb[0].mxu0
        %3769 = vdwg.mxu0
        %v3770 = vadd.f32 %v3602, %v3696
        %v3771 = vadd.f32 %v3603, %v3698
        %v3772 = vadd.f32 %v3604, %v3767
        %v3773 = vld [vmem:[%s362] sm:$0xff]
        %v3774 = vld [vmem:[%s362 + $0x8] sm:$0xf]
        %s3775 = scalar_lea.vmem [#allocation8], 160
        %v3776 = vld [vmem:[%s3775] sm:$0xff]
        %v3779 = vcombine.high %v3773, %v3773
        %3780 = vrot.lane.b32.xlu0 %v3773, 126
        %v3781 = vpop.permute.xlu0 %3780
        %3782 = vrot.lane.b32.xlu0 %v3779, 126
        %v3783 = vpop.permute.xlu0 %3782
        %3784 = vrot.lane.b32.xlu0 %v3774, 126
        %v3785 = vpop.permute.xlu0 %3784
        %v3786 = vsel %vm747, %v3781, %v3783
        %v3787 = vsel %vm747, %v3783, %v3785
        %v3789 = vsel %vm432, %v3776, 0
        %v3791 = vsel %vm436, %v3786, 0
        %v3793 = vsel %vm436, %v3787, 0
        %v3795 = vsel %vm436, %v3785, 0
        %3797 = vmatprep.subr.mxu0 %v3793
        %3798 = vmatpush1.msra.mxu0 %v3791
        %3799 = vmatprep.subr.mxu0 0.0
        %3800 = vmatpush1.msra.mxu0 0.0
        %3801 = vmatprep.subr.mxu0 0.0
        %3802 = vmatpush1.msra.mxu0 0.0
        %3803 = vmatprep.subr.mxu0 0.0
        %3804 = vmatpush1.msra.mxu0 0.0
        %3805 = vmatprep.subr.mxu0 0.0
        %3806 = vmatpush1.msra.mxu0 0.0
        %3807 = vmatprep.subr.mxu0 0.0
        %3808 = vmatpush1.msra.mxu0 0.0
        %3809 = vmatprep.subr.mxu0 0.0
        %3810 = vmatpush1.msra.mxu0 0.0
        %3811 = vmatprep.subr.mxu0 0.0
        %3812 = vmatpush1.msra.mxu0 0.0
        %3813 = vmatprep.subr.mxu0 0.0
        %3814 = vmatpush1.msra.mxu0 0.0
        %3815 = vmatprep.subr.mxu0 0.0
        %3816 = vmatpush1.msra.mxu0 0.0
        %3817 = vmatprep.subr.mxu0 0.0
        %3818 = vmatpush1.msra.mxu0 0.0
        %3819 = vmatprep.subr.mxu0 0.0
        %3820 = vmatpush1.msra.mxu0 0.0
        %3821 = vmatprep.subr.mxu0 0.0
        %3822 = vmatpush1.msra.mxu0 0.0
        %3823 = vmatprep.subr.mxu0 0.0
        %3824 = vmatpush1.msra.mxu0 0.0
        %3825 = vmatprep.subr.mxu0 0.0
        %3826 = vmatpush1.msra.mxu0 0.0
        %3827 = vmatprep.subr.mxu0 0.0
        %3828 = vmatpush1.msra.mxu0 0.0
        %3829 = vmatprep.subr.mxu0 0.0
        %3830 = vmatpush1.msra.mxu0 0.0
        %3831 = vmatprep.subr.mxu0 0.0
        %3832 = vmatpush1.msra.mxu0 0.0
        %3833 = vmatprep.subr.mxu0 0.0
        %3834 = vmatpush1.msra.mxu0 0.0
        %3835 = vmatprep.subr.mxu0 0.0
        %3836 = vmatpush1.msra.mxu0 0.0
        %3837 = vmatprep.subr.mxu0 0.0
        %3838 = vmatpush1.msra.mxu0 0.0
        %3839 = vmatprep.subr.mxu0 0.0
        %3840 = vmatpush1.msra.mxu0 0.0
        %3841 = vmatprep.subr.mxu0 0.0
        %3842 = vmatpush1.msra.mxu0 0.0
        %3843 = vmatprep.subr.mxu0 0.0
        %3844 = vmatpush1.msra.mxu0 0.0
        %3845 = vmatprep.subr.mxu0 0.0
        %3846 = vmatpush1.msra.mxu0 0.0
        %3847 = vmatprep.subr.mxu0 0.0
        %3848 = vmatpush1.msra.mxu0 0.0
        %3849 = vmatprep.subr.mxu0 0.0
        %3850 = vmatpush1.msra.mxu0 0.0
        %3851 = vmatprep.subr.mxu0 0.0
        %3852 = vmatpush1.msra.mxu0 0.0
        %3853 = vmatprep.subr.mxu0 0.0
        %3854 = vmatpush1.msra.mxu0 0.0
        %3855 = vmatprep.subr.mxu0 0.0
        %3856 = vmatpush1.msra.mxu0 0.0
        %3857 = vmatprep.subr.mxu0 0.0
        %3858 = vmatpush1.msra.mxu0 0.0
        %3859 = vmatprep.subr.mxu0 0.0
        %3860 = vmatpush1.msra.mxu0 0.0
        %3861 = vmatprep.mubr.f32.mxu0 0.0
        %3862 = vmatmul.mubr.f32.gmra.mrb[0].mxu0 %v3789
        %v3863 = vpop.f32.mrb[0].mxu0
        %v3864 = vadd.f32 0.0, %v3863
        %v3865 = vpop.f32.mrb[0].mxu0
        %v3866 = vadd.f32 0.0, %v3865
        %3867 = vdwg.mxu0
        %3868 = vmatprep.subr.mxu0 0.0
        %3869 = vmatpush1.msra.mxu0 %v3795
        %3870 = vmatprep.subr.mxu0 0.0
        %3871 = vmatpush1.msra.mxu0 0.0
        %3872 = vmatprep.subr.mxu0 0.0
        %3873 = vmatpush1.msra.mxu0 0.0
        %3874 = vmatprep.subr.mxu0 0.0
        %3875 = vmatpush1.msra.mxu0 0.0
        %3876 = vmatprep.subr.mxu0 0.0
        %3877 = vmatpush1.msra.mxu0 0.0
        %3878 = vmatprep.subr.mxu0 0.0
        %3879 = vmatpush1.msra.mxu0 0.0
        %3880 = vmatprep.subr.mxu0 0.0
        %3881 = vmatpush1.msra.mxu0 0.0
        %3882 = vmatprep.subr.mxu0 0.0
        %3883 = vmatpush1.msra.mxu0 0.0
        %3884 = vmatprep.subr.mxu0 0.0
        %3885 = vmatpush1.msra.mxu0 0.0
        %3886 = vmatprep.subr.mxu0 0.0
        %3887 = vmatpush1.msra.mxu0 0.0
        %3888 = vmatprep.subr.mxu0 0.0
        %3889 = vmatpush1.msra.mxu0 0.0
        %3890 = vmatprep.subr.mxu0 0.0
        %3891 = vmatpush1.msra.mxu0 0.0
        %3892 = vmatprep.subr.mxu0 0.0
        %3893 = vmatpush1.msra.mxu0 0.0
        %3894 = vmatprep.subr.mxu0 0.0
        %3895 = vmatpush1.msra.mxu0 0.0
        %3896 = vmatprep.subr.mxu0 0.0
        %3897 = vmatpush1.msra.mxu0 0.0
        %3898 = vmatprep.subr.mxu0 0.0
        %3899 = vmatpush1.msra.mxu0 0.0
        %3900 = vmatprep.subr.mxu0 0.0
        %3901 = vmatpush1.msra.mxu0 0.0
        %3902 = vmatprep.subr.mxu0 0.0
        %3903 = vmatpush1.msra.mxu0 0.0
        %3904 = vmatprep.subr.mxu0 0.0
        %3905 = vmatpush1.msra.mxu0 0.0
        %3906 = vmatprep.subr.mxu0 0.0
        %3907 = vmatpush1.msra.mxu0 0.0
        %3908 = vmatprep.subr.mxu0 0.0
        %3909 = vmatpush1.msra.mxu0 0.0
        %3910 = vmatprep.subr.mxu0 0.0
        %3911 = vmatpush1.msra.mxu0 0.0
        %3912 = vmatprep.subr.mxu0 0.0
        %3913 = vmatpush1.msra.mxu0 0.0
        %3914 = vmatprep.subr.mxu0 0.0
        %3915 = vmatpush1.msra.mxu0 0.0
        %3916 = vmatprep.subr.mxu0 0.0
        %3917 = vmatpush1.msra.mxu0 0.0
        %3918 = vmatprep.subr.mxu0 0.0
        %3919 = vmatpush1.msra.mxu0 0.0
        %3920 = vmatprep.subr.mxu0 0.0
        %3921 = vmatpush1.msra.mxu0 0.0
        %3922 = vmatprep.subr.mxu0 0.0
        %3923 = vmatpush1.msra.mxu0 0.0
        %3924 = vmatprep.subr.mxu0 0.0
        %3925 = vmatpush1.msra.mxu0 0.0
        %3926 = vmatprep.subr.mxu0 0.0
        %3927 = vmatpush1.msra.mxu0 0.0
        %3928 = vmatprep.subr.mxu0 0.0
        %3929 = vmatpush1.msra.mxu0 0.0
        %3930 = vmatprep.subr.mxu0 0.0
        %3931 = vmatpush1.msra.mxu0 0.0
        %3932 = vmatprep.mubr.f32.mxu0 0.0
        %3933 = vmatmul.mubr.f32.gmra.mrb[0].mxu0 %v3789
        %v3934 = vpop.f32.mrb[0].mxu0
        %v3935 = vadd.f32 0.0, %v3934
        %v3936 = vpop.f32.mrb[0].mxu0
        %3937 = vdwg.mxu0
        %v3938 = vadd.f32 %v3770, %v3864
        %v3939 = vadd.f32 %v3771, %v3866
        %v3940 = vadd.f32 %v3772, %v3935
        %v3941 = vld [vmem:[%s362] sm:$0xff]
        %v3942 = vld [vmem:[%s362 + $0x8] sm:$0xf]
        %s3943 = scalar_lea.vmem [#allocation8], 168
        %v3944 = vld [vmem:[%s3943] sm:$0xff]
        %v3947 = vcombine.high %v3941, %v3941
        %3948 = vrot.lane.b32.xlu0 %v3941, 108
        %v3949 = vpop.permute.xlu0 %3948
        %3950 = vrot.lane.b32.xlu0 %v3947, 108
        %v3951 = vpop.permute.xlu0 %3950
        %3952 = vrot.lane.b32.xlu0 %v3942, 108
        %v3953 = vpop.permute.xlu0 %3952
        %v3954 = vsel %vm916, %v3949, %v3951
        %v3955 = vsel %vm916, %v3951, %v3953
        %v3957 = vsel %vm432, %v3944, 0
        %v3959 = vsel %vm436, %v3954, 0
        %v3961 = vsel %vm436, %v3955, 0
        %v3963 = vsel %vm436, %v3953, 0
        %3965 = vmatprep.subr.mxu0 %v3961
        %3966 = vmatpush1.msra.mxu0 %v3959
        %3967 = vmatprep.subr.mxu0 0.0
        %3968 = vmatpush1.msra.mxu0 0.0
        %3969 = vmatprep.subr.mxu0 0.0
        %3970 = vmatpush1.msra.mxu0 0.0
        %3971 = vmatprep.subr.mxu0 0.0
        %3972 = vmatpush1.msra.mxu0 0.0
        %3973 = vmatprep.subr.mxu0 0.0
        %3974 = vmatpush1.msra.mxu0 0.0
        %3975 = vmatprep.subr.mxu0 0.0
        %3976 = vmatpush1.msra.mxu0 0.0
        %3977 = vmatprep.subr.mxu0 0.0
        %3978 = vmatpush1.msra.mxu0 0.0
        %3979 = vmatprep.subr.mxu0 0.0
        %3980 = vmatpush1.msra.mxu0 0.0
        %3981 = vmatprep.subr.mxu0 0.0
        %3982 = vmatpush1.msra.mxu0 0.0
        %3983 = vmatprep.subr.mxu0 0.0
        %3984 = vmatpush1.msra.mxu0 0.0
        %3985 = vmatprep.subr.mxu0 0.0
        %3986 = vmatpush1.msra.mxu0 0.0
        %3987 = vmatprep.subr.mxu0 0.0
        %3988 = vmatpush1.msra.mxu0 0.0
        %3989 = vmatprep.subr.mxu0 0.0
        %3990 = vmatpush1.msra.mxu0 0.0
        %3991 = vmatprep.subr.mxu0 0.0
        %3992 = vmatpush1.msra.mxu0 0.0
        %3993 = vmatprep.subr.mxu0 0.0
        %3994 = vmatpush1.msra.mxu0 0.0
        %3995 = vmatprep.subr.mxu0 0.0
        %3996 = vmatpush1.msra.mxu0 0.0
        %3997 = vmatprep.subr.mxu0 0.0
        %3998 = vmatpush1.msra.mxu0 0.0
        %3999 = vmatprep.subr.mxu0 0.0
        %4000 = vmatpush1.msra.mxu0 0.0
        %4001 = vmatprep.subr.mxu0 0.0
        %4002 = vmatpush1.msra.mxu0 0.0
        %4003 = vmatprep.subr.mxu0 0.0
        %4004 = vmatpush1.msra.mxu0 0.0
        %4005 = vmatprep.subr.mxu0 0.0
        %4006 = vmatpush1.msra.mxu0 0.0
        %4007 = vmatprep.subr.mxu0 0.0
        %4008 = vmatpush1.msra.mxu0 0.0
        %4009 = vmatprep.subr.mxu0 0.0
        %4010 = vmatpush1.msra.mxu0 0.0
        %4011 = vmatprep.subr.mxu0 0.0
        %4012 = vmatpush1.msra.mxu0 0.0
        %4013 = vmatprep.subr.mxu0 0.0
        %4014 = vmatpush1.msra.mxu0 0.0
        %4015 = vmatprep.subr.mxu0 0.0
        %4016 = vmatpush1.msra.mxu0 0.0
        %4017 = vmatprep.subr.mxu0 0.0
        %4018 = vmatpush1.msra.mxu0 0.0
        %4019 = vmatprep.subr.mxu0 0.0
        %4020 = vmatpush1.msra.mxu0 0.0
        %4021 = vmatprep.subr.mxu0 0.0
        %4022 = vmatpush1.msra.mxu0 0.0
        %4023 = vmatprep.subr.mxu0 0.0
        %4024 = vmatpush1.msra.mxu0 0.0
        %4025 = vmatprep.subr.mxu0 0.0
        %4026 = vmatpush1.msra.mxu0 0.0
        %4027 = vmatprep.subr.mxu0 0.0
        %4028 = vmatpush1.msra.mxu0 0.0
        %4029 = vmatprep.mubr.f32.mxu0 0.0
        %4030 = vmatmul.mubr.f32.gmra.mrb[0].mxu0 %v3957
        %v4031 = vpop.f32.mrb[0].mxu0
        %v4032 = vadd.f32 0.0, %v4031
        %v4033 = vpop.f32.mrb[0].mxu0
        %v4034 = vadd.f32 0.0, %v4033
        %4035 = vdwg.mxu0
        %4036 = vmatprep.subr.mxu0 0.0
        %4037 = vmatpush1.msra.mxu0 %v3963
        %4038 = vmatprep.subr.mxu0 0.0
        %4039 = vmatpush1.msra.mxu0 0.0
        %4040 = vmatprep.subr.mxu0 0.0
        %4041 = vmatpush1.msra.mxu0 0.0
        %4042 = vmatprep.subr.mxu0 0.0
        %4043 = vmatpush1.msra.mxu0 0.0
        %4044 = vmatprep.subr.mxu0 0.0
        %4045 = vmatpush1.msra.mxu0 0.0
        %4046 = vmatprep.subr.mxu0 0.0
        %4047 = vmatpush1.msra.mxu0 0.0
        %4048 = vmatprep.subr.mxu0 0.0
        %4049 = vmatpush1.msra.mxu0 0.0
        %4050 = vmatprep.subr.mxu0 0.0
        %4051 = vmatpush1.msra.mxu0 0.0
        %4052 = vmatprep.subr.mxu0 0.0
        %4053 = vmatpush1.msra.mxu0 0.0
        %4054 = vmatprep.subr.mxu0 0.0
        %4055 = vmatpush1.msra.mxu0 0.0
        %4056 = vmatprep.subr.mxu0 0.0
        %4057 = vmatpush1.msra.mxu0 0.0
        %4058 = vmatprep.subr.mxu0 0.0
        %4059 = vmatpush1.msra.mxu0 0.0
        %4060 = vmatprep.subr.mxu0 0.0
        %4061 = vmatpush1.msra.mxu0 0.0
        %4062 = vmatprep.subr.mxu0 0.0
        %4063 = vmatpush1.msra.mxu0 0.0
        %4064 = vmatprep.subr.mxu0 0.0
        %4065 = vmatpush1.msra.mxu0 0.0
        %4066 = vmatprep.subr.mxu0 0.0
        %4067 = vmatpush1.msra.mxu0 0.0
        %4068 = vmatprep.subr.mxu0 0.0
        %4069 = vmatpush1.msra.mxu0 0.0
        %4070 = vmatprep.subr.mxu0 0.0
        %4071 = vmatpush1.msra.mxu0 0.0
        %4072 = vmatprep.subr.mxu0 0.0
        %4073 = vmatpush1.msra.mxu0 0.0
        %4074 = vmatprep.subr.mxu0 0.0
        %4075 = vmatpush1.msra.mxu0 0.0
        %4076 = vmatprep.subr.mxu0 0.0
        %4077 = vmatpush1.msra.mxu0 0.0
        %4078 = vmatprep.subr.mxu0 0.0
        %4079 = vmatpush1.msra.mxu0 0.0
        %4080 = vmatprep.subr.mxu0 0.0
        %4081 = vmatpush1.msra.mxu0 0.0
        %4082 = vmatprep.subr.mxu0 0.0
        %4083 = vmatpush1.msra.mxu0 0.0
        %4084 = vmatprep.subr.mxu0 0.0
        %4085 = vmatpush1.msra.mxu0 0.0
        %4086 = vmatprep.subr.mxu0 0.0
        %4087 = vmatpush1.msra.mxu0 0.0
        %4088 = vmatprep.subr.mxu0 0.0
        %4089 = vmatpush1.msra.mxu0 0.0
        %4090 = vmatprep.subr.mxu0 0.0
        %4091 = vmatpush1.msra.mxu0 0.0
        %4092 = vmatprep.subr.mxu0 0.0
        %4093 = vmatpush1.msra.mxu0 0.0
        %4094 = vmatprep.subr.mxu0 0.0
        %4095 = vmatpush1.msra.mxu0 0.0
        %4096 = vmatprep.subr.mxu0 0.0
        %4097 = vmatpush1.msra.mxu0 0.0
        %4098 = vmatprep.subr.mxu0 0.0
        %4099 = vmatpush1.msra.mxu0 0.0
        %4100 = vmatprep.mubr.f32.mxu0 0.0
        %4101 = vmatmul.mubr.f32.gmra.mrb[0].mxu0 %v3957
        %v4102 = vpop.f32.mrb[0].mxu0
        %v4103 = vadd.f32 0.0, %v4102
        %v4104 = vpop.f32.mrb[0].mxu0
        %4105 = vdwg.mxu0
        %v4106 = vadd.f32 %v3938, %v4032
        %v4107 = vadd.f32 %v3939, %v4034
        %v4108 = vadd.f32 %v3940, %v4103
        %v4109 = vld [vmem:[%s362] sm:$0xff]
        %v4110 = vld [vmem:[%s362 + $0x8] sm:$0xf]
        %s4111 = scalar_lea.vmem [#allocation8], 176
        %v4112 = vld [vmem:[%s4111] sm:$0xff]
        %v4115 = vcombine.high %v4109, %v4109
        %4116 = vrot.lane.b32.xlu0 %v4109, 107
        %v4117 = vpop.permute.xlu0 %4116
        %4118 = vrot.lane.b32.xlu0 %v4115, 107
        %v4119 = vpop.permute.xlu0 %4118
        %4120 = vrot.lane.b32.xlu0 %v4110, 107
        %v4121 = vpop.permute.xlu0 %4120
        %v4122 = vsel %vm1085, %v4117, %v4119
        %v4123 = vsel %vm1085, %v4119, %v4121
        %v4125 = vsel %vm432, %v4112, 0
        %v4127 = vsel %vm436, %v4122, 0
        %v4129 = vsel %vm436, %v4123, 0
        %v4131 = vsel %vm436, %v4121, 0
        %4133 = vmatprep.subr.mxu0 %v4129
        %4134 = vmatpush1.msra.mxu0 %v4127
        %4135 = vmatprep.subr.mxu0 0.0
        %4136 = vmatpush1.msra.mxu0 0.0
        %4137 = vmatprep.subr.mxu0 0.0
        %4138 = vmatpush1.msra.mxu0 0.0
        %4139 = vmatprep.subr.mxu0 0.0
        %4140 = vmatpush1.msra.mxu0 0.0
        %4141 = vmatprep.subr.mxu0 0.0
        %4142 = vmatpush1.msra.mxu0 0.0
        %4143 = vmatprep.subr.mxu0 0.0
        %4144 = vmatpush1.msra.mxu0 0.0
        %4145 = vmatprep.subr.mxu0 0.0
        %4146 = vmatpush1.msra.mxu0 0.0
        %4147 = vmatprep.subr.mxu0 0.0
        %4148 = vmatpush1.msra.mxu0 0.0
        %4149 = vmatprep.subr.mxu0 0.0
        %4150 = vmatpush1.msra.mxu0 0.0
        %4151 = vmatprep.subr.mxu0 0.0
        %4152 = vmatpush1.msra.mxu0 0.0
        %4153 = vmatprep.subr.mxu0 0.0
        %4154 = vmatpush1.msra.mxu0 0.0
        %4155 = vmatprep.subr.mxu0 0.0
        %4156 = vmatpush1.msra.mxu0 0.0
        %4157 = vmatprep.subr.mxu0 0.0
        %4158 = vmatpush1.msra.mxu0 0.0
        %4159 = vmatprep.subr.mxu0 0.0
        %4160 = vmatpush1.msra.mxu0 0.0
        %4161 = vmatprep.subr.mxu0 0.0
        %4162 = vmatpush1.msra.mxu0 0.0
        %4163 = vmatprep.subr.mxu0 0.0
        %4164 = vmatpush1.msra.mxu0 0.0
        %4165 = vmatprep.subr.mxu0 0.0
        %4166 = vmatpush1.msra.mxu0 0.0
        %4167 = vmatprep.subr.mxu0 0.0
        %4168 = vmatpush1.msra.mxu0 0.0
        %4169 = vmatprep.subr.mxu0 0.0
        %4170 = vmatpush1.msra.mxu0 0.0
        %4171 = vmatprep.subr.mxu0 0.0
        %4172 = vmatpush1.msra.mxu0 0.0
        %4173 = vmatprep.subr.mxu0 0.0
        %4174 = vmatpush1.msra.mxu0 0.0
        %4175 = vmatprep.subr.mxu0 0.0
        %4176 = vmatpush1.msra.mxu0 0.0
        %4177 = vmatprep.subr.mxu0 0.0
        %4178 = vmatpush1.msra.mxu0 0.0
        %4179 = vmatprep.subr.mxu0 0.0
        %4180 = vmatpush1.msra.mxu0 0.0
        %4181 = vmatprep.subr.mxu0 0.0
        %4182 = vmatpush1.msra.mxu0 0.0
        %4183 = vmatprep.subr.mxu0 0.0
        %4184 = vmatpush1.msra.mxu0 0.0
        %4185 = vmatprep.subr.mxu0 0.0
        %4186 = vmatpush1.msra.mxu0 0.0
        %4187 = vmatprep.subr.mxu0 0.0
        %4188 = vmatpush1.msra.mxu0 0.0
        %4189 = vmatprep.subr.mxu0 0.0
        %4190 = vmatpush1.msra.mxu0 0.0
        %4191 = vmatprep.subr.mxu0 0.0
        %4192 = vmatpush1.msra.mxu0 0.0
        %4193 = vmatprep.subr.mxu0 0.0
        %4194 = vmatpush1.msra.mxu0 0.0
        %4195 = vmatprep.subr.mxu0 0.0
        %4196 = vmatpush1.msra.mxu0 0.0
        %4197 = vmatprep.mubr.f32.mxu0 0.0
        %4198 = vmatmul.mubr.f32.gmra.mrb[0].mxu0 %v4125
        %v4199 = vpop.f32.mrb[0].mxu0
        %v4200 = vadd.f32 0.0, %v4199
        %v4201 = vpop.f32.mrb[0].mxu0
        %v4202 = vadd.f32 0.0, %v4201
        %4203 = vdwg.mxu0
        %4204 = vmatprep.subr.mxu0 0.0
        %4205 = vmatpush1.msra.mxu0 %v4131
        %4206 = vmatprep.subr.mxu0 0.0
        %4207 = vmatpush1.msra.mxu0 0.0
        %4208 = vmatprep.subr.mxu0 0.0
        %4209 = vmatpush1.msra.mxu0 0.0
        %4210 = vmatprep.subr.mxu0 0.0
        %4211 = vmatpush1.msra.mxu0 0.0
        %4212 = vmatprep.subr.mxu0 0.0
        %4213 = vmatpush1.msra.mxu0 0.0
        %4214 = vmatprep.subr.mxu0 0.0
        %4215 = vmatpush1.msra.mxu0 0.0
        %4216 = vmatprep.subr.mxu0 0.0
        %4217 = vmatpush1.msra.mxu0 0.0
        %4218 = vmatprep.subr.mxu0 0.0
        %4219 = vmatpush1.msra.mxu0 0.0
        %4220 = vmatprep.subr.mxu0 0.0
        %4221 = vmatpush1.msra.mxu0 0.0
        %4222 = vmatprep.subr.mxu0 0.0
        %4223 = vmatpush1.msra.mxu0 0.0
        %4224 = vmatprep.subr.mxu0 0.0
        %4225 = vmatpush1.msra.mxu0 0.0
        %4226 = vmatprep.subr.mxu0 0.0
        %4227 = vmatpush1.msra.mxu0 0.0
        %4228 = vmatprep.subr.mxu0 0.0
        %4229 = vmatpush1.msra.mxu0 0.0
        %4230 = vmatprep.subr.mxu0 0.0
        %4231 = vmatpush1.msra.mxu0 0.0
        %4232 = vmatprep.subr.mxu0 0.0
        %4233 = vmatpush1.msra.mxu0 0.0
        %4234 = vmatprep.subr.mxu0 0.0
        %4235 = vmatpush1.msra.mxu0 0.0
        %4236 = vmatprep.subr.mxu0 0.0
        %4237 = vmatpush1.msra.mxu0 0.0
        %4238 = vmatprep.subr.mxu0 0.0
        %4239 = vmatpush1.msra.mxu0 0.0
        %4240 = vmatprep.subr.mxu0 0.0
        %4241 = vmatpush1.msra.mxu0 0.0
        %4242 = vmatprep.subr.mxu0 0.0
        %4243 = vmatpush1.msra.mxu0 0.0
        %4244 = vmatprep.subr.mxu0 0.0
        %4245 = vmatpush1.msra.mxu0 0.0
        %4246 = vmatprep.subr.mxu0 0.0
        %4247 = vmatpush1.msra.mxu0 0.0
        %4248 = vmatprep.subr.mxu0 0.0
        %4249 = vmatpush1.msra.mxu0 0.0
        %4250 = vmatprep.subr.mxu0 0.0
        %4251 = vmatpush1.msra.mxu0 0.0
        %4252 = vmatprep.subr.mxu0 0.0
        %4253 = vmatpush1.msra.mxu0 0.0
        %4254 = vmatprep.subr.mxu0 0.0
        %4255 = vmatpush1.msra.mxu0 0.0
        %4256 = vmatprep.subr.mxu0 0.0
        %4257 = vmatpush1.msra.mxu0 0.0
        %4258 = vmatprep.subr.mxu0 0.0
        %4259 = vmatpush1.msra.mxu0 0.0
        %4260 = vmatprep.subr.mxu0 0.0
        %4261 = vmatpush1.msra.mxu0 0.0
        %4262 = vmatprep.subr.mxu0 0.0
        %4263 = vmatpush1.msra.mxu0 0.0
        %4264 = vmatprep.subr.mxu0 0.0
        %4265 = vmatpush1.msra.mxu0 0.0
        %4266 = vmatprep.subr.mxu0 0.0
        %4267 = vmatpush1.msra.mxu0 0.0
        %4268 = vmatprep.mubr.f32.mxu0 0.0
        %4269 = vmatmul.mubr.f32.gmra.mrb[0].mxu0 %v4125
        %v4270 = vpop.f32.mrb[0].mxu0
        %v4271 = vadd.f32 0.0, %v4270
        %v4272 = vpop.f32.mrb[0].mxu0
        %4273 = vdwg.mxu0
        %v4274 = vadd.f32 %v4106, %v4200
        %v4275 = vadd.f32 %v4107, %v4202
        %v4276 = vadd.f32 %v4108, %v4271
        %v4277 = vld [vmem:[%s362] sm:$0xff]
        %v4278 = vld [vmem:[%s362 + $0x8] sm:$0xf]
        %s4279 = scalar_lea.vmem [#allocation8], 184
        %v4280 = vld [vmem:[%s4279] sm:$0xff]
        %v4283 = vcombine.high %v4277, %v4277
        %4284 = vrot.lane.b32.xlu0 %v4277, 106
        %v4285 = vpop.permute.xlu0 %4284
        %4286 = vrot.lane.b32.xlu0 %v4283, 106
        %v4287 = vpop.permute.xlu0 %4286
        %4288 = vrot.lane.b32.xlu0 %v4278, 106
        %v4289 = vpop.permute.xlu0 %4288
        %v4290 = vsel %vm1254, %v4285, %v4287
        %v4291 = vsel %vm1254, %v4287, %v4289
        %v4293 = vsel %vm432, %v4280, 0
        %v4295 = vsel %vm436, %v4290, 0
        %v4297 = vsel %vm436, %v4291, 0
        %v4299 = vsel %vm436, %v4289, 0
        %4301 = vmatprep.subr.mxu0 %v4297
        %4302 = vmatpush1.msra.mxu0 %v4295
        %4303 = vmatprep.subr.mxu0 0.0
        %4304 = vmatpush1.msra.mxu0 0.0
        %4305 = vmatprep.subr.mxu0 0.0
        %4306 = vmatpush1.msra.mxu0 0.0
        %4307 = vmatprep.subr.mxu0 0.0
        %4308 = vmatpush1.msra.mxu0 0.0
        %4309 = vmatprep.subr.mxu0 0.0
        %4310 = vmatpush1.msra.mxu0 0.0
        %4311 = vmatprep.subr.mxu0 0.0
        %4312 = vmatpush1.msra.mxu0 0.0
        %4313 = vmatprep.subr.mxu0 0.0
        %4314 = vmatpush1.msra.mxu0 0.0
        %4315 = vmatprep.subr.mxu0 0.0
        %4316 = vmatpush1.msra.mxu0 0.0
        %4317 = vmatprep.subr.mxu0 0.0
        %4318 = vmatpush1.msra.mxu0 0.0
        %4319 = vmatprep.subr.mxu0 0.0
        %4320 = vmatpush1.msra.mxu0 0.0
        %4321 = vmatprep.subr.mxu0 0.0
        %4322 = vmatpush1.msra.mxu0 0.0
        %4323 = vmatprep.subr.mxu0 0.0
        %4324 = vmatpush1.msra.mxu0 0.0
        %4325 = vmatprep.subr.mxu0 0.0
        %4326 = vmatpush1.msra.mxu0 0.0
        %4327 = vmatprep.subr.mxu0 0.0
        %4328 = vmatpush1.msra.mxu0 0.0
        %4329 = vmatprep.subr.mxu0 0.0
        %4330 = vmatpush1.msra.mxu0 0.0
        %4331 = vmatprep.subr.mxu0 0.0
        %4332 = vmatpush1.msra.mxu0 0.0
        %4333 = vmatprep.subr.mxu0 0.0
        %4334 = vmatpush1.msra.mxu0 0.0
        %4335 = vmatprep.subr.mxu0 0.0
        %4336 = vmatpush1.msra.mxu0 0.0
        %4337 = vmatprep.subr.mxu0 0.0
        %4338 = vmatpush1.msra.mxu0 0.0
        %4339 = vmatprep.subr.mxu0 0.0
        %4340 = vmatpush1.msra.mxu0 0.0
        %4341 = vmatprep.subr.mxu0 0.0
        %4342 = vmatpush1.msra.mxu0 0.0
        %4343 = vmatprep.subr.mxu0 0.0
        %4344 = vmatpush1.msra.mxu0 0.0
        %4345 = vmatprep.subr.mxu0 0.0
        %4346 = vmatpush1.msra.mxu0 0.0
        %4347 = vmatprep.subr.mxu0 0.0
        %4348 = vmatpush1.msra.mxu0 0.0
        %4349 = vmatprep.subr.mxu0 0.0
        %4350 = vmatpush1.msra.mxu0 0.0
        %4351 = vmatprep.subr.mxu0 0.0
        %4352 = vmatpush1.msra.mxu0 0.0
        %4353 = vmatprep.subr.mxu0 0.0
        %4354 = vmatpush1.msra.mxu0 0.0
        %4355 = vmatprep.subr.mxu0 0.0
        %4356 = vmatpush1.msra.mxu0 0.0
        %4357 = vmatprep.subr.mxu0 0.0
        %4358 = vmatpush1.msra.mxu0 0.0
        %4359 = vmatprep.subr.mxu0 0.0
        %4360 = vmatpush1.msra.mxu0 0.0
        %4361 = vmatprep.subr.mxu0 0.0
        %4362 = vmatpush1.msra.mxu0 0.0
        %4363 = vmatprep.subr.mxu0 0.0
        %4364 = vmatpush1.msra.mxu0 0.0
        %4365 = vmatprep.mubr.f32.mxu0 0.0
        %4366 = vmatmul.mubr.f32.gmra.mrb[0].mxu0 %v4293
        %v4367 = vpop.f32.mrb[0].mxu0
        %v4368 = vadd.f32 0.0, %v4367
        %v4369 = vpop.f32.mrb[0].mxu0
        %v4370 = vadd.f32 0.0, %v4369
        %4371 = vdwg.mxu0
        %4372 = vmatprep.subr.mxu0 0.0
        %4373 = vmatpush1.msra.mxu0 %v4299
        %4374 = vmatprep.subr.mxu0 0.0
        %4375 = vmatpush1.msra.mxu0 0.0
        %4376 = vmatprep.subr.mxu0 0.0
        %4377 = vmatpush1.msra.mxu0 0.0
        %4378 = vmatprep.subr.mxu0 0.0
        %4379 = vmatpush1.msra.mxu0 0.0
        %4380 = vmatprep.subr.mxu0 0.0
        %4381 = vmatpush1.msra.mxu0 0.0
        %4382 = vmatprep.subr.mxu0 0.0
        %4383 = vmatpush1.msra.mxu0 0.0
        %4384 = vmatprep.subr.mxu0 0.0
        %4385 = vmatpush1.msra.mxu0 0.0
        %4386 = vmatprep.subr.mxu0 0.0
        %4387 = vmatpush1.msra.mxu0 0.0
        %4388 = vmatprep.subr.mxu0 0.0
        %4389 = vmatpush1.msra.mxu0 0.0
        %4390 = vmatprep.subr.mxu0 0.0
        %4391 = vmatpush1.msra.mxu0 0.0
        %4392 = vmatprep.subr.mxu0 0.0
        %4393 = vmatpush1.msra.mxu0 0.0
        %4394 = vmatprep.subr.mxu0 0.0
        %4395 = vmatpush1.msra.mxu0 0.0
        %4396 = vmatprep.subr.mxu0 0.0
        %4397 = vmatpush1.msra.mxu0 0.0
        %4398 = vmatprep.subr.mxu0 0.0
        %4399 = vmatpush1.msra.mxu0 0.0
        %4400 = vmatprep.subr.mxu0 0.0
        %4401 = vmatpush1.msra.mxu0 0.0
        %4402 = vmatprep.subr.mxu0 0.0
        %4403 = vmatpush1.msra.mxu0 0.0
        %4404 = vmatprep.subr.mxu0 0.0
        %4405 = vmatpush1.msra.mxu0 0.0
        %4406 = vmatprep.subr.mxu0 0.0
        %4407 = vmatpush1.msra.mxu0 0.0
        %4408 = vmatprep.subr.mxu0 0.0
        %4409 = vmatpush1.msra.mxu0 0.0
        %4410 = vmatprep.subr.mxu0 0.0
        %4411 = vmatpush1.msra.mxu0 0.0
        %4412 = vmatprep.subr.mxu0 0.0
        %4413 = vmatpush1.msra.mxu0 0.0
        %4414 = vmatprep.subr.mxu0 0.0
        %4415 = vmatpush1.msra.mxu0 0.0
        %4416 = vmatprep.subr.mxu0 0.0
        %4417 = vmatpush1.msra.mxu0 0.0
        %4418 = vmatprep.subr.mxu0 0.0
        %4419 = vmatpush1.msra.mxu0 0.0
        %4420 = vmatprep.subr.mxu0 0.0
        %4421 = vmatpush1.msra.mxu0 0.0
        %4422 = vmatprep.subr.mxu0 0.0
        %4423 = vmatpush1.msra.mxu0 0.0
        %4424 = vmatprep.subr.mxu0 0.0
        %4425 = vmatpush1.msra.mxu0 0.0
        %4426 = vmatprep.subr.mxu0 0.0
        %4427 = vmatpush1.msra.mxu0 0.0
        %4428 = vmatprep.subr.mxu0 0.0
        %4429 = vmatpush1.msra.mxu0 0.0
        %4430 = vmatprep.subr.mxu0 0.0
        %4431 = vmatpush1.msra.mxu0 0.0
        %4432 = vmatprep.subr.mxu0 0.0
        %4433 = vmatpush1.msra.mxu0 0.0
        %4434 = vmatprep.subr.mxu0 0.0
        %4435 = vmatpush1.msra.mxu0 0.0
        %4436 = vmatprep.mubr.f32.mxu0 0.0
        %4437 = vmatmul.mubr.f32.gmra.mrb[0].mxu0 %v4293
        %v4438 = vpop.f32.mrb[0].mxu0
        %v4439 = vadd.f32 0.0, %v4438
        %v4440 = vpop.f32.mrb[0].mxu0
        %4441 = vdwg.mxu0
        %v4442 = vadd.f32 %v4274, %v4368
        %v4443 = vadd.f32 %v4275, %v4370
        %v4444 = vadd.f32 %v4276, %v4439
        %v4445 = vld [vmem:[%s362] sm:$0xff]
        %v4446 = vld [vmem:[%s362 + $0x8] sm:$0xff]
        %s4447 = scalar_lea.vmem [#allocation8], 192
        %v4448 = vld [vmem:[%s4447] sm:$0xff]
        %v4451 = vcombine.high %v4445, %v4445
        %v4452 = vcombine.high %v4446, %v4446
        %4453 = vrot.lane.b32.xlu0 %v4445, 88
        %v4454 = vpop.permute.xlu0 %4453
        %4455 = vrot.lane.b32.xlu0 %v4451, 88
        %v4456 = vpop.permute.xlu0 %4455
        %4457 = vrot.lane.b32.xlu0 %v4446, 88
        %v4458 = vpop.permute.xlu0 %4457
        %4459 = vrot.lane.b32.xlu0 %v4452, 88
        %v4460 = vpop.permute.xlu0 %4459
        %v4461 = vsel %vm1426, %v4454, %v4456
        %v4462 = vsel %vm1426, %v4456, %v4458
        %v4463 = vsel %vm1426, %v4458, %v4460
        %v4465 = vsel %vm432, %v4448, 0
        %v4467 = vsel %vm436, %v4461, 0
        %v4469 = vsel %vm436, %v4462, 0
        %v4471 = vsel %vm436, %v4463, 0
        %4473 = vmatprep.subr.mxu0 %v4469
        %4474 = vmatpush1.msra.mxu0 %v4467
        %4475 = vmatprep.subr.mxu0 0.0
        %4476 = vmatpush1.msra.mxu0 0.0
        %4477 = vmatprep.subr.mxu0 0.0
        %4478 = vmatpush1.msra.mxu0 0.0
        %4479 = vmatprep.subr.mxu0 0.0
        %4480 = vmatpush1.msra.mxu0 0.0
        %4481 = vmatprep.subr.mxu0 0.0
        %4482 = vmatpush1.msra.mxu0 0.0
        %4483 = vmatprep.subr.mxu0 0.0
        %4484 = vmatpush1.msra.mxu0 0.0
        %4485 = vmatprep.subr.mxu0 0.0
        %4486 = vmatpush1.msra.mxu0 0.0
        %4487 = vmatprep.subr.mxu0 0.0
        %4488 = vmatpush1.msra.mxu0 0.0
        %4489 = vmatprep.subr.mxu0 0.0
        %4490 = vmatpush1.msra.mxu0 0.0
        %4491 = vmatprep.subr.mxu0 0.0
        %4492 = vmatpush1.msra.mxu0 0.0
        %4493 = vmatprep.subr.mxu0 0.0
        %4494 = vmatpush1.msra.mxu0 0.0
        %4495 = vmatprep.subr.mxu0 0.0
        %4496 = vmatpush1.msra.mxu0 0.0
        %4497 = vmatprep.subr.mxu0 0.0
        %4498 = vmatpush1.msra.mxu0 0.0
        %4499 = vmatprep.subr.mxu0 0.0
        %4500 = vmatpush1.msra.mxu0 0.0
        %4501 = vmatprep.subr.mxu0 0.0
        %4502 = vmatpush1.msra.mxu0 0.0
        %4503 = vmatprep.subr.mxu0 0.0
        %4504 = vmatpush1.msra.mxu0 0.0
        %4505 = vmatprep.subr.mxu0 0.0
        %4506 = vmatpush1.msra.mxu0 0.0
        %4507 = vmatprep.subr.mxu0 0.0
        %4508 = vmatpush1.msra.mxu0 0.0
        %4509 = vmatprep.subr.mxu0 0.0
        %4510 = vmatpush1.msra.mxu0 0.0
        %4511 = vmatprep.subr.mxu0 0.0
        %4512 = vmatpush1.msra.mxu0 0.0
        %4513 = vmatprep.subr.mxu0 0.0
        %4514 = vmatpush1.msra.mxu0 0.0
        %4515 = vmatprep.subr.mxu0 0.0
        %4516 = vmatpush1.msra.mxu0 0.0
        %4517 = vmatprep.subr.mxu0 0.0
        %4518 = vmatpush1.msra.mxu0 0.0
        %4519 = vmatprep.subr.mxu0 0.0
        %4520 = vmatpush1.msra.mxu0 0.0
        %4521 = vmatprep.subr.mxu0 0.0
        %4522 = vmatpush1.msra.mxu0 0.0
        %4523 = vmatprep.subr.mxu0 0.0
        %4524 = vmatpush1.msra.mxu0 0.0
        %4525 = vmatprep.subr.mxu0 0.0
        %4526 = vmatpush1.msra.mxu0 0.0
        %4527 = vmatprep.subr.mxu0 0.0
        %4528 = vmatpush1.msra.mxu0 0.0
        %4529 = vmatprep.subr.mxu0 0.0
        %4530 = vmatpush1.msra.mxu0 0.0
        %4531 = vmatprep.subr.mxu0 0.0
        %4532 = vmatpush1.msra.mxu0 0.0
        %4533 = vmatprep.subr.mxu0 0.0
        %4534 = vmatpush1.msra.mxu0 0.0
        %4535 = vmatprep.subr.mxu0 0.0
        %4536 = vmatpush1.msra.mxu0 0.0
        %4537 = vmatprep.mubr.f32.mxu0 0.0
        %4538 = vmatmul.mubr.f32.gmra.mrb[0].mxu0 %v4465
        %v4539 = vpop.f32.mrb[0].mxu0
        %v4540 = vadd.f32 0.0, %v4539
        %v4541 = vpop.f32.mrb[0].mxu0
        %v4542 = vadd.f32 0.0, %v4541
        %4543 = vdwg.mxu0
        %4544 = vmatprep.subr.mxu0 0.0
        %4545 = vmatpush1.msra.mxu0 %v4471
        %4546 = vmatprep.subr.mxu0 0.0
        %4547 = vmatpush1.msra.mxu0 0.0
        %4548 = vmatprep.subr.mxu0 0.0
        %4549 = vmatpush1.msra.mxu0 0.0
        %4550 = vmatprep.subr.mxu0 0.0
        %4551 = vmatpush1.msra.mxu0 0.0
        %4552 = vmatprep.subr.mxu0 0.0
        %4553 = vmatpush1.msra.mxu0 0.0
        %4554 = vmatprep.subr.mxu0 0.0
        %4555 = vmatpush1.msra.mxu0 0.0
        %4556 = vmatprep.subr.mxu0 0.0
        %4557 = vmatpush1.msra.mxu0 0.0
        %4558 = vmatprep.subr.mxu0 0.0
        %4559 = vmatpush1.msra.mxu0 0.0
        %4560 = vmatprep.subr.mxu0 0.0
        %4561 = vmatpush1.msra.mxu0 0.0
        %4562 = vmatprep.subr.mxu0 0.0
        %4563 = vmatpush1.msra.mxu0 0.0
        %4564 = vmatprep.subr.mxu0 0.0
        %4565 = vmatpush1.msra.mxu0 0.0
        %4566 = vmatprep.subr.mxu0 0.0
        %4567 = vmatpush1.msra.mxu0 0.0
        %4568 = vmatprep.subr.mxu0 0.0
        %4569 = vmatpush1.msra.mxu0 0.0
        %4570 = vmatprep.subr.mxu0 0.0
        %4571 = vmatpush1.msra.mxu0 0.0
        %4572 = vmatprep.subr.mxu0 0.0
        %4573 = vmatpush1.msra.mxu0 0.0
        %4574 = vmatprep.subr.mxu0 0.0
        %4575 = vmatpush1.msra.mxu0 0.0
        %4576 = vmatprep.subr.mxu0 0.0
        %4577 = vmatpush1.msra.mxu0 0.0
        %4578 = vmatprep.subr.mxu0 0.0
        %4579 = vmatpush1.msra.mxu0 0.0
        %4580 = vmatprep.subr.mxu0 0.0
        %4581 = vmatpush1.msra.mxu0 0.0
        %4582 = vmatprep.subr.mxu0 0.0
        %4583 = vmatpush1.msra.mxu0 0.0
        %4584 = vmatprep.subr.mxu0 0.0
        %4585 = vmatpush1.msra.mxu0 0.0
        %4586 = vmatprep.subr.mxu0 0.0
        %4587 = vmatpush1.msra.mxu0 0.0
        %4588 = vmatprep.subr.mxu0 0.0
        %4589 = vmatpush1.msra.mxu0 0.0
        %4590 = vmatprep.subr.mxu0 0.0
        %4591 = vmatpush1.msra.mxu0 0.0
        %4592 = vmatprep.subr.mxu0 0.0
        %4593 = vmatpush1.msra.mxu0 0.0
        %4594 = vmatprep.subr.mxu0 0.0
        %4595 = vmatpush1.msra.mxu0 0.0
        %4596 = vmatprep.subr.mxu0 0.0
        %4597 = vmatpush1.msra.mxu0 0.0
        %4598 = vmatprep.subr.mxu0 0.0
        %4599 = vmatpush1.msra.mxu0 0.0
        %4600 = vmatprep.subr.mxu0 0.0
        %4601 = vmatpush1.msra.mxu0 0.0
        %4602 = vmatprep.subr.mxu0 0.0
        %4603 = vmatpush1.msra.mxu0 0.0
        %4604 = vmatprep.subr.mxu0 0.0
        %4605 = vmatpush1.msra.mxu0 0.0
        %4606 = vmatprep.subr.mxu0 0.0
        %4607 = vmatpush1.msra.mxu0 0.0
        %4608 = vmatprep.mubr.f32.mxu0 0.0
        %4609 = vmatmul.mubr.f32.gmra.mrb[0].mxu0 %v4465
        %v4610 = vpop.f32.mrb[0].mxu0
        %v4611 = vadd.f32 0.0, %v4610
        %v4612 = vpop.f32.mrb[0].mxu0
        %4613 = vdwg.mxu0
        %v4614 = vadd.f32 %v4442, %v4540
        %v4615 = vadd.f32 %v4443, %v4542
        %v4616 = vadd.f32 %v4444, %v4611
        %v4617 = vld [vmem:[%s362] sm:$0xff]
        %v4618 = vld [vmem:[%s362 + $0x8] sm:$0xff]
        %s4619 = scalar_lea.vmem [#allocation8], 200
        %v4620 = vld [vmem:[%s4619] sm:$0xff]
        %v4623 = vcombine.high %v4617, %v4617
        %v4624 = vcombine.high %v4618, %v4618
        %4625 = vrot.lane.b32.xlu0 %v4617, 87
        %v4626 = vpop.permute.xlu0 %4625
        %4627 = vrot.lane.b32.xlu0 %v4623, 87
        %v4628 = vpop.permute.xlu0 %4627
        %4629 = vrot.lane.b32.xlu0 %v4618, 87
        %v4630 = vpop.permute.xlu0 %4629
        %4631 = vrot.lane.b32.xlu0 %v4624, 87
        %v4632 = vpop.permute.xlu0 %4631
        %v4633 = vsel %vm1599, %v4626, %v4628
        %v4634 = vsel %vm1599, %v4628, %v4630
        %v4635 = vsel %vm1599, %v4630, %v4632
        %v4637 = vsel %vm432, %v4620, 0
        %v4639 = vsel %vm436, %v4633, 0
        %v4641 = vsel %vm436, %v4634, 0
        %v4643 = vsel %vm436, %v4635, 0
        %4645 = vmatprep.subr.mxu0 %v4641
        %4646 = vmatpush1.msra.mxu0 %v4639
        %4647 = vmatprep.subr.mxu0 0.0
        %4648 = vmatpush1.msra.mxu0 0.0
        %4649 = vmatprep.subr.mxu0 0.0
        %4650 = vmatpush1.msra.mxu0 0.0
        %4651 = vmatprep.subr.mxu0 0.0
        %4652 = vmatpush1.msra.mxu0 0.0
        %4653 = vmatprep.subr.mxu0 0.0
        %4654 = vmatpush1.msra.mxu0 0.0
        %4655 = vmatprep.subr.mxu0 0.0
        %4656 = vmatpush1.msra.mxu0 0.0
        %4657 = vmatprep.subr.mxu0 0.0
        %4658 = vmatpush1.msra.mxu0 0.0
        %4659 = vmatprep.subr.mxu0 0.0
        %4660 = vmatpush1.msra.mxu0 0.0
        %4661 = vmatprep.subr.mxu0 0.0
        %4662 = vmatpush1.msra.mxu0 0.0
        %4663 = vmatprep.subr.mxu0 0.0
        %4664 = vmatpush1.msra.mxu0 0.0
        %4665 = vmatprep.subr.mxu0 0.0
        %4666 = vmatpush1.msra.mxu0 0.0
        %4667 = vmatprep.subr.mxu0 0.0
        %4668 = vmatpush1.msra.mxu0 0.0
        %4669 = vmatprep.subr.mxu0 0.0
        %4670 = vmatpush1.msra.mxu0 0.0
        %4671 = vmatprep.subr.mxu0 0.0
        %4672 = vmatpush1.msra.mxu0 0.0
        %4673 = vmatprep.subr.mxu0 0.0
        %4674 = vmatpush1.msra.mxu0 0.0
        %4675 = vmatprep.subr.mxu0 0.0
        %4676 = vmatpush1.msra.mxu0 0.0
        %4677 = vmatprep.subr.mxu0 0.0
        %4678 = vmatpush1.msra.mxu0 0.0
        %4679 = vmatprep.subr.mxu0 0.0
        %4680 = vmatpush1.msra.mxu0 0.0
        %4681 = vmatprep.subr.mxu0 0.0
        %4682 = vmatpush1.msra.mxu0 0.0
        %4683 = vmatprep.subr.mxu0 0.0
        %4684 = vmatpush1.msra.mxu0 0.0
        %4685 = vmatprep.subr.mxu0 0.0
        %4686 = vmatpush1.msra.mxu0 0.0
        %4687 = vmatprep.subr.mxu0 0.0
        %4688 = vmatpush1.msra.mxu0 0.0
        %4689 = vmatprep.subr.mxu0 0.0
        %4690 = vmatpush1.msra.mxu0 0.0
        %4691 = vmatprep.subr.mxu0 0.0
        %4692 = vmatpush1.msra.mxu0 0.0
        %4693 = vmatprep.subr.mxu0 0.0
        %4694 = vmatpush1.msra.mxu0 0.0
        %4695 = vmatprep.subr.mxu0 0.0
        %4696 = vmatpush1.msra.mxu0 0.0
        %4697 = vmatprep.subr.mxu0 0.0
        %4698 = vmatpush1.msra.mxu0 0.0
        %4699 = vmatprep.subr.mxu0 0.0
        %4700 = vmatpush1.msra.mxu0 0.0
        %4701 = vmatprep.subr.mxu0 0.0
        %4702 = vmatpush1.msra.mxu0 0.0
        %4703 = vmatprep.subr.mxu0 0.0
        %4704 = vmatpush1.msra.mxu0 0.0
        %4705 = vmatprep.subr.mxu0 0.0
        %4706 = vmatpush1.msra.mxu0 0.0
        %4707 = vmatprep.subr.mxu0 0.0
        %4708 = vmatpush1.msra.mxu0 0.0
        %4709 = vmatprep.mubr.f32.mxu0 0.0
        %4710 = vmatmul.mubr.f32.gmra.mrb[0].mxu0 %v4637
        %v4711 = vpop.f32.mrb[0].mxu0
        %v4712 = vadd.f32 0.0, %v4711
        %v4713 = vpop.f32.mrb[0].mxu0
        %v4714 = vadd.f32 0.0, %v4713
        %4715 = vdwg.mxu0
        %4716 = vmatprep.subr.mxu0 0.0
        %4717 = vmatpush1.msra.mxu0 %v4643
        %4718 = vmatprep.subr.mxu0 0.0
        %4719 = vmatpush1.msra.mxu0 0.0
        %4720 = vmatprep.subr.mxu0 0.0
        %4721 = vmatpush1.msra.mxu0 0.0
        %4722 = vmatprep.subr.mxu0 0.0
        %4723 = vmatpush1.msra.mxu0 0.0
        %4724 = vmatprep.subr.mxu0 0.0
        %4725 = vmatpush1.msra.mxu0 0.0
        %4726 = vmatprep.subr.mxu0 0.0
        %4727 = vmatpush1.msra.mxu0 0.0
        %4728 = vmatprep.subr.mxu0 0.0
        %4729 = vmatpush1.msra.mxu0 0.0
        %4730 = vmatprep.subr.mxu0 0.0
        %4731 = vmatpush1.msra.mxu0 0.0
        %4732 = vmatprep.subr.mxu0 0.0
        %4733 = vmatpush1.msra.mxu0 0.0
        %4734 = vmatprep.subr.mxu0 0.0
        %4735 = vmatpush1.msra.mxu0 0.0
        %4736 = vmatprep.subr.mxu0 0.0
        %4737 = vmatpush1.msra.mxu0 0.0
        %4738 = vmatprep.subr.mxu0 0.0
        %4739 = vmatpush1.msra.mxu0 0.0
        %4740 = vmatprep.subr.mxu0 0.0
        %4741 = vmatpush1.msra.mxu0 0.0
        %4742 = vmatprep.subr.mxu0 0.0
        %4743 = vmatpush1.msra.mxu0 0.0
        %4744 = vmatprep.subr.mxu0 0.0
        %4745 = vmatpush1.msra.mxu0 0.0
        %4746 = vmatprep.subr.mxu0 0.0
        %4747 = vmatpush1.msra.mxu0 0.0
        %4748 = vmatprep.subr.mxu0 0.0
        %4749 = vmatpush1.msra.mxu0 0.0
        %4750 = vmatprep.subr.mxu0 0.0
        %4751 = vmatpush1.msra.mxu0 0.0
        %4752 = vmatprep.subr.mxu0 0.0
        %4753 = vmatpush1.msra.mxu0 0.0
        %4754 = vmatprep.subr.mxu0 0.0
        %4755 = vmatpush1.msra.mxu0 0.0
        %4756 = vmatprep.subr.mxu0 0.0
        %4757 = vmatpush1.msra.mxu0 0.0
        %4758 = vmatprep.subr.mxu0 0.0
        %4759 = vmatpush1.msra.mxu0 0.0
        %4760 = vmatprep.subr.mxu0 0.0
        %4761 = vmatpush1.msra.mxu0 0.0
        %4762 = vmatprep.subr.mxu0 0.0
        %4763 = vmatpush1.msra.mxu0 0.0
        %4764 = vmatprep.subr.mxu0 0.0
        %4765 = vmatpush1.msra.mxu0 0.0
        %4766 = vmatprep.subr.mxu0 0.0
        %4767 = vmatpush1.msra.mxu0 0.0
        %4768 = vmatprep.subr.mxu0 0.0
        %4769 = vmatpush1.msra.mxu0 0.0
        %4770 = vmatprep.subr.mxu0 0.0
        %4771 = vmatpush1.msra.mxu0 0.0
        %4772 = vmatprep.subr.mxu0 0.0
        %4773 = vmatpush1.msra.mxu0 0.0
        %4774 = vmatprep.subr.mxu0 0.0
        %4775 = vmatpush1.msra.mxu0 0.0
        %4776 = vmatprep.subr.mxu0 0.0
        %4777 = vmatpush1.msra.mxu0 0.0
        %4778 = vmatprep.subr.mxu0 0.0
        %4779 = vmatpush1.msra.mxu0 0.0
        %4780 = vmatprep.mubr.f32.mxu0 0.0
        %4781 = vmatmul.mubr.f32.gmra.mrb[0].mxu0 %v4637
        %v4782 = vpop.f32.mrb[0].mxu0
        %v4783 = vadd.f32 0.0, %v4782
        %v4784 = vpop.f32.mrb[0].mxu0
        %4785 = vdwg.mxu0
        %v4786 = vadd.f32 %v4614, %v4712
        %v4787 = vadd.f32 %v4615, %v4714
        %v4788 = vadd.f32 %v4616, %v4783
        %v4789 = vld [vmem:[%s362] sm:$0xff]
        %v4790 = vld [vmem:[%s362 + $0x8] sm:$0xff]
        %s4791 = scalar_lea.vmem [#allocation8], 208
        %v4792 = vld [vmem:[%s4791] sm:$0xff]
        %v4795 = vcombine.high %v4789, %v4789
        %v4796 = vcombine.high %v4790, %v4790
        %4797 = vrot.lane.b32.xlu0 %v4789, 86
        %v4798 = vpop.permute.xlu0 %4797
        %4799 = vrot.lane.b32.xlu0 %v4795, 86
        %v4800 = vpop.permute.xlu0 %4799
        %4801 = vrot.lane.b32.xlu0 %v4790, 86
        %v4802 = vpop.permute.xlu0 %4801
        %4803 = vrot.lane.b32.xlu0 %v4796, 86
        %v4804 = vpop.permute.xlu0 %4803
        %v4805 = vsel %vm1772, %v4798, %v4800
        %v4806 = vsel %vm1772, %v4800, %v4802
        %v4807 = vsel %vm1772, %v4802, %v4804
        %v4809 = vsel %vm432, %v4792, 0
        %v4811 = vsel %vm436, %v4805, 0
        %v4813 = vsel %vm436, %v4806, 0
        %v4815 = vsel %vm436, %v4807, 0
        %4817 = vmatprep.subr.mxu0 %v4813
        %4818 = vmatpush1.msra.mxu0 %v4811
        %4819 = vmatprep.subr.mxu0 0.0
        %4820 = vmatpush1.msra.mxu0 0.0
        %4821 = vmatprep.subr.mxu0 0.0
        %4822 = vmatpush1.msra.mxu0 0.0
        %4823 = vmatprep.subr.mxu0 0.0
        %4824 = vmatpush1.msra.mxu0 0.0
        %4825 = vmatprep.subr.mxu0 0.0
        %4826 = vmatpush1.msra.mxu0 0.0
        %4827 = vmatprep.subr.mxu0 0.0
        %4828 = vmatpush1.msra.mxu0 0.0
        %4829 = vmatprep.subr.mxu0 0.0
        %4830 = vmatpush1.msra.mxu0 0.0
        %4831 = vmatprep.subr.mxu0 0.0
        %4832 = vmatpush1.msra.mxu0 0.0
        %4833 = vmatprep.subr.mxu0 0.0
        %4834 = vmatpush1.msra.mxu0 0.0
        %4835 = vmatprep.subr.mxu0 0.0
        %4836 = vmatpush1.msra.mxu0 0.0
        %4837 = vmatprep.subr.mxu0 0.0
        %4838 = vmatpush1.msra.mxu0 0.0
        %4839 = vmatprep.subr.mxu0 0.0
        %4840 = vmatpush1.msra.mxu0 0.0
        %4841 = vmatprep.subr.mxu0 0.0
        %4842 = vmatpush1.msra.mxu0 0.0
        %4843 = vmatprep.subr.mxu0 0.0
        %4844 = vmatpush1.msra.mxu0 0.0
        %4845 = vmatprep.subr.mxu0 0.0
        %4846 = vmatpush1.msra.mxu0 0.0
        %4847 = vmatprep.subr.mxu0 0.0
        %4848 = vmatpush1.msra.mxu0 0.0
        %4849 = vmatprep.subr.mxu0 0.0
        %4850 = vmatpush1.msra.mxu0 0.0
        %4851 = vmatprep.subr.mxu0 0.0
        %4852 = vmatpush1.msra.mxu0 0.0
        %4853 = vmatprep.subr.mxu0 0.0
        %4854 = vmatpush1.msra.mxu0 0.0
        %4855 = vmatprep.subr.mxu0 0.0
        %4856 = vmatpush1.msra.mxu0 0.0
        %4857 = vmatprep.subr.mxu0 0.0
        %4858 = vmatpush1.msra.mxu0 0.0
        %4859 = vmatprep.subr.mxu0 0.0
        %4860 = vmatpush1.msra.mxu0 0.0
        %4861 = vmatprep.subr.mxu0 0.0
        %4862 = vmatpush1.msra.mxu0 0.0
        %4863 = vmatprep.subr.mxu0 0.0
        %4864 = vmatpush1.msra.mxu0 0.0
        %4865 = vmatprep.subr.mxu0 0.0
        %4866 = vmatpush1.msra.mxu0 0.0
        %4867 = vmatprep.subr.mxu0 0.0
        %4868 = vmatpush1.msra.mxu0 0.0
        %4869 = vmatprep.subr.mxu0 0.0
        %4870 = vmatpush1.msra.mxu0 0.0
        %4871 = vmatprep.subr.mxu0 0.0
        %4872 = vmatpush1.msra.mxu0 0.0
        %4873 = vmatprep.subr.mxu0 0.0
        %4874 = vmatpush1.msra.mxu0 0.0
        %4875 = vmatprep.subr.mxu0 0.0
        %4876 = vmatpush1.msra.mxu0 0.0
        %4877 = vmatprep.subr.mxu0 0.0
        %4878 = vmatpush1.msra.mxu0 0.0
        %4879 = vmatprep.subr.mxu0 0.0
        %4880 = vmatpush1.msra.mxu0 0.0
        %4881 = vmatprep.mubr.f32.mxu0 0.0
        %4882 = vmatmul.mubr.f32.gmra.mrb[0].mxu0 %v4809
        %v4883 = vpop.f32.mrb[0].mxu0
        %v4884 = vadd.f32 0.0, %v4883
        %v4885 = vpop.f32.mrb[0].mxu0
        %v4886 = vadd.f32 0.0, %v4885
        %4887 = vdwg.mxu0
        %4888 = vmatprep.subr.mxu0 0.0
        %4889 = vmatpush1.msra.mxu0 %v4815
        %4890 = vmatprep.subr.mxu0 0.0
        %4891 = vmatpush1.msra.mxu0 0.0
        %4892 = vmatprep.subr.mxu0 0.0
        %4893 = vmatpush1.msra.mxu0 0.0
        %4894 = vmatprep.subr.mxu0 0.0
        %4895 = vmatpush1.msra.mxu0 0.0
        %4896 = vmatprep.subr.mxu0 0.0
        %4897 = vmatpush1.msra.mxu0 0.0
        %4898 = vmatprep.subr.mxu0 0.0
        %4899 = vmatpush1.msra.mxu0 0.0
        %4900 = vmatprep.subr.mxu0 0.0
        %4901 = vmatpush1.msra.mxu0 0.0
        %4902 = vmatprep.subr.mxu0 0.0
        %4903 = vmatpush1.msra.mxu0 0.0
        %4904 = vmatprep.subr.mxu0 0.0
        %4905 = vmatpush1.msra.mxu0 0.0
        %4906 = vmatprep.subr.mxu0 0.0
        %4907 = vmatpush1.msra.mxu0 0.0
        %4908 = vmatprep.subr.mxu0 0.0
        %4909 = vmatpush1.msra.mxu0 0.0
        %4910 = vmatprep.subr.mxu0 0.0
        %4911 = vmatpush1.msra.mxu0 0.0
        %4912 = vmatprep.subr.mxu0 0.0
        %4913 = vmatpush1.msra.mxu0 0.0
        %4914 = vmatprep.subr.mxu0 0.0
        %4915 = vmatpush1.msra.mxu0 0.0
        %4916 = vmatprep.subr.mxu0 0.0
        %4917 = vmatpush1.msra.mxu0 0.0
        %4918 = vmatprep.subr.mxu0 0.0
        %4919 = vmatpush1.msra.mxu0 0.0
        %4920 = vmatprep.subr.mxu0 0.0
        %4921 = vmatpush1.msra.mxu0 0.0
        %4922 = vmatprep.subr.mxu0 0.0
        %4923 = vmatpush1.msra.mxu0 0.0
        %4924 = vmatprep.subr.mxu0 0.0
        %4925 = vmatpush1.msra.mxu0 0.0
        %4926 = vmatprep.subr.mxu0 0.0
        %4927 = vmatpush1.msra.mxu0 0.0
        %4928 = vmatprep.subr.mxu0 0.0
        %4929 = vmatpush1.msra.mxu0 0.0
        %4930 = vmatprep.subr.mxu0 0.0
        %4931 = vmatpush1.msra.mxu0 0.0
        %4932 = vmatprep.subr.mxu0 0.0
        %4933 = vmatpush1.msra.mxu0 0.0
        %4934 = vmatprep.subr.mxu0 0.0
        %4935 = vmatpush1.msra.mxu0 0.0
        %4936 = vmatprep.subr.mxu0 0.0
        %4937 = vmatpush1.msra.mxu0 0.0
        %4938 = vmatprep.subr.mxu0 0.0
        %4939 = vmatpush1.msra.mxu0 0.0
        %4940 = vmatprep.subr.mxu0 0.0
        %4941 = vmatpush1.msra.mxu0 0.0
        %4942 = vmatprep.subr.mxu0 0.0
        %4943 = vmatpush1.msra.mxu0 0.0
        %4944 = vmatprep.subr.mxu0 0.0
        %4945 = vmatpush1.msra.mxu0 0.0
        %4946 = vmatprep.subr.mxu0 0.0
        %4947 = vmatpush1.msra.mxu0 0.0
        %4948 = vmatprep.subr.mxu0 0.0
        %4949 = vmatpush1.msra.mxu0 0.0
        %4950 = vmatprep.subr.mxu0 0.0
        %4951 = vmatpush1.msra.mxu0 0.0
        %4952 = vmatprep.mubr.f32.mxu0 0.0
        %4953 = vmatmul.mubr.f32.gmra.mrb[0].mxu0 %v4809
        %v4954 = vpop.f32.mrb[0].mxu0
        %v4955 = vadd.f32 0.0, %v4954
        %v4956 = vpop.f32.mrb[0].mxu0
        %4957 = vdwg.mxu0
        %v4958 = vadd.f32 %v4786, %v4884
        %v4959 = vadd.f32 %v4787, %v4886
        %v4960 = vadd.f32 %v4788, %v4955
        %v4961 = vld [vmem:[#allocation10] sm:$0xff]
        %4963 = vset.pattern.permute.xlu0 0
        %4964 = vperm.xlu0 %4963, %v4961
        %v4965 = vpop.permute.xlu0 %4964
        %v4967 = vmul.f32 %v4958, %v4965
        %v4968 = vmul.f32 %v4959, %v4965
        %v4969 = vmul.f32 %v4960, %v4965
        %v4970 = vld [vmem:[#allocation11] sm:$0xff]
        %4972 = vset.pattern.permute.xlu0 0
        %4973 = vperm.xlu0 %4972, %v4970
        %v4974 = vpop.permute.xlu0 %4973
        %v4976 = vadd.f32 %v4967, %v4974
        %v4977 = vadd.f32 %v4968, %v4974
        %v4978 = vadd.f32 %v4969, %v4974
        %v4979 = vmax.f32 %v4976, 0.0
        %v4980 = vmax.f32 %v4977, 0.0
        %v4981 = vmax.f32 %v4978, 0.0
        %4982 = vst [vmem:[%s412] sm:$0xff] %v4979
        %4983 = vst [vmem:[%s412 + $0x8] sm:$0xff] %v4980
        %vm4984 = vcmask 850944
        %4985 = vst.msk [vmem:[%s412 + $0x10] sm:$0xff] %vm4984, %v4981
        %s4986 = sand.u32 %s201, 1
        %s4987 = scalar_lea.sflag [#allocation4], %s4986
        %s4988 = sand.u32 %s201, 1
        %s4989 = smul.addr %s4988, 24
        %s4990 = scalar_lea.vmem [#allocation13], %s4989
        // Predicated region
        $region69: #{tpu_custom_call.1} parent=43 // pred_check
          %p4991 = pneg %p211
        $region70: #{tpu_custom_call.1} parent=43 // pred_check_branch
          %4993 = sbr.rel (%p4991) target = $region72
        $region71: #{tpu_custom_call.1} parent=43 // pred_region
          %s4995 = ssub.s32 384, 384
          %4996 = vsyncadd %s4987, %s4995
          %s4997 = smul.addr %s33, 3
          %s4998 = smul.addr %s32, 24
          %s4999 = sadd.s32 %s4997, %s4998
          %s5000 = smul.addr %s4999, 128
          %s5001 = scalar_lea.hbm %s6, %s5000
          %s5003 = sshll.u32 %s4990, 4
          %s5004 = int_to_ptr.vmem [resolvable:$true] %s5003
          %5006 = dma.vmem_to_hbm [thread:$0]  %s5004, 384, %s5001, %s4987
        $region72: #{tpu_custom_call.1} parent=43 // pred_fallthru
          _
      $region44: #{tpu_custom_call.1} parent=5 // pred_fallthru
        _
      %p5007 = scmp.le.s32.totalorder 2, %s23
      // Predicated region
      $region73: #{tpu_custom_call.1} parent=5 // pred_check
        %p5008 = pneg %p5007
      $region74: #{tpu_custom_call.1} parent=5 // pred_check_branch
        %5010 = sbr.rel (%p5008) target = $region76
      $region75: #{tpu_custom_call.1} parent=5 // pred_region
        %s5011 = ssub.s32 %s23, 2
        // Predicated region
        $region77: #{tpu_custom_call.1} parent=75 // pred_check
          %p5012 = pneg %p217
        $region78: #{tpu_custom_call.1} parent=75 // pred_check_branch
          %5014 = sbr.rel (%p5012) target = $region80
        $region79: #{tpu_custom_call.1} parent=75 // pred_region
          %s5015 = sand.u32 %s202, 1
          %s5016 = scalar_lea.sflag [#allocation4], %s5015
          %s5017 = sand.u32 %s202, 1
          %s5018 = smul.addr %s5017, 24
          %s5019 = scalar_lea.vmem [#allocation13], %s5018
          %5020 = dma.done %s5016, 384
        $region80: #{tpu_custom_call.1} parent=75 // pred_fallthru
          _
      $region76: #{tpu_custom_call.1} parent=5 // pred_fallthru
        _
    $region6: #{tpu_custom_call.1} parent=1 // loop_footer
      %s27 = sadd.s32 1, %s23
    $region7: #{tpu_custom_call.1} parent=1 // loop_footer_branch
      %22 = sbr.rel target = $region3
    $region8: #{tpu_custom_call.1} parent=1 // loop_exit
      _
    %5021 = vsyncpa [#allocation3], 1
    %s5022 = scalar_lea.sflag [#allocation3], 1
    %5023 = vsyncpa %s5022, 1
    %5024 = vsyncpa [#allocation6], 1
    %s5025 = scalar_lea.sflag [#allocation6], 1
    %5026 = vsyncpa %s5025, 1
    %5027 = vsyncpa [#allocation9], 1
    %5028 = vsyncpa [#allocation12], 1
    %5029 = vsyncpa [#allocation4], 1
    %s5030 = scalar_lea.sflag [#allocation4], 1
    %5031 = vsyncpa %s5030, 1

</llo_original>
